<compile_context>
chip_gen: v7x
topology: tpu7x:2x2x1
jax: 0.10.0
libtpu: 0.0.40
codegen_flags: <defaults>
</compile_context>

<pallas_src>
import jax
import jax.numpy as jnp
from jax.experimental import pallas as pl
from jax.experimental.pallas import tpu as pltpu

BN_EPS = 1e-5
LANE = 128


def _round_up(x, m):
    return (x + m - 1) // m * m


def conv_bn_relu_kernel(xa_ref, xh0_ref, xh1_ref, w_ref, b_ref, o_ref, win_ref):
    """One output row-tile of fused 3x3 conv + folded-BN bias + ReLU.

    xa_ref : (1, TH,   W+2, Cin_p)  bf16  body rows of the padded input
    xh0_ref: (1, 1,    W+2, Cin_p)  bf16  halo row TH
    xh1_ref: (1, 1,    W+2, Cin_p)  bf16  halo row TH+1
    w_ref  : (3, 3, Cin_p, Cout_p)  bf16  HWIO weights, BN scale folded in
    b_ref  : (1, Cout_p)            f32   conv bias + BN shift folded
    o_ref  : (1, TH, W, Cout_p)     f32
    win_ref: (TH+2, W+2, Cin_p)     bf16  VMEM scratch (assembled halo window)
    """
    th, w_out, cout_p = o_ref.shape[1], o_ref.shape[2], o_ref.shape[3]

    # Assemble the (TH+2)-row halo window in VMEM from the three blocks.
    win_ref[0:th] = xa_ref[0]
    win_ref[th:th + 1] = xh0_ref[0]
    win_ref[th + 1:th + 2] = xh1_ref[0]

    x = win_ref[...]           # (TH+2, W+2, Cin_p)
    wts = w_ref[...]           # (3, 3, Cin_p, Cout_p)

    acc = jnp.zeros((th * w_out, cout_p), jnp.float32)
    for ky in range(3):        # static unroll: 9 MXU pushes per row tile
        for kx in range(3):
            win = x[ky:ky + th, kx:kx + w_out, :].reshape(th * w_out, -1)
            acc = acc + jnp.dot(win, wts[ky, kx],
                                preferred_element_type=jnp.float32)
    out = jnp.maximum(acc + b_ref[...], 0.0)
    o_ref[...] = out.reshape(1, th, w_out, cout_p)


def _pick_row_tile(h, w, c_in_p, c_out_p, budget_bytes=24 * 1024 * 1024):
    """Largest divisor of H whose (double-buffered) VMEM footprint fits a
    conservative budget (safe under a 32 MiB scoped-VMEM limit on all chips)."""
    w_bytes = 2 * (9 * c_in_p * c_out_p * 2)          # bf16 weights, x2 buffers

    def tile_bytes(th):
        body = th * (w + 2) * c_in_p * 2              # bf16 body tile
        halo = 2 * (w + 2) * c_in_p * 2               # two bf16 halo rows
        outb = th * w * c_out_p * 4                   # f32 output tile
        scratch = (th + 2) * (w + 2) * c_in_p * 2     # assembled window
        return 2 * (body + halo + outb) + scratch + w_bytes

    best = 1
    for th in range(1, h + 1):
        if h % th == 0 and tile_bytes(th) <= budget_bytes:
            best = th
    return best


def conv_block_nhwc(x_nhwc, conv_w, conv_b, bn_gamma=None, bn_beta=None,
                    bn_running_mean=None, bn_running_var=None, *,
                    row_tile=None):
    """x: (N,H,W,Cin) f32; conv_w: (Cout,Cin,3,3) f32. Returns (N,H,W,Cout) f32.

    Eval-mode BatchNorm2d (running stats) is folded into weight/bias; pass
    bn_gamma=None for a plain conv+bias+ReLU block (DPTHead use_bn=False)."""
    n, h, w, c_in = x_nhwc.shape
    c_out = conv_w.shape[0]

    # --- Fold eval-mode BN into the conv (per-output-channel scale/shift). ---
    if bn_gamma is None:
        scale = jnp.ones((c_out,), jnp.float32)
        shift = jnp.zeros((c_out,), jnp.float32)
        rm = jnp.zeros((c_out,), jnp.float32)
    else:
        rm = (jnp.zeros((c_out,), jnp.float32)
              if bn_running_mean is None else bn_running_mean)
        rv = (jnp.ones((c_out,), jnp.float32)
              if bn_running_var is None else bn_running_var)
        scale = bn_gamma * jax.lax.rsqrt(rv + BN_EPS)
        shift = bn_beta
    w_fold = conv_w.astype(jnp.float32) * scale[:, None, None, None]
    b_fold = (conv_b.astype(jnp.float32) - rm) * scale + shift

    # --- Pad channels to lane width (128): full-width MXU, lane-dense vst. ---
    c_in_p = _round_up(c_in, LANE)
    c_out_p = _round_up(c_out, LANE)

    w_hwio = jnp.transpose(w_fold, (2, 3, 1, 0))               # (3,3,Cin,Cout)
    w_hwio = jnp.pad(w_hwio, ((0, 0), (0, 0),
                              (0, c_in_p - c_in), (0, c_out_p - c_out)))
    w_hwio = w_hwio.astype(jnp.bfloat16)
    b_pad = jnp.pad(b_fold, (0, c_out_p - c_out)).reshape(1, c_out_p)

    # --- Spatial halo pad + channel pad, bf16 activations (single copy). ---
    x_pad = jnp.pad(x_nhwc, ((0, 0), (1, 1), (1, 1), (0, c_in_p - c_in)))
    x_pad = x_pad.astype(jnp.bfloat16)                         # (N,H+2,W+2,Cin_p)

    # --- Row tiling: body block + two 1-row halo blocks per grid step. ---
    th = _pick_row_tile(h, w, c_in_p, c_out_p) if row_tile is None else row_tile
    assert h % th == 0, "row tile must divide H"
    n_tiles = h // th

    out = pl.pallas_call(
        conv_bn_relu_kernel,
        out_shape=jax.ShapeDtypeStruct((n, h, w, c_out_p), jnp.float32),
        grid=(n, n_tiles),
        in_specs=[
            # body: padded rows [i*TH, i*TH+TH)
            pl.BlockSpec((1, th, w + 2, c_in_p), lambda b, i: (b, i, 0, 0)),
            # halo rows i*TH+TH and i*TH+TH+1 (block size 1 -> element index)
            pl.BlockSpec((1, 1, w + 2, c_in_p),
                         lambda b, i: (b, (i + 1) * th, 0, 0)),
            pl.BlockSpec((1, 1, w + 2, c_in_p),
                         lambda b, i: (b, (i + 1) * th + 1, 0, 0)),
            pl.BlockSpec((3, 3, c_in_p, c_out_p), lambda b, i: (0, 0, 0, 0)),
            pl.BlockSpec((1, c_out_p), lambda b, i: (0, 0)),
        ],
        out_specs=pl.BlockSpec((1, th, w, c_out_p), lambda b, i: (b, i, 0, 0)),
        scratch_shapes=[pltpu.VMEM((th + 2, w + 2, c_in_p), jnp.bfloat16)],
        compiler_params=pltpu.CompilerParams(
            dimension_semantics=("parallel", "parallel"),
            vmem_limit_bytes=32 * 1024 * 1024),
    )(x_pad, x_pad, x_pad, w_hwio, b_pad)

    return out[..., :c_out]


def conv_block(x_nchw, conv_w, conv_b, bn_gamma=None, bn_beta=None,
               bn_running_mean=None, bn_running_var=None):
    """NCHW wrapper for PyTorch parity.  Prefer conv_block_nhwc and keep
    activations NHWC end-to-end when chaining DPTHead blocks."""
    x_nhwc = jnp.transpose(x_nchw, (0, 2, 3, 1))
    y = conv_block_nhwc(x_nhwc, conv_w, conv_b, bn_gamma, bn_beta,
                        bn_running_mean, bn_running_var)
    return jnp.transpose(y, (0, 3, 1, 2))


if __name__ == "__main__":
    key = jax.random.PRNGKey(0)
    k_x, k_w, k_b, k_g, k_be, k_rm, k_rv = jax.random.split(key, 7)

    N, C_IN, C_OUT, H, W = 2, 4, 8, 16, 16

    x = jax.random.normal(k_x, (N, C_IN, H, W), dtype=jnp.float32)

    fan_in = C_IN * 3 * 3
    bound = 1.0 / (fan_in ** 0.5)
    conv_w = jax.random.uniform(k_w, (C_OUT, C_IN, 3, 3),
                                minval=-bound, maxval=bound, dtype=jnp.float32)
    conv_b = jax.random.uniform(k_b, (C_OUT,),
                                minval=-bound, maxval=bound, dtype=jnp.float32)
    # Non-trivial eval-mode BN parameters to exercise the BN fold.
    bn_gamma = jax.random.uniform(k_g, (C_OUT,), minval=0.5, maxval=1.5,
                                  dtype=jnp.float32)
    bn_beta = jax.random.uniform(k_be, (C_OUT,), minval=-0.5, maxval=0.5,
                                 dtype=jnp.float32)
    bn_rm = 0.1 * jax.random.normal(k_rm, (C_OUT,), dtype=jnp.float32)
    bn_rv = jax.random.uniform(k_rv, (C_OUT,), minval=0.5, maxval=1.5,
                               dtype=jnp.float32)

    y = conv_block(x, conv_w, conv_b, bn_gamma, bn_beta, bn_rm, bn_rv)
    y = jax.block_until_ready(y)
    assert y.shape == (N, C_OUT, H, W)

    # Pure-JAX f32 reference: Conv2d(3x3,s1,p1) -> BatchNorm2d.eval() -> ReLU.
    ref = jax.lax.conv_general_dilated(
        x, conv_w, window_strides=(1, 1), padding=((1, 1), (1, 1)),
        dimension_numbers=("NCHW", "OIHW", "NCHW"))
    ref = ref + conv_b[None, :, None, None]
    ref = (ref - bn_rm[None, :, None, None]) * jax.lax.rsqrt(
        bn_rv[None, :, None, None] + BN_EPS)
    ref = ref * bn_gamma[None, :, None, None] + bn_beta[None, :, None, None]
    ref = jnp.maximum(ref, 0.0)

    err = float(jnp.max(jnp.abs(y - ref)))
    assert jnp.allclose(y, ref, atol=5e-2, rtol=5e-2), err
    print("KERNEL_OK")
</pallas_src>

<mosaic_0001>
module attributes {stable_mosaic.version = 11 : i64} {
  func.func @conv_bn_relu_kernel(%arg0: i32, %arg1: i32, %arg2: memref<1x16x18x128xbf16, #tpu.memory_space<vmem>>, %arg3: memref<1x1x18x128xbf16, #tpu.memory_space<vmem>>, %arg4: memref<1x1x18x128xbf16, #tpu.memory_space<vmem>>, %arg5: memref<3x3x128x128xbf16, #tpu.memory_space<vmem>>, %arg6: memref<1x128xf32, #tpu.memory_space<vmem>>, %arg7: memref<1x16x16x128xf32, #tpu.memory_space<vmem>>, %arg8: memref<18x18x128xbf16, #tpu.memory_space<vmem>>) attributes {dimension_semantics = [#tpu.dimension_semantics<parallel>, #tpu.dimension_semantics<parallel>], iteration_bounds = array<i64: 2, 1>, scalar_prefetch = 0 : i64, scratch_operands = 1 : i64, tpu.core_type = #tpu.core_type<tc>, window_params = [{transform_indices = @transform_0, window_bounds = array<i64: 1, 16, 18, 128>}, {transform_indices = @transform_1, window_bounds = array<i64: 1, 1, 18, 128>}, {transform_indices = @transform_2, window_bounds = array<i64: 1, 1, 18, 128>}, {pipeline_mode = #tpu.pipeline_mode<synchronous>, transform_indices = @transform_3, window_bounds = array<i64: 3, 3, 128, 128>}, {pipeline_mode = #tpu.pipeline_mode<synchronous>, transform_indices = @transform_4, window_bounds = array<i64: 1, 128>}, {transform_indices = @transform_5, window_bounds = array<i64: 1, 16, 16, 128>}]} {
    %c0 = arith.constant 0 : index
    %c0_0 = arith.constant 0 : index
    %c0_1 = arith.constant 0 : index
    %c0_2 = arith.constant 0 : index
    %0 = vector.load %arg2[%c0, %c0_0, %c0_1, %c0_2] : memref<1x16x18x128xbf16, #tpu.memory_space<vmem>>, vector<1x16x18x128xbf16>
    %1 = vector.shape_cast %0 : vector<1x16x18x128xbf16> to vector<16x18x128xbf16>
    %c0_3 = arith.constant 0 : index
    %c0_4 = arith.constant 0 : index
    %c0_5 = arith.constant 0 : index
    %2 = vector.load %arg8[%c0_3, %c0_4, %c0_5] : memref<18x18x128xbf16, #tpu.memory_space<vmem>>, vector<16x18x128xbf16>
    tpu.vector_store %arg8[%c0_3, %c0_4, %c0_5], %1 {strides = array<i32>} : memref<18x18x128xbf16, #tpu.memory_space<vmem>>, vector<16x18x128xbf16>,
    %c0_6 = arith.constant 0 : index
    %c0_7 = arith.constant 0 : index
    %c0_8 = arith.constant 0 : index
    %c0_9 = arith.constant 0 : index
    %3 = vector.load %arg3[%c0_6, %c0_7, %c0_8, %c0_9] : memref<1x1x18x128xbf16, #tpu.memory_space<vmem>>, vector<1x1x18x128xbf16>
    %4 = vector.shape_cast %3 : vector<1x1x18x128xbf16> to vector<1x18x128xbf16>
    %c16 = arith.constant 16 : index
    %c0_10 = arith.constant 0 : index
    %c0_11 = arith.constant 0 : index
    %5 = vector.load %arg8[%c16, %c0_10, %c0_11] : memref<18x18x128xbf16, #tpu.memory_space<vmem>>, vector<1x18x128xbf16>
    tpu.vector_store %arg8[%c16, %c0_10, %c0_11], %4 {strides = array<i32>} : memref<18x18x128xbf16, #tpu.memory_space<vmem>>, vector<1x18x128xbf16>,
    %c0_12 = arith.constant 0 : index
    %c0_13 = arith.constant 0 : index
    %c0_14 = arith.constant 0 : index
    %c0_15 = arith.constant 0 : index
    %6 = vector.load %arg4[%c0_12, %c0_13, %c0_14, %c0_15] : memref<1x1x18x128xbf16, #tpu.memory_space<vmem>>, vector<1x1x18x128xbf16>
    %7 = vector.shape_cast %6 : vector<1x1x18x128xbf16> to vector<1x18x128xbf16>
    %c17 = arith.constant 17 : index
    %c0_16 = arith.constant 0 : index
    %c0_17 = arith.constant 0 : index
    %8 = vector.load %arg8[%c17, %c0_16, %c0_17] : memref<18x18x128xbf16, #tpu.memory_space<vmem>>, vector<1x18x128xbf16>
    tpu.vector_store %arg8[%c17, %c0_16, %c0_17], %7 {strides = array<i32>} : memref<18x18x128xbf16, #tpu.memory_space<vmem>>, vector<1x18x128xbf16>,
    %c0_18 = arith.constant 0 : index
    %c0_19 = arith.constant 0 : index
    %c0_20 = arith.constant 0 : index
    %9 = vector.load %arg8[%c0_18, %c0_19, %c0_20] : memref<18x18x128xbf16, #tpu.memory_space<vmem>>, vector<18x18x128xbf16>
    %c0_21 = arith.constant 0 : index
    %c0_22 = arith.constant 0 : index
    %c0_23 = arith.constant 0 : index
    %c0_24 = arith.constant 0 : index
    %10 = vector.load %arg5[%c0_21, %c0_22, %c0_23, %c0_24] : memref<3x3x128x128xbf16, #tpu.memory_space<vmem>>, vector<3x3x128x128xbf16>
    %cst = arith.constant 0.000000e+00 : f32
    %11 = vector.broadcast %cst : f32 to vector<256x128xf32>
    %12 = vector.extract_strided_slice %9 {offsets = [0, 0, 0], sizes = [16, 16, 128], strides = [1, 1, 1]} : vector<18x18x128xbf16> to vector<16x16x128xbf16>
    %13 = vector.shape_cast %12 : vector<16x16x128xbf16> to vector<256x128xbf16>
    %14 = vector.extract_strided_slice %10 {offsets = [0, 0, 0, 0], sizes = [1, 1, 128, 128], strides = [1, 1, 1, 1]} : vector<3x3x128x128xbf16> to vector<1x1x128x128xbf16>
    %15 = vector.shape_cast %14 : vector<1x1x128x128xbf16> to vector<128x128xbf16>
    %cst_25 = arith.constant dense<0.000000e+00> : vector<256x128xf32>
    %16 = tpu.matmul %13, %15, %cst_25 {dimension_numbers = #tpu.dot_dimension_numbers<[1], [0], [0], [1], [0, 0, 1, 1], [], []>} : vector<256x128xbf16>, vector<128x128xbf16>, vector<256x128xf32> -> vector<256x128xf32>
    %17 = arith.addf %11, %16 : vector<256x128xf32>
    %18 = vector.extract_strided_slice %9 {offsets = [0, 1, 0], sizes = [16, 16, 128], strides = [1, 1, 1]} : vector<18x18x128xbf16> to vector<16x16x128xbf16>
    %19 = vector.shape_cast %18 : vector<16x16x128xbf16> to vector<256x128xbf16>
    %20 = vector.extract_strided_slice %10 {offsets = [0, 1, 0, 0], sizes = [1, 1, 128, 128], strides = [1, 1, 1, 1]} : vector<3x3x128x128xbf16> to vector<1x1x128x128xbf16>
    %21 = vector.shape_cast %20 : vector<1x1x128x128xbf16> to vector<128x128xbf16>
    %cst_26 = arith.constant dense<0.000000e+00> : vector<256x128xf32>
    %22 = tpu.matmul %19, %21, %cst_26 {dimension_numbers = #tpu.dot_dimension_numbers<[1], [0], [0], [1], [0, 0, 1, 1], [], []>} : vector<256x128xbf16>, vector<128x128xbf16>, vector<256x128xf32> -> vector<256x128xf32>
    %23 = arith.addf %17, %22 : vector<256x128xf32>
    %24 = vector.extract_strided_slice %9 {offsets = [0, 2, 0], sizes = [16, 16, 128], strides = [1, 1, 1]} : vector<18x18x128xbf16> to vector<16x16x128xbf16>
    %25 = vector.shape_cast %24 : vector<16x16x128xbf16> to vector<256x128xbf16>
    %26 = vector.extract_strided_slice %10 {offsets = [0, 2, 0, 0], sizes = [1, 1, 128, 128], strides = [1, 1, 1, 1]} : vector<3x3x128x128xbf16> to vector<1x1x128x128xbf16>
    %27 = vector.shape_cast %26 : vector<1x1x128x128xbf16> to vector<128x128xbf16>
    %cst_27 = arith.constant dense<0.000000e+00> : vector<256x128xf32>
    %28 = tpu.matmul %25, %27, %cst_27 {dimension_numbers = #tpu.dot_dimension_numbers<[1], [0], [0], [1], [0, 0, 1, 1], [], []>} : vector<256x128xbf16>, vector<128x128xbf16>, vector<256x128xf32> -> vector<256x128xf32>
    %29 = arith.addf %23, %28 : vector<256x128xf32>
    %30 = vector.extract_strided_slice %9 {offsets = [1, 0, 0], sizes = [16, 16, 128], strides = [1, 1, 1]} : vector<18x18x128xbf16> to vector<16x16x128xbf16>
    %31 = vector.shape_cast %30 : vector<16x16x128xbf16> to vector<256x128xbf16>
    %32 = vector.extract_strided_slice %10 {offsets = [1, 0, 0, 0], sizes = [1, 1, 128, 128], strides = [1, 1, 1, 1]} : vector<3x3x128x128xbf16> to vector<1x1x128x128xbf16>
    %33 = vector.shape_cast %32 : vector<1x1x128x128xbf16> to vector<128x128xbf16>
    %cst_28 = arith.constant dense<0.000000e+00> : vector<256x128xf32>
    %34 = tpu.matmul %31, %33, %cst_28 {dimension_numbers = #tpu.dot_dimension_numbers<[1], [0], [0], [1], [0, 0, 1, 1], [], []>} : vector<256x128xbf16>, vector<128x128xbf16>, vector<256x128xf32> -> vector<256x128xf32>
    %35 = arith.addf %29, %34 : vector<256x128xf32>
    %36 = vector.extract_strided_slice %9 {offsets = [1, 1, 0], sizes = [16, 16, 128], strides = [1, 1, 1]} : vector<18x18x128xbf16> to vector<16x16x128xbf16>
    %37 = vector.shape_cast %36 : vector<16x16x128xbf16> to vector<256x128xbf16>
    %38 = vector.extract_strided_slice %10 {offsets = [1, 1, 0, 0], sizes = [1, 1, 128, 128], strides = [1, 1, 1, 1]} : vector<3x3x128x128xbf16> to vector<1x1x128x128xbf16>
    %39 = vector.shape_cast %38 : vector<1x1x128x128xbf16> to vector<128x128xbf16>
    %cst_29 = arith.constant dense<0.000000e+00> : vector<256x128xf32>
    %40 = tpu.matmul %37, %39, %cst_29 {dimension_numbers = #tpu.dot_dimension_numbers<[1], [0], [0], [1], [0, 0, 1, 1], [], []>} : vector<256x128xbf16>, vector<128x128xbf16>, vector<256x128xf32> -> vector<256x128xf32>
    %41 = arith.addf %35, %40 : vector<256x128xf32>
    %42 = vector.extract_strided_slice %9 {offsets = [1, 2, 0], sizes = [16, 16, 128], strides = [1, 1, 1]} : vector<18x18x128xbf16> to vector<16x16x128xbf16>
    %43 = vector.shape_cast %42 : vector<16x16x128xbf16> to vector<256x128xbf16>
    %44 = vector.extract_strided_slice %10 {offsets = [1, 2, 0, 0], sizes = [1, 1, 128, 128], strides = [1, 1, 1, 1]} : vector<3x3x128x128xbf16> to vector<1x1x128x128xbf16>
    %45 = vector.shape_cast %44 : vector<1x1x128x128xbf16> to vector<128x128xbf16>
    %cst_30 = arith.constant dense<0.000000e+00> : vector<256x128xf32>
    %46 = tpu.matmul %43, %45, %cst_30 {dimension_numbers = #tpu.dot_dimension_numbers<[1], [0], [0], [1], [0, 0, 1, 1], [], []>} : vector<256x128xbf16>, vector<128x128xbf16>, vector<256x128xf32> -> vector<256x128xf32>
    %47 = arith.addf %41, %46 : vector<256x128xf32>
    %48 = vector.extract_strided_slice %9 {offsets = [2, 0, 0], sizes = [16, 16, 128], strides = [1, 1, 1]} : vector<18x18x128xbf16> to vector<16x16x128xbf16>
    %49 = vector.shape_cast %48 : vector<16x16x128xbf16> to vector<256x128xbf16>
    %50 = vector.extract_strided_slice %10 {offsets = [2, 0, 0, 0], sizes = [1, 1, 128, 128], strides = [1, 1, 1, 1]} : vector<3x3x128x128xbf16> to vector<1x1x128x128xbf16>
    %51 = vector.shape_cast %50 : vector<1x1x128x128xbf16> to vector<128x128xbf16>
    %cst_31 = arith.constant dense<0.000000e+00> : vector<256x128xf32>
    %52 = tpu.matmul %49, %51, %cst_31 {dimension_numbers = #tpu.dot_dimension_numbers<[1], [0], [0], [1], [0, 0, 1, 1], [], []>} : vector<256x128xbf16>, vector<128x128xbf16>, vector<256x128xf32> -> vector<256x128xf32>
    %53 = arith.addf %47, %52 : vector<256x128xf32>
    %54 = vector.extract_strided_slice %9 {offsets = [2, 1, 0], sizes = [16, 16, 128], strides = [1, 1, 1]} : vector<18x18x128xbf16> to vector<16x16x128xbf16>
    %55 = vector.shape_cast %54 : vector<16x16x128xbf16> to vector<256x128xbf16>
    %56 = vector.extract_strided_slice %10 {offsets = [2, 1, 0, 0], sizes = [1, 1, 128, 128], strides = [1, 1, 1, 1]} : vector<3x3x128x128xbf16> to vector<1x1x128x128xbf16>
    %57 = vector.shape_cast %56 : vector<1x1x128x128xbf16> to vector<128x128xbf16>
    %cst_32 = arith.constant dense<0.000000e+00> : vector<256x128xf32>
    %58 = tpu.matmul %55, %57, %cst_32 {dimension_numbers = #tpu.dot_dimension_numbers<[1], [0], [0], [1], [0, 0, 1, 1], [], []>} : vector<256x128xbf16>, vector<128x128xbf16>, vector<256x128xf32> -> vector<256x128xf32>
    %59 = arith.addf %53, %58 : vector<256x128xf32>
    %60 = vector.extract_strided_slice %9 {offsets = [2, 2, 0], sizes = [16, 16, 128], strides = [1, 1, 1]} : vector<18x18x128xbf16> to vector<16x16x128xbf16>
    %61 = vector.shape_cast %60 : vector<16x16x128xbf16> to vector<256x128xbf16>
    %62 = vector.extract_strided_slice %10 {offsets = [2, 2, 0, 0], sizes = [1, 1, 128, 128], strides = [1, 1, 1, 1]} : vector<3x3x128x128xbf16> to vector<1x1x128x128xbf16>
    %63 = vector.shape_cast %62 : vector<1x1x128x128xbf16> to vector<128x128xbf16>
    %cst_33 = arith.constant dense<0.000000e+00> : vector<256x128xf32>
    %64 = tpu.matmul %61, %63, %cst_33 {dimension_numbers = #tpu.dot_dimension_numbers<[1], [0], [0], [1], [0, 0, 1, 1], [], []>} : vector<256x128xbf16>, vector<128x128xbf16>, vector<256x128xf32> -> vector<256x128xf32>
    %65 = arith.addf %59, %64 : vector<256x128xf32>
    %c0_34 = arith.constant 0 : index
    %c0_35 = arith.constant 0 : index
    %66 = vector.load %arg6[%c0_34, %c0_35] : memref<1x128xf32, #tpu.memory_space<vmem>>, vector<1x128xf32>
    %67 = vector.broadcast %66 : vector<1x128xf32> to vector<256x128xf32>
    %68 = arith.addf %65, %67 : vector<256x128xf32>
    %cst_36 = arith.constant 0.000000e+00 : f32
    %69 = vector.broadcast %cst_36 : f32 to vector<256x128xf32>
    %70 = arith.maximumf %68, %69 : vector<256x128xf32>
    %71 = vector.shape_cast %70 : vector<256x128xf32> to vector<1x16x16x128xf32>
    %c0_37 = arith.constant 0 : index
    %c0_38 = arith.constant 0 : index
    %c0_39 = arith.constant 0 : index
    %c0_40 = arith.constant 0 : index
    %72 = vector.load %arg7[%c0_37, %c0_38, %c0_39, %c0_40] : memref<1x16x16x128xf32, #tpu.memory_space<vmem>>, vector<1x16x16x128xf32>
    tpu.vector_store %arg7[%c0_37, %c0_38, %c0_39, %c0_40], %71 {strides = array<i32>} : memref<1x16x16x128xf32, #tpu.memory_space<vmem>>, vector<1x16x16x128xf32>,
    return
  }
  func.func @transform_0(%arg0: i32, %arg1: i32) -> (i32, i32, i32, i32) {
    %c0_i32 = arith.constant 0 : i32
    %c0_i32_0 = arith.constant 0 : i32
    %c0_i32_1 = arith.constant 0 : i32
    return %arg0, %arg1, %c0_i32, %c0_i32_0 : i32, i32, i32, i32
  }
  func.func @transform_1(%arg0: i32, %arg1: i32) -> (i32, i32, i32, i32) {
    %c1_i32 = arith.constant 1 : i32
    %0 = arith.addi %arg1, %c1_i32 : i32
    %c16_i32 = arith.constant 16 : i32
    %1 = arith.muli %0, %c16_i32 : i32
    %c0_i32 = arith.constant 0 : i32
    %c0_i32_0 = arith.constant 0 : i32
    %c0_i32_1 = arith.constant 0 : i32
    return %arg0, %1, %c0_i32, %c0_i32_0 : i32, i32, i32, i32
  }
  func.func @transform_2(%arg0: i32, %arg1: i32) -> (i32, i32, i32, i32) {
    %c1_i32 = arith.constant 1 : i32
    %0 = arith.addi %arg1, %c1_i32 : i32
    %c16_i32 = arith.constant 16 : i32
    %1 = arith.muli %0, %c16_i32 : i32
    %c1_i32_0 = arith.constant 1 : i32
    %2 = arith.addi %1, %c1_i32_0 : i32
    %c0_i32 = arith.constant 0 : i32
    %c0_i32_1 = arith.constant 0 : i32
    %c0_i32_2 = arith.constant 0 : i32
    return %arg0, %2, %c0_i32, %c0_i32_1 : i32, i32, i32, i32
  }
  func.func @transform_3(%arg0: i32, %arg1: i32) -> (i32, i32, i32, i32) {
    %c0_i32 = arith.constant 0 : i32
    %c0_i32_0 = arith.constant 0 : i32
    %c0_i32_1 = arith.constant 0 : i32
    %c0_i32_2 = arith.constant 0 : i32
    %c0_i32_3 = arith.constant 0 : i32
    return %c0_i32, %c0_i32_0, %c0_i32_1, %c0_i32_2 : i32, i32, i32, i32
  }
  func.func @transform_4(%arg0: i32, %arg1: i32) -> (i32, i32) {
    %c0_i32 = arith.constant 0 : i32
    %c0_i32_0 = arith.constant 0 : i32
    %c0_i32_1 = arith.constant 0 : i32
    return %c0_i32, %c0_i32_0 : i32, i32
  }
  func.func @transform_5(%arg0: i32, %arg1: i32) -> (i32, i32, i32, i32) {
    %c0_i32 = arith.constant 0 : i32
    %c0_i32_0 = arith.constant 0 : i32
    %c0_i32_1 = arith.constant 0 : i32
    return %arg0, %arg1, %c0_i32, %c0_i32_0 : i32, i32, i32, i32
  }
}

</mosaic_0001>

<llo_original>
// kernel: tpu_custom_call.1
$region0: #{tpu_custom_call.1}
  #allocation0 [shape = 'u32[]', space=smem, size = 0x4, offset = 0x4, fixed_abs, tag = 'smem constant byte address 0x4 - core index']
  #allocation1 [shape = 'u32[144,128]{1,0:T(1,128)}', space=vmem, size = 0x12000, scoped, tag = 'internal scratch']
  #allocation2 [shape = 'bf16[18,18,128]{2,1,0:T(8,128)(2,1)}', space=vmem, size = 0x1b000, scoped, tag = 'scratch operand']
  %s0 = inlined_call_operand.vmem [shape: bf16[2,18,18,128], index: 0, kind: input, shape index: {}]
  %s1 = inlined_call_operand.vmem [shape: bf16[2,18,18,128], index: 1, kind: input, shape index: {}]
  %s2 = inlined_call_operand.vmem [shape: bf16[2,18,18,128], index: 2, kind: input, shape index: {}]
  %s3 = inlined_call_operand.vmem [shape: bf16[3,3,128,128], index: 3, kind: input, shape index: {}]
  %s4 = inlined_call_operand.vmem [shape: f32[1,128], index: 4, kind: input, shape index: {}]
  %s5 = inlined_call_operand.hbm [shape: f32[2,16,16,128], index: 5, kind: output, shape index: {}]
  %s6 = sld [smem:[#allocation0]]
  $region53: #{tpu_custom_call.1} parent=0
    _
  %s8 = ssub.s32 1, %s6
  %s9 = scalar_select 0, %s8, %s6
  $region1: #{tpu_custom_call.1} parent=0
    #allocation3 [shape = 'u8[262144]{0}', space=vmem, size = 0x40000, scoped, tag = 'output window, operand 0']
    #allocation4 [shape = 's32[2]{0}', space=sflag, size = 0x8, scoped, tag = 'scoped memory for tpu_custom_call.1']
    %10 = vsyncpa [#allocation4], 0
    %s11 = scalar_lea.sflag [#allocation4], 1
    %12 = vsyncpa %s11, 0
    loop: start=0, step=1, limit=4
    $region2: #{tpu_custom_call.1} parent=1 // loop_pre_header
      _
    $region3: #{tpu_custom_call.1} parent=1 // loop_header
      %s14 = sphi 0, %s18
      %p15 = scmp.ge.s32.totalorder %s14, 4
      %s21 = sphi 0, %s33
      %s22 = sphi 0, %s29
      %s23 = sphi 0, %s21
      %s24 = sphi 0, %s22
      %s25 = sphi 0, %s23
      %s26 = sphi 0, %s24
      %s38 = sphi 0, %s40
      %s41 = sphi 0, %s38
      %s42 = sphi 0, %s41
      %s58 = sphi 0, %s42
      %s70 = sphi 0, %s72
      %s73 = sphi 0, %s70
      %s74 = sphi 0, %s73
      %s90 = sphi 0, %s74
      %s104 = sphi 0, %s106
      %s107 = sphi 0, %s104
      %s108 = sphi 0, %s107
      %s124 = sphi 0, %s108
      %s128 = sphi 0, %s128
      %s130 = sphi 0, %s128
      %s131 = sphi 0, %s130
      %s145 = sphi 0, %s131
      %s149 = sphi 0, %s149
      %s151 = sphi 0, %s149
      %s152 = sphi 0, %s151
      %s166 = sphi 0, %s152
      %s174 = sphi 0, %s176
      %s177 = sphi 0, %s174
      %s178 = sphi 0, %s177
      %s194 = sphi 0, %s178
    $region4: #{tpu_custom_call.1} parent=1 // loop_header_branch
      %17 = sbr.rel (%p15) target = $region8
    $region5: #{tpu_custom_call.1} parent=1 // loop_body
      %s19 = ssub.s32 %s14, 1
      %s20 = ssub.s32 %s14, 2
      %s27 = sadd.s32 1, %s22
      %p28 = scmp.ge.s32.totalorder %s27, 1
      %s29 = scalar_select %p28, 0, %s27
      %s30 = sadd.s32 1, %s21
      %s31 = scalar_select %p28, %s30, %s21
      %p32 = scmp.ge.s32.totalorder %s31, 2
      %s33 = scalar_select %p32, 0, %s31
      %s34 = ssub.s32 %s21, %s33
      %s35 = ssub.s32 %s22, %s29
      %s36 = sor.u32 %s34, %s35
      %p37 = scmp.eq.s32.totalorder %s36, 0
      %s39 = sadd.s32 %s38, 1
      %s40 = scalar_select %p37, %s38, %s39
      %p43 = pneg %p37
      %p44 = scmp.eq.s32.totalorder %s14, 1
      %p45 = por %p43, %p44
      %p46 = scmp.ne.s32.totalorder %s38, %s41
      %p47 = scmp.eq.s32.totalorder %s14, 0
      %p48 = por %p46, %p47
      %p49 = scmp.ne.s32.totalorder %s38, %s41
      %p50 = scmp.eq.s32.totalorder %s19, 1
      %p51 = por %p49, %p50
      %p52 = scmp.ne.s32.totalorder %s41, %s42
      %p53 = scmp.eq.s32.totalorder %s19, 0
      %p54 = por %p52, %p53
      %p55 = scmp.ne.s32.totalorder %s41, %s42
      %p56 = scmp.eq.s32.totalorder %s20, 1
      %p57 = por %p55, %p56
      %p59 = scmp.ne.s32.totalorder %s42, %s58
      %p60 = scmp.eq.s32.totalorder %s20, 0
      %p61 = por %p59, %p60
      %s62 = sadd.s32 %s22, 1
      %s63 = smul.u32 %s62, 16
      %s64 = sadd.s32 %s29, 1
      %s65 = smul.u32 %s64, 16
      %s66 = ssub.s32 %s21, %s33
      %s67 = ssub.s32 %s63, %s65
      %s68 = sor.u32 %s66, %s67
      %p69 = scmp.eq.s32.totalorder %s68, 0
      %s71 = sadd.s32 %s70, 1
      %s72 = scalar_select %p69, %s70, %s71
      %p75 = pneg %p69
      %p76 = scmp.eq.s32.totalorder %s14, 1
      %p77 = por %p75, %p76
      %p78 = scmp.ne.s32.totalorder %s70, %s73
      %p79 = scmp.eq.s32.totalorder %s14, 0
      %p80 = por %p78, %p79
      %p81 = scmp.ne.s32.totalorder %s70, %s73
      %p82 = scmp.eq.s32.totalorder %s19, 1
      %p83 = por %p81, %p82
      %p84 = scmp.ne.s32.totalorder %s73, %s74
      %p85 = scmp.eq.s32.totalorder %s19, 0
      %p86 = por %p84, %p85
      %p87 = scmp.ne.s32.totalorder %s73, %s74
      %p88 = scmp.eq.s32.totalorder %s20, 1
      %p89 = por %p87, %p88
      %p91 = scmp.ne.s32.totalorder %s74, %s90
      %p92 = scmp.eq.s32.totalorder %s20, 0
      %p93 = por %p91, %p92
      %s94 = sadd.s32 %s22, 1
      %s95 = smul.u32 %s94, 16
      %s96 = sadd.s32 %s95, 1
      %s97 = sadd.s32 %s29, 1
      %s98 = smul.u32 %s97, 16
      %s99 = sadd.s32 %s98, 1
      %s100 = ssub.s32 %s21, %s33
      %s101 = ssub.s32 %s96, %s99
      %s102 = sor.u32 %s100, %s101
      %p103 = scmp.eq.s32.totalorder %s102, 0
      %s105 = sadd.s32 %s104, 1
      %s106 = scalar_select %p103, %s104, %s105
      %p109 = pneg %p103
      %p110 = scmp.eq.s32.totalorder %s14, 1
      %p111 = por %p109, %p110
      %p112 = scmp.ne.s32.totalorder %s104, %s107
      %p113 = scmp.eq.s32.totalorder %s14, 0
      %p114 = por %p112, %p113
      %p115 = scmp.ne.s32.totalorder %s104, %s107
      %p116 = scmp.eq.s32.totalorder %s19, 1
      %p117 = por %p115, %p116
      %p118 = scmp.ne.s32.totalorder %s107, %s108
      %p119 = scmp.eq.s32.totalorder %s19, 0
      %p120 = por %p118, %p119
      %p121 = scmp.ne.s32.totalorder %s107, %s108
      %p122 = scmp.eq.s32.totalorder %s20, 1
      %p123 = por %p121, %p122
      %p125 = scmp.ne.s32.totalorder %s108, %s124
      %p126 = scmp.eq.s32.totalorder %s20, 0
      %p127 = por %p125, %p126
      %s129 = sadd.s32 %s128, 1
      %p132 = scmp.eq.s32.totalorder %s14, 1
      %p133 = scmp.ne.s32.totalorder %s128, %s130
      %p134 = scmp.eq.s32.totalorder %s14, 0
      %p135 = por %p133, %p134
      %p136 = scmp.ne.s32.totalorder %s128, %s130
      %p137 = scmp.eq.s32.totalorder %s19, 1
      %p138 = por %p136, %p137
      %p139 = scmp.ne.s32.totalorder %s130, %s131
      %p140 = scmp.eq.s32.totalorder %s19, 0
      %p141 = por %p139, %p140
      %p142 = scmp.ne.s32.totalorder %s130, %s131
      %p143 = scmp.eq.s32.totalorder %s20, 1
      %p144 = por %p142, %p143
      %p146 = scmp.ne.s32.totalorder %s131, %s145
      %p147 = scmp.eq.s32.totalorder %s20, 0
      %p148 = por %p146, %p147
      %s150 = sadd.s32 %s149, 1
      %p153 = scmp.eq.s32.totalorder %s14, 1
      %p154 = scmp.ne.s32.totalorder %s149, %s151
      %p155 = scmp.eq.s32.totalorder %s14, 0
      %p156 = por %p154, %p155
      %p157 = scmp.ne.s32.totalorder %s149, %s151
      %p158 = scmp.eq.s32.totalorder %s19, 1
      %p159 = por %p157, %p158
      %p160 = scmp.ne.s32.totalorder %s151, %s152
      %p161 = scmp.eq.s32.totalorder %s19, 0
      %p162 = por %p160, %p161
      %p163 = scmp.ne.s32.totalorder %s151, %s152
      %p164 = scmp.eq.s32.totalorder %s20, 1
      %p165 = por %p163, %p164
      %p167 = scmp.ne.s32.totalorder %s152, %s166
      %p168 = scmp.eq.s32.totalorder %s20, 0
      %p169 = por %p167, %p168
      %s170 = ssub.s32 %s21, %s33
      %s171 = ssub.s32 %s22, %s29
      %s172 = sor.u32 %s170, %s171
      %p173 = scmp.eq.s32.totalorder %s172, 0
      %s175 = sadd.s32 %s174, 1
      %s176 = scalar_select %p173, %s174, %s175
      %p179 = pneg %p173
      %p180 = scmp.eq.s32.totalorder %s14, 1
      %p181 = por %p179, %p180
      %p182 = scmp.ne.s32.totalorder %s174, %s177
      %p183 = scmp.eq.s32.totalorder %s14, 0
      %p184 = por %p182, %p183
      %p185 = scmp.ne.s32.totalorder %s174, %s177
      %p186 = scmp.eq.s32.totalorder %s19, 1
      %p187 = por %p185, %p186
      %p188 = scmp.ne.s32.totalorder %s177, %s178
      %p189 = scmp.eq.s32.totalorder %s19, 0
      %p190 = por %p188, %p189
      %p191 = scmp.ne.s32.totalorder %s177, %s178
      %p192 = scmp.eq.s32.totalorder %s20, 1
      %p193 = por %p191, %p192
      %p195 = scmp.ne.s32.totalorder %s178, %s194
      %p196 = scmp.eq.s32.totalorder %s20, 0
      %p197 = por %p195, %p196
      %p198 = scmp.le.s32.totalorder 1, %s14
      %p199 = scmp.lt.s32.totalorder %s14, 3
      %p200 = pnand %p198, %p199
      %p201 = pneg %p200
      // Predicated region
      $region9: #{tpu_custom_call.1} parent=5 // pred_check
        _
      $region10: #{tpu_custom_call.1} parent=5 // pred_check_branch
        %203 = sbr.rel (%p200) target = $region12
      $region11: #{tpu_custom_call.1} parent=5 // pred_region
        %s204 = ssub.s32 %s14, 1
        // Predicated region
        $region13: #{tpu_custom_call.1} parent=11 // pred_check
          %p205 = pneg %p141
        $region14: #{tpu_custom_call.1} parent=11 // pred_check_branch
          %207 = sbr.rel (%p205) target = $region16
        $region15: #{tpu_custom_call.1} parent=11 // pred_region
          _
        $region16: #{tpu_custom_call.1} parent=11 // pred_fallthru
          _
        // Predicated region
        $region17: #{tpu_custom_call.1} parent=11 // pred_check
          %p208 = pneg %p162
        $region18: #{tpu_custom_call.1} parent=11 // pred_check_branch
          %210 = sbr.rel (%p208) target = $region20
        $region19: #{tpu_custom_call.1} parent=11 // pred_region
          _
        $region20: #{tpu_custom_call.1} parent=11 // pred_fallthru
          _
      $region12: #{tpu_custom_call.1} parent=5 // pred_fallthru
        _
      %p211 = scmp.lt.s32.totalorder %s14, 2
      // Predicated region
      $region21: #{tpu_custom_call.1} parent=5 // pred_check
        %p212 = pneg %p211
      $region22: #{tpu_custom_call.1} parent=5 // pred_check_branch
        %214 = sbr.rel (%p212) target = $region24
      $region23: #{tpu_custom_call.1} parent=5 // pred_region
        // Predicated region
        $region25: #{tpu_custom_call.1} parent=23 // pred_check
          %p215 = pneg %p48
        $region26: #{tpu_custom_call.1} parent=23 // pred_check_branch
          %217 = sbr.rel (%p215) target = $region28
        $region27: #{tpu_custom_call.1} parent=23 // pred_region
          %s218 = smul.u32 16, %s22
          %s219 = ssub.s32 18, %s218
          %p220 = scmp.lt.s32.totalorder %s219, 16
          %s221 = scalar_select %p220, %s219, 16
          %s222 = smul.u32 64, %s221
          %s223 = smul.u32 %s222, 3
          %p224 = scmp.lt.s32.totalorder %s21, 1
          %s225 = scalar_select %p224, %s21, 1
          %p226 = scmp.lt.s32.totalorder %s218, 17
          %s227 = scalar_select %p226, %s218, 17
          %s228 = smul.addr %s227, 3
          %s229 = smul.addr %s225, 54
          %s230 = sadd.s32 %s228, %s229
          %s231 = smul.addr %s230, 4
          %s232 = scalar_lea.vmem %s0, %s231
          %s233 = smul.u32 16, %s22
          %s234 = ssub.s32 18, %s233
          %p235 = scmp.lt.s32.totalorder %s234, 16
          %s236 = scalar_select %p235, %s234, 16
          %s237 = smul.u32 64, %s236
          %s238 = smul.u32 %s237, 3
        $region28: #{tpu_custom_call.1} parent=23 // pred_fallthru
          _
        // Predicated region
        $region29: #{tpu_custom_call.1} parent=23 // pred_check
          %p239 = pneg %p80
        $region30: #{tpu_custom_call.1} parent=23 // pred_check_branch
          %241 = sbr.rel (%p239) target = $region32
        $region31: #{tpu_custom_call.1} parent=23 // pred_region
          %s242 = sadd.s32 %s22, 1
          %s243 = smul.u32 %s242, 16
          %p244 = scmp.lt.s32.totalorder %s21, 1
          %s245 = scalar_select %p244, %s21, 1
          %p246 = scmp.lt.s32.totalorder %s243, 17
          %s247 = scalar_select %p246, %s243, 17
          %s248 = smul.addr %s247, 3
          %s249 = smul.addr %s245, 54
          %s250 = sadd.s32 %s248, %s249
          %s251 = smul.addr %s250, 4
          %s252 = scalar_lea.vmem %s1, %s251
          %s253 = sadd.s32 %s22, 1
          %s254 = smul.u32 %s253, 16
        $region32: #{tpu_custom_call.1} parent=23 // pred_fallthru
          _
        // Predicated region
        $region33: #{tpu_custom_call.1} parent=23 // pred_check
          %p255 = pneg %p114
        $region34: #{tpu_custom_call.1} parent=23 // pred_check_branch
          %257 = sbr.rel (%p255) target = $region36
        $region35: #{tpu_custom_call.1} parent=23 // pred_region
          %s258 = sadd.s32 %s22, 1
          %s259 = smul.u32 %s258, 16
          %s260 = sadd.s32 %s259, 1
          %p261 = scmp.lt.s32.totalorder %s21, 1
          %s262 = scalar_select %p261, %s21, 1
          %p263 = scmp.lt.s32.totalorder %s260, 17
          %s264 = scalar_select %p263, %s260, 17
          %s265 = smul.addr %s264, 3
          %s266 = smul.addr %s262, 54
          %s267 = sadd.s32 %s265, %s266
          %s268 = smul.addr %s267, 4
          %s269 = scalar_lea.vmem %s2, %s268
          %s270 = sadd.s32 %s22, 1
          %s271 = smul.u32 %s270, 16
          %s272 = sadd.s32 %s271, 1
        $region36: #{tpu_custom_call.1} parent=23 // pred_fallthru
          _
      $region24: #{tpu_custom_call.1} parent=5 // pred_fallthru
        _
      %p273 = scmp.le.s32.totalorder 1, %s14
      %p274 = scmp.lt.s32.totalorder %s14, 3
      %p275 = pnand %p273, %p274
      %p276 = pneg %p275
      // Predicated region
      $region37: #{tpu_custom_call.1} parent=5 // pred_check
        _
      $region38: #{tpu_custom_call.1} parent=5 // pred_check_branch
        %278 = sbr.rel (%p275) target = $region40
      $region39: #{tpu_custom_call.1} parent=5 // pred_region
        %s279 = ssub.s32 %s14, 1
        %s280 = smul.u32 16, %s24
        %s281 = ssub.s32 18, %s280
        %p282 = scmp.lt.s32.totalorder %s281, 16
        %s283 = scalar_select %p282, %s281, 16
        %s284 = smul.u32 64, %s283
        %s285 = smul.u32 %s284, 3
        %p286 = scmp.lt.s32.totalorder %s23, 1
        %s287 = scalar_select %p286, %s23, 1
        %p288 = scmp.lt.s32.totalorder %s280, 17
        %s289 = scalar_select %p288, %s280, 17
        %s290 = smul.addr %s289, 3
        %s291 = smul.addr %s287, 54
        %s292 = sadd.s32 %s290, %s291
        %s293 = smul.addr %s292, 4
        %s294 = scalar_lea.vmem %s0, %s293
        %p295 = pneg %p54
        %p296 = pneg %p51
        %s297 = sadd.s32 %s24, 1
        %s298 = smul.u32 %s297, 16
        %p299 = scmp.lt.s32.totalorder %s23, 1
        %s300 = scalar_select %p299, %s23, 1
        %p301 = scmp.lt.s32.totalorder %s298, 17
        %s302 = scalar_select %p301, %s298, 17
        %s303 = smul.addr %s302, 3
        %s304 = smul.addr %s300, 54
        %s305 = sadd.s32 %s303, %s304
        %s306 = smul.addr %s305, 4
        %s307 = scalar_lea.vmem %s1, %s306
        %p308 = pneg %p86
        %p309 = pneg %p83
        %s310 = sadd.s32 %s24, 1
        %s311 = smul.u32 %s310, 16
        %s312 = sadd.s32 %s311, 1
        %p313 = scmp.lt.s32.totalorder %s23, 1
        %s314 = scalar_select %p313, %s23, 1
        %p315 = scmp.lt.s32.totalorder %s312, 17
        %s316 = scalar_select %p315, %s312, 17
        %s317 = smul.addr %s316, 3
        %s318 = smul.addr %s314, 54
        %s319 = sadd.s32 %s317, %s318
        %s320 = smul.addr %s319, 4
        %s321 = scalar_lea.vmem %s2, %s320
        %p322 = pneg %p120
        %p323 = pneg %p117
        %p324 = pneg %p141
        %p325 = pneg %p138
        %p326 = pneg %p162
        %p327 = pneg %p159
        %p328 = pneg %p190
        %p329 = pneg %p187
        %s330 = sand.u32 %s177, 1
        %s331 = scalar_lea.sflag [#allocation4], %s330
        %s332 = sand.u32 %s177, 1
        %s333 = smul.addr %s332, 256
        %s334 = scalar_lea.vmem [#allocation3], %s333
        %s335 = smul.u32 16, %s24
        %s336 = ssub.s32 18, %s335
        %p337 = scmp.lt.s32.totalorder %s336, 16
        %s338 = scalar_select %p337, %s336, 16
        %s339 = smul.u32 64, %s338
        %s340 = smul.u32 %s339, 3
        %p341 = scmp.lt.s32.totalorder %s23, 1
        %s342 = scalar_select %p341, %s23, 1
        %p343 = scmp.lt.s32.totalorder %s335, 17
        %s344 = scalar_select %p343, %s335, 17
        %s345 = smul.addr %s344, 3
        %s346 = smul.addr %s342, 54
        %s347 = sadd.s32 %s345, %s346
        %s348 = smul.addr %s347, 4
        %s349 = scalar_lea.vmem %s0, %s348
        %s350 = smul.u32 16, %s24
        %s351 = ssub.s32 18, %s350
        %p352 = scmp.lt.s32.totalorder %s351, 16
        %s353 = scalar_select %p352, %s351, 16
        %s354 = smul.u32 64, %s353
        %s355 = smul.u32 %s354, 3
        %s356 = sadd.s32 %s24, 1
        %s357 = smul.u32 %s356, 16
        %p358 = scmp.lt.s32.totalorder %s23, 1
        %s359 = scalar_select %p358, %s23, 1
        %p360 = scmp.lt.s32.totalorder %s357, 17
        %s361 = scalar_select %p360, %s357, 17
        %s362 = smul.addr %s361, 3
        %s363 = smul.addr %s359, 54
        %s364 = sadd.s32 %s362, %s363
        %s365 = smul.addr %s364, 4
        %s366 = scalar_lea.vmem %s1, %s365
        %s367 = sadd.s32 %s24, 1
        %s368 = smul.u32 %s367, 16
        %s369 = sadd.s32 %s24, 1
        %s370 = smul.u32 %s369, 16
        %s371 = sadd.s32 %s370, 1
        %p372 = scmp.lt.s32.totalorder %s23, 1
        %s373 = scalar_select %p372, %s23, 1
        %p374 = scmp.lt.s32.totalorder %s371, 17
        %s375 = scalar_select %p374, %s371, 17
        %s376 = smul.addr %s375, 3
        %s377 = smul.addr %s373, 54
        %s378 = sadd.s32 %s376, %s377
        %s379 = smul.addr %s378, 4
        %s380 = scalar_lea.vmem %s2, %s379
        %s381 = sadd.s32 %s24, 1
        %s382 = smul.u32 %s381, 16
        %s383 = sadd.s32 %s382, 1
        %s384 = smul.u32 16, %s24
        %v386 = vld [vmem:[%s349] sm:$0xf]
        %v387 = vld [vmem:[%s349 + $0x4] sm:$0xf]
        %v388 = vld [vmem:[%s349 + $0x8] sm:$0x1]
        %v389 = vld [vmem:[%s349 + $0xc] sm:$0xf]
        %v390 = vld [vmem:[%s349 + $0x10] sm:$0xf]
        %v391 = vld [vmem:[%s349 + $0x14] sm:$0x1]
        %v392 = vld [vmem:[%s349 + $0x18] sm:$0xf]
        %v393 = vld [vmem:[%s349 + $0x1c] sm:$0xf]
        %v394 = vld [vmem:[%s349 + $0x20] sm:$0x1]
        %v395 = vld [vmem:[%s349 + $0x24] sm:$0xf]
        %v396 = vld [vmem:[%s349 + $0x28] sm:$0xf]
        %v397 = vld [vmem:[%s349 + $0x2c] sm:$0x1]
        %v398 = vld [vmem:[%s349 + $0x30] sm:$0xf]
        %v399 = vld [vmem:[%s349 + $0x34] sm:$0xf]
        %v400 = vld [vmem:[%s349 + $0x38] sm:$0x1]
        %v401 = vld [vmem:[%s349 + $0x3c] sm:$0xf]
        %v402 = vld [vmem:[%s349 + $0x40] sm:$0xf]
        %v403 = vld [vmem:[%s349 + $0x44] sm:$0x1]
        %v404 = vld [vmem:[%s349 + $0x48] sm:$0xf]
        %v405 = vld [vmem:[%s349 + $0x4c] sm:$0xf]
        %v406 = vld [vmem:[%s349 + $0x50] sm:$0x1]
        %v407 = vld [vmem:[%s349 + $0x54] sm:$0xf]
        %v408 = vld [vmem:[%s349 + $0x58] sm:$0xf]
        %v409 = vld [vmem:[%s349 + $0x5c] sm:$0x1]
        %v410 = vld [vmem:[%s349 + $0x60] sm:$0xf]
        %v411 = vld [vmem:[%s349 + $0x64] sm:$0xf]
        %v412 = vld [vmem:[%s349 + $0x68] sm:$0x1]
        %v413 = vld [vmem:[%s349 + $0x6c] sm:$0xf]
        %v414 = vld [vmem:[%s349 + $0x70] sm:$0xf]
        %v415 = vld [vmem:[%s349 + $0x74] sm:$0x1]
        %v416 = vld [vmem:[%s349 + $0x78] sm:$0xf]
        %v417 = vld [vmem:[%s349 + $0x7c] sm:$0xf]
        %v418 = vld [vmem:[%s349 + $0x80] sm:$0x1]
        %v419 = vld [vmem:[%s349 + $0x84] sm:$0xf]
        %v420 = vld [vmem:[%s349 + $0x88] sm:$0xf]
        %v421 = vld [vmem:[%s349 + $0x8c] sm:$0x1]
        %v422 = vld [vmem:[%s349 + $0x90] sm:$0xf]
        %v423 = vld [vmem:[%s349 + $0x94] sm:$0xf]
        %v424 = vld [vmem:[%s349 + $0x98] sm:$0x1]
        %v425 = vld [vmem:[%s349 + $0x9c] sm:$0xf]
        %v426 = vld [vmem:[%s349 + $0xa0] sm:$0xf]
        %v427 = vld [vmem:[%s349 + $0xa4] sm:$0x1]
        %v428 = vld [vmem:[%s349 + $0xa8] sm:$0xf]
        %v429 = vld [vmem:[%s349 + $0xac] sm:$0xf]
        %v430 = vld [vmem:[%s349 + $0xb0] sm:$0x1]
        %v431 = vld [vmem:[%s349 + $0xb4] sm:$0xf]
        %v432 = vld [vmem:[%s349 + $0xb8] sm:$0xf]
        %v433 = vld [vmem:[%s349 + $0xbc] sm:$0x1]
        %434 = vst [vmem:[#allocation2] sm:$0xf] %v386
        %435 = vst [vmem:[#allocation2 + $0x4] sm:$0xf] %v387
        %436 = vst [vmem:[#allocation2 + $0x8] sm:$0x1] %v388
        %437 = vst [vmem:[#allocation2 + $0xc] sm:$0xf] %v389
        %438 = vst [vmem:[#allocation2 + $0x10] sm:$0xf] %v390
        %439 = vst [vmem:[#allocation2 + $0x14] sm:$0x1] %v391
        %440 = vst [vmem:[#allocation2 + $0x18] sm:$0xf] %v392
        %441 = vst [vmem:[#allocation2 + $0x1c] sm:$0xf] %v393
        %442 = vst [vmem:[#allocation2 + $0x20] sm:$0x1] %v394
        %443 = vst [vmem:[#allocation2 + $0x24] sm:$0xf] %v395
        %444 = vst [vmem:[#allocation2 + $0x28] sm:$0xf] %v396
        %445 = vst [vmem:[#allocation2 + $0x2c] sm:$0x1] %v397
        %446 = vst [vmem:[#allocation2 + $0x30] sm:$0xf] %v398
        %447 = vst [vmem:[#allocation2 + $0x34] sm:$0xf] %v399
        %448 = vst [vmem:[#allocation2 + $0x38] sm:$0x1] %v400
        %449 = vst [vmem:[#allocation2 + $0x3c] sm:$0xf] %v401
        %450 = vst [vmem:[#allocation2 + $0x40] sm:$0xf] %v402
        %451 = vst [vmem:[#allocation2 + $0x44] sm:$0x1] %v403
        %452 = vst [vmem:[#allocation2 + $0x48] sm:$0xf] %v404
        %453 = vst [vmem:[#allocation2 + $0x4c] sm:$0xf] %v405
        %454 = vst [vmem:[#allocation2 + $0x50] sm:$0x1] %v406
        %455 = vst [vmem:[#allocation2 + $0x54] sm:$0xf] %v407
        %456 = vst [vmem:[#allocation2 + $0x58] sm:$0xf] %v408
        %457 = vst [vmem:[#allocation2 + $0x5c] sm:$0x1] %v409
        %458 = vst [vmem:[#allocation2 + $0x60] sm:$0xf] %v410
        %459 = vst [vmem:[#allocation2 + $0x64] sm:$0xf] %v411
        %460 = vst [vmem:[#allocation2 + $0x68] sm:$0x1] %v412
        %461 = vst [vmem:[#allocation2 + $0x6c] sm:$0xf] %v413
        %462 = vst [vmem:[#allocation2 + $0x70] sm:$0xf] %v414
        %463 = vst [vmem:[#allocation2 + $0x74] sm:$0x1] %v415
        %464 = vst [vmem:[#allocation2 + $0x78] sm:$0xf] %v416
        %465 = vst [vmem:[#allocation2 + $0x7c] sm:$0xf] %v417
        %466 = vst [vmem:[#allocation2 + $0x80] sm:$0x1] %v418
        %467 = vst [vmem:[#allocation2 + $0x84] sm:$0xf] %v419
        %468 = vst [vmem:[#allocation2 + $0x88] sm:$0xf] %v420
        %469 = vst [vmem:[#allocation2 + $0x8c] sm:$0x1] %v421
        %470 = vst [vmem:[#allocation2 + $0x90] sm:$0xf] %v422
        %471 = vst [vmem:[#allocation2 + $0x94] sm:$0xf] %v423
        %472 = vst [vmem:[#allocation2 + $0x98] sm:$0x1] %v424
        %473 = vst [vmem:[#allocation2 + $0x9c] sm:$0xf] %v425
        %474 = vst [vmem:[#allocation2 + $0xa0] sm:$0xf] %v426
        %475 = vst [vmem:[#allocation2 + $0xa4] sm:$0x1] %v427
        %476 = vst [vmem:[#allocation2 + $0xa8] sm:$0xf] %v428
        %477 = vst [vmem:[#allocation2 + $0xac] sm:$0xf] %v429
        %478 = vst [vmem:[#allocation2 + $0xb0] sm:$0x1] %v430
        %479 = vst [vmem:[#allocation2 + $0xb4] sm:$0xf] %v431
        %480 = vst [vmem:[#allocation2 + $0xb8] sm:$0xf] %v432
        %481 = vst [vmem:[#allocation2 + $0xbc] sm:$0x1] %v433
        %v482 = vld [vmem:[%s366] sm:$0xf]
        %v483 = vld [vmem:[%s366 + $0x4] sm:$0xf]
        %v484 = vld [vmem:[%s366 + $0x8] sm:$0x1]
        %s485 = scalar_lea.vmem [#allocation2], 192
        %486 = vst [vmem:[%s485] sm:$0xf] %v482
        %487 = vst [vmem:[%s485 + $0x4] sm:$0xf] %v483
        %488 = vst [vmem:[%s485 + $0x8] sm:$0x1] %v484
        %v489 = vld [vmem:[%s380] sm:$0xf]
        %v490 = vld [vmem:[%s380 + $0x4] sm:$0xf]
        %v491 = vld [vmem:[%s380 + $0x8] sm:$0x1]
        %s492 = scalar_lea.vmem [#allocation2], 204
        %493 = vst [vmem:[%s492] sm:$0xf] %v489
        %494 = vst [vmem:[%s492 + $0x4] sm:$0xf] %v490
        %495 = vst [vmem:[%s492 + $0x8] sm:$0x1] %v491
        %v496 = vld [vmem:[#allocation2] sm:$0xf]
        %v497 = vld [vmem:[#allocation2 + $0x4] sm:$0xf]
        %v498 = vld [vmem:[#allocation2 + $0x8] sm:$0x1]
        %v499 = vld [vmem:[#allocation2 + $0xc] sm:$0xf]
        %v500 = vld [vmem:[#allocation2 + $0x10] sm:$0xf]
        %v501 = vld [vmem:[#allocation2 + $0x14] sm:$0x1]
        %v502 = vld [vmem:[#allocation2 + $0x18] sm:$0xf]
        %v503 = vld [vmem:[#allocation2 + $0x1c] sm:$0xf]
        %v504 = vld [vmem:[#allocation2 + $0x20] sm:$0x1]
        %v505 = vld [vmem:[#allocation2 + $0x24] sm:$0xf]
        %v506 = vld [vmem:[#allocation2 + $0x28] sm:$0xf]
        %v507 = vld [vmem:[#allocation2 + $0x2c] sm:$0x1]
        %v508 = vld [vmem:[#allocation2 + $0x30] sm:$0xf]
        %v509 = vld [vmem:[#allocation2 + $0x34] sm:$0xf]
        %v510 = vld [vmem:[#allocation2 + $0x38] sm:$0x1]
        %v511 = vld [vmem:[#allocation2 + $0x3c] sm:$0xf]
        %v512 = vld [vmem:[#allocation2 + $0x40] sm:$0xf]
        %v513 = vld [vmem:[#allocation2 + $0x44] sm:$0x1]
        %v514 = vld [vmem:[#allocation2 + $0x48] sm:$0xf]
        %v515 = vld [vmem:[#allocation2 + $0x4c] sm:$0xf]
        %v516 = vld [vmem:[#allocation2 + $0x50] sm:$0x1]
        %v517 = vld [vmem:[#allocation2 + $0x54] sm:$0xf]
        %v518 = vld [vmem:[#allocation2 + $0x58] sm:$0xf]
        %v519 = vld [vmem:[#allocation2 + $0x5c] sm:$0x1]
        %v520 = vld [vmem:[#allocation2 + $0x60] sm:$0xf]
        %v521 = vld [vmem:[#allocation2 + $0x64] sm:$0xf]
        %v522 = vld [vmem:[#allocation2 + $0x68] sm:$0x1]
        %v523 = vld [vmem:[#allocation2 + $0x6c] sm:$0xf]
        %v524 = vld [vmem:[#allocation2 + $0x70] sm:$0xf]
        %v525 = vld [vmem:[#allocation2 + $0x74] sm:$0x1]
        %v526 = vld [vmem:[#allocation2 + $0x78] sm:$0xf]
        %v527 = vld [vmem:[#allocation2 + $0x7c] sm:$0xf]
        %v528 = vld [vmem:[#allocation2 + $0x80] sm:$0x1]
        %v529 = vld [vmem:[#allocation2 + $0x84] sm:$0xf]
        %v530 = vld [vmem:[#allocation2 + $0x88] sm:$0xf]
        %v531 = vld [vmem:[#allocation2 + $0x8c] sm:$0x1]
        %v532 = vld [vmem:[#allocation2 + $0x90] sm:$0xf]
        %v533 = vld [vmem:[#allocation2 + $0x94] sm:$0xf]
        %v534 = vld [vmem:[#allocation2 + $0x98] sm:$0x1]
        %v535 = vld [vmem:[#allocation2 + $0x9c] sm:$0xf]
        %v536 = vld [vmem:[#allocation2 + $0xa0] sm:$0xf]
        %v537 = vld [vmem:[#allocation2 + $0xa4] sm:$0x1]
        %v538 = vld [vmem:[#allocation2 + $0xa8] sm:$0xf]
        %v539 = vld [vmem:[#allocation2 + $0xac] sm:$0xf]
        %v540 = vld [vmem:[#allocation2 + $0xb0] sm:$0x1]
        %v541 = vld [vmem:[#allocation2 + $0xb4] sm:$0xf]
        %v542 = vld [vmem:[#allocation2 + $0xb8] sm:$0xf]
        %v543 = vld [vmem:[#allocation2 + $0xbc] sm:$0x1]
        %v544 = vld [vmem:[#allocation2 + $0xc0] sm:$0xf]
        %v545 = vld [vmem:[#allocation2 + $0xc4] sm:$0xf]
        %v546 = vld [vmem:[#allocation2 + $0xc8] sm:$0x1]
        %v547 = vld [vmem:[#allocation2 + $0xcc] sm:$0xf]
        %v548 = vld [vmem:[#allocation2 + $0xd0] sm:$0xf]
        %v549 = vld [vmem:[#allocation2 + $0xd4] sm:$0x1]
        %v550 = vld [vmem:[%s3] sm:$0xf]
        %v551 = vld [vmem:[%s3 + $0x4] sm:$0xf]
        %v552 = vld [vmem:[%s3 + $0x8] sm:$0xf]
        %v553 = vld [vmem:[%s3 + $0xc] sm:$0xf]
        %v554 = vld [vmem:[%s3 + $0x10] sm:$0xf]
        %v555 = vld [vmem:[%s3 + $0x14] sm:$0xf]
        %v556 = vld [vmem:[%s3 + $0x18] sm:$0xf]
        %v557 = vld [vmem:[%s3 + $0x1c] sm:$0xf]
        %v558 = vld [vmem:[%s3 + $0x20] sm:$0xf]
        %v559 = vld [vmem:[%s3 + $0x24] sm:$0xf]
        %v560 = vld [vmem:[%s3 + $0x28] sm:$0xf]
        %v561 = vld [vmem:[%s3 + $0x2c] sm:$0xf]
        %v562 = vld [vmem:[%s3 + $0x30] sm:$0xf]
        %v563 = vld [vmem:[%s3 + $0x34] sm:$0xf]
        %v564 = vld [vmem:[%s3 + $0x38] sm:$0xf]
        %v565 = vld [vmem:[%s3 + $0x3c] sm:$0xf]
        %v566 = vld [vmem:[%s3 + $0x40] sm:$0xf]
        %v567 = vld [vmem:[%s3 + $0x44] sm:$0xf]
        %v568 = vld [vmem:[%s3 + $0x48] sm:$0xf]
        %v569 = vld [vmem:[%s3 + $0x4c] sm:$0xf]
        %v570 = vld [vmem:[%s3 + $0x50] sm:$0xf]
        %v571 = vld [vmem:[%s3 + $0x54] sm:$0xf]
        %v572 = vld [vmem:[%s3 + $0x58] sm:$0xf]
        %v573 = vld [vmem:[%s3 + $0x5c] sm:$0xf]
        %v574 = vld [vmem:[%s3 + $0x60] sm:$0xf]
        %v575 = vld [vmem:[%s3 + $0x64] sm:$0xf]
        %v576 = vld [vmem:[%s3 + $0x68] sm:$0xf]
        %v577 = vld [vmem:[%s3 + $0x6c] sm:$0xf]
        %v578 = vld [vmem:[%s3 + $0x70] sm:$0xf]
        %v579 = vld [vmem:[%s3 + $0x74] sm:$0xf]
        %v580 = vld [vmem:[%s3 + $0x78] sm:$0xf]
        %v581 = vld [vmem:[%s3 + $0x7c] sm:$0xf]
        %v582 = vld [vmem:[%s3 + $0x80] sm:$0xf]
        %v583 = vld [vmem:[%s3 + $0x84] sm:$0xf]
        %v584 = vld [vmem:[%s3 + $0x88] sm:$0xf]
        %v585 = vld [vmem:[%s3 + $0x8c] sm:$0xf]
        %v586 = vld [vmem:[%s3 + $0x90] sm:$0xf]
        %v587 = vld [vmem:[%s3 + $0x94] sm:$0xf]
        %v588 = vld [vmem:[%s3 + $0x98] sm:$0xf]
        %v589 = vld [vmem:[%s3 + $0x9c] sm:$0xf]
        %v590 = vld [vmem:[%s3 + $0xa0] sm:$0xf]
        %v591 = vld [vmem:[%s3 + $0xa4] sm:$0xf]
        %v592 = vld [vmem:[%s3 + $0xa8] sm:$0xf]
        %v593 = vld [vmem:[%s3 + $0xac] sm:$0xf]
        %v594 = vld [vmem:[%s3 + $0xb0] sm:$0xf]
        %v595 = vld [vmem:[%s3 + $0xb4] sm:$0xf]
        %v596 = vld [vmem:[%s3 + $0xb8] sm:$0xf]
        %v597 = vld [vmem:[%s3 + $0xbc] sm:$0xf]
        %v598 = vld [vmem:[%s3 + $0xc0] sm:$0xf]
        %v599 = vld [vmem:[%s3 + $0xc4] sm:$0xf]
        %v600 = vld [vmem:[%s3 + $0xc8] sm:$0xf]
        %v601 = vld [vmem:[%s3 + $0xcc] sm:$0xf]
        %v602 = vld [vmem:[%s3 + $0xd0] sm:$0xf]
        %v603 = vld [vmem:[%s3 + $0xd4] sm:$0xf]
        %v604 = vld [vmem:[%s3 + $0xd8] sm:$0xf]
        %v605 = vld [vmem:[%s3 + $0xdc] sm:$0xf]
        %v606 = vld [vmem:[%s3 + $0xe0] sm:$0xf]
        %v607 = vld [vmem:[%s3 + $0xe4] sm:$0xf]
        %v608 = vld [vmem:[%s3 + $0xe8] sm:$0xf]
        %v609 = vld [vmem:[%s3 + $0xec] sm:$0xf]
        %v610 = vld [vmem:[%s3 + $0xf0] sm:$0xf]
        %v611 = vld [vmem:[%s3 + $0xf4] sm:$0xf]
        %v612 = vld [vmem:[%s3 + $0xf8] sm:$0xf]
        %v613 = vld [vmem:[%s3 + $0xfc] sm:$0xf]
        %v614 = vld [vmem:[%s3 + $0x100] sm:$0xf]
        %v615 = vld [vmem:[%s3 + $0x104] sm:$0xf]
        %v616 = vld [vmem:[%s3 + $0x108] sm:$0xf]
        %v617 = vld [vmem:[%s3 + $0x10c] sm:$0xf]
        %v618 = vld [vmem:[%s3 + $0x110] sm:$0xf]
        %v619 = vld [vmem:[%s3 + $0x114] sm:$0xf]
        %v620 = vld [vmem:[%s3 + $0x118] sm:$0xf]
        %v621 = vld [vmem:[%s3 + $0x11c] sm:$0xf]
        %v622 = vld [vmem:[%s3 + $0x120] sm:$0xf]
        %v623 = vld [vmem:[%s3 + $0x124] sm:$0xf]
        %v624 = vld [vmem:[%s3 + $0x128] sm:$0xf]
        %v625 = vld [vmem:[%s3 + $0x12c] sm:$0xf]
        %v626 = vld [vmem:[%s3 + $0x130] sm:$0xf]
        %v627 = vld [vmem:[%s3 + $0x134] sm:$0xf]
        %v628 = vld [vmem:[%s3 + $0x138] sm:$0xf]
        %v629 = vld [vmem:[%s3 + $0x13c] sm:$0xf]
        %v630 = vld [vmem:[%s3 + $0x140] sm:$0xf]
        %v631 = vld [vmem:[%s3 + $0x144] sm:$0xf]
        %v632 = vld [vmem:[%s3 + $0x148] sm:$0xf]
        %v633 = vld [vmem:[%s3 + $0x14c] sm:$0xf]
        %v634 = vld [vmem:[%s3 + $0x150] sm:$0xf]
        %v635 = vld [vmem:[%s3 + $0x154] sm:$0xf]
        %v636 = vld [vmem:[%s3 + $0x158] sm:$0xf]
        %v637 = vld [vmem:[%s3 + $0x15c] sm:$0xf]
        %v638 = vld [vmem:[%s3 + $0x160] sm:$0xf]
        %v639 = vld [vmem:[%s3 + $0x164] sm:$0xf]
        %v640 = vld [vmem:[%s3 + $0x168] sm:$0xf]
        %v641 = vld [vmem:[%s3 + $0x16c] sm:$0xf]
        %v642 = vld [vmem:[%s3 + $0x170] sm:$0xf]
        %v643 = vld [vmem:[%s3 + $0x174] sm:$0xf]
        %v644 = vld [vmem:[%s3 + $0x178] sm:$0xf]
        %v645 = vld [vmem:[%s3 + $0x17c] sm:$0xf]
        %v646 = vld [vmem:[%s3 + $0x180] sm:$0xf]
        %v647 = vld [vmem:[%s3 + $0x184] sm:$0xf]
        %v648 = vld [vmem:[%s3 + $0x188] sm:$0xf]
        %v649 = vld [vmem:[%s3 + $0x18c] sm:$0xf]
        %v650 = vld [vmem:[%s3 + $0x190] sm:$0xf]
        %v651 = vld [vmem:[%s3 + $0x194] sm:$0xf]
        %v652 = vld [vmem:[%s3 + $0x198] sm:$0xf]
        %v653 = vld [vmem:[%s3 + $0x19c] sm:$0xf]
        %v654 = vld [vmem:[%s3 + $0x1a0] sm:$0xf]
        %v655 = vld [vmem:[%s3 + $0x1a4] sm:$0xf]
        %v656 = vld [vmem:[%s3 + $0x1a8] sm:$0xf]
        %v657 = vld [vmem:[%s3 + $0x1ac] sm:$0xf]
        %v658 = vld [vmem:[%s3 + $0x1b0] sm:$0xf]
        %v659 = vld [vmem:[%s3 + $0x1b4] sm:$0xf]
        %v660 = vld [vmem:[%s3 + $0x1b8] sm:$0xf]
        %v661 = vld [vmem:[%s3 + $0x1bc] sm:$0xf]
        %v662 = vld [vmem:[%s3 + $0x1c0] sm:$0xf]
        %v663 = vld [vmem:[%s3 + $0x1c4] sm:$0xf]
        %v664 = vld [vmem:[%s3 + $0x1c8] sm:$0xf]
        %v665 = vld [vmem:[%s3 + $0x1cc] sm:$0xf]
        %v666 = vld [vmem:[%s3 + $0x1d0] sm:$0xf]
        %v667 = vld [vmem:[%s3 + $0x1d4] sm:$0xf]
        %v668 = vld [vmem:[%s3 + $0x1d8] sm:$0xf]
        %v669 = vld [vmem:[%s3 + $0x1dc] sm:$0xf]
        %v670 = vld [vmem:[%s3 + $0x1e0] sm:$0xf]
        %v671 = vld [vmem:[%s3 + $0x1e4] sm:$0xf]
        %v672 = vld [vmem:[%s3 + $0x1e8] sm:$0xf]
        %v673 = vld [vmem:[%s3 + $0x1ec] sm:$0xf]
        %v674 = vld [vmem:[%s3 + $0x1f0] sm:$0xf]
        %v675 = vld [vmem:[%s3 + $0x1f4] sm:$0xf]
        %v676 = vld [vmem:[%s3 + $0x1f8] sm:$0xf]
        %v677 = vld [vmem:[%s3 + $0x1fc] sm:$0xf]
        %v678 = vld [vmem:[%s3 + $0x200] sm:$0xf]
        %v679 = vld [vmem:[%s3 + $0x204] sm:$0xf]
        %v680 = vld [vmem:[%s3 + $0x208] sm:$0xf]
        %v681 = vld [vmem:[%s3 + $0x20c] sm:$0xf]
        %v682 = vld [vmem:[%s3 + $0x210] sm:$0xf]
        %v683 = vld [vmem:[%s3 + $0x214] sm:$0xf]
        %v684 = vld [vmem:[%s3 + $0x218] sm:$0xf]
        %v685 = vld [vmem:[%s3 + $0x21c] sm:$0xf]
        %v686 = vld [vmem:[%s3 + $0x220] sm:$0xf]
        %v687 = vld [vmem:[%s3 + $0x224] sm:$0xf]
        %v688 = vld [vmem:[%s3 + $0x228] sm:$0xf]
        %v689 = vld [vmem:[%s3 + $0x22c] sm:$0xf]
        %v690 = vld [vmem:[%s3 + $0x230] sm:$0xf]
        %v691 = vld [vmem:[%s3 + $0x234] sm:$0xf]
        %v692 = vld [vmem:[%s3 + $0x238] sm:$0xf]
        %v693 = vld [vmem:[%s3 + $0x23c] sm:$0xf]
        %vm694 = vsmask.f32 3328
        %vm695 = vsmask.f32 7440
        %vm696 = vmor %vm694, %vm695
        %v698 = vshrl.u32 %v496, 16
        %v700 = vrot.slane %v698, 4
        %v701 = vshll.u32 %v496, 16
        %v703 = vrot.slane %v701, 5
        %v704 = vor.u32 %v700, %v703
        %v705 = vrot.slane %v704, 4
        %v707 = vshll.u32 %v497, 16
        %v709 = vrot.slane %v707, 5
        %v710 = vsel %vm696, %v705, %v709
        %v711 = vshrl.u32 %v497, 16
        %v713 = vrot.slane %v711, 4
        %v714 = vor.u32 %v713, %v709
        %v715 = vrot.slane %v714, 4
        %v717 = vshll.u32 %v498, 16
        %v719 = vrot.slane %v717, 5
        %v720 = vsel %vm696, %v715, %v719
        %v722 = vshrl.u32 %v499, 16
        %v724 = vrot.slane %v722, 4
        %v725 = vshll.u32 %v499, 16
        %v727 = vrot.slane %v725, 5
        %v728 = vor.u32 %v724, %v727
        %v729 = vrot.slane %v728, 4
        %v731 = vshll.u32 %v500, 16
        %v733 = vrot.slane %v731, 5
        %v734 = vsel %vm696, %v729, %v733
        %v735 = vshrl.u32 %v500, 16
        %v737 = vrot.slane %v735, 4
        %v738 = vor.u32 %v737, %v733
        %v739 = vrot.slane %v738, 4
        %v741 = vshll.u32 %v501, 16
        %v743 = vrot.slane %v741, 5
        %v744 = vsel %vm696, %v739, %v743
        %v746 = vshrl.u32 %v502, 16
        %v748 = vrot.slane %v746, 4
        %v749 = vshll.u32 %v502, 16
        %v751 = vrot.slane %v749, 5
        %v752 = vor.u32 %v748, %v751
        %v753 = vrot.slane %v752, 4
        %v755 = vshll.u32 %v503, 16
        %v757 = vrot.slane %v755, 5
        %v758 = vsel %vm696, %v753, %v757
        %v759 = vshrl.u32 %v503, 16
        %v761 = vrot.slane %v759, 4
        %v762 = vor.u32 %v761, %v757
        %v763 = vrot.slane %v762, 4
        %v765 = vshll.u32 %v504, 16
        %v767 = vrot.slane %v765, 5
        %v768 = vsel %vm696, %v763, %v767
        %v770 = vshrl.u32 %v505, 16
        %v772 = vrot.slane %v770, 4
        %v773 = vshll.u32 %v505, 16
        %v775 = vrot.slane %v773, 5
        %v776 = vor.u32 %v772, %v775
        %v777 = vrot.slane %v776, 4
        %v779 = vshll.u32 %v506, 16
        %v781 = vrot.slane %v779, 5
        %v782 = vsel %vm696, %v777, %v781
        %v783 = vshrl.u32 %v506, 16
        %v785 = vrot.slane %v783, 4
        %v786 = vor.u32 %v785, %v781
        %v787 = vrot.slane %v786, 4
        %v789 = vshll.u32 %v507, 16
        %v791 = vrot.slane %v789, 5
        %v792 = vsel %vm696, %v787, %v791
        %v794 = vshrl.u32 %v508, 16
        %v796 = vrot.slane %v794, 4
        %v797 = vshll.u32 %v508, 16
        %v799 = vrot.slane %v797, 5
        %v800 = vor.u32 %v796, %v799
        %v801 = vrot.slane %v800, 4
        %v803 = vshll.u32 %v509, 16
        %v805 = vrot.slane %v803, 5
        %v806 = vsel %vm696, %v801, %v805
        %v807 = vshrl.u32 %v509, 16
        %v809 = vrot.slane %v807, 4
        %v810 = vor.u32 %v809, %v805
        %v811 = vrot.slane %v810, 4
        %v813 = vshll.u32 %v510, 16
        %v815 = vrot.slane %v813, 5
        %v816 = vsel %vm696, %v811, %v815
        %v818 = vshrl.u32 %v511, 16
        %v820 = vrot.slane %v818, 4
        %v821 = vshll.u32 %v511, 16
        %v823 = vrot.slane %v821, 5
        %v824 = vor.u32 %v820, %v823
        %v825 = vrot.slane %v824, 4
        %v827 = vshll.u32 %v512, 16
        %v829 = vrot.slane %v827, 5
        %v830 = vsel %vm696, %v825, %v829
        %v831 = vshrl.u32 %v512, 16
        %v833 = vrot.slane %v831, 4
        %v834 = vor.u32 %v833, %v829
        %v835 = vrot.slane %v834, 4
        %v837 = vshll.u32 %v513, 16
        %v839 = vrot.slane %v837, 5
        %v840 = vsel %vm696, %v835, %v839
        %v842 = vshrl.u32 %v514, 16
        %v844 = vrot.slane %v842, 4
        %v845 = vshll.u32 %v514, 16
        %v847 = vrot.slane %v845, 5
        %v848 = vor.u32 %v844, %v847
        %v849 = vrot.slane %v848, 4
        %v851 = vshll.u32 %v515, 16
        %v853 = vrot.slane %v851, 5
        %v854 = vsel %vm696, %v849, %v853
        %v855 = vshrl.u32 %v515, 16
        %v857 = vrot.slane %v855, 4
        %v858 = vor.u32 %v857, %v853
        %v859 = vrot.slane %v858, 4
        %v861 = vshll.u32 %v516, 16
        %v863 = vrot.slane %v861, 5
        %v864 = vsel %vm696, %v859, %v863
        %v866 = vshrl.u32 %v517, 16
        %v868 = vrot.slane %v866, 4
        %v869 = vshll.u32 %v517, 16
        %v871 = vrot.slane %v869, 5
        %v872 = vor.u32 %v868, %v871
        %v873 = vrot.slane %v872, 4
        %v875 = vshll.u32 %v518, 16
        %v877 = vrot.slane %v875, 5
        %v878 = vsel %vm696, %v873, %v877
        %v879 = vshrl.u32 %v518, 16
        %v881 = vrot.slane %v879, 4
        %v882 = vor.u32 %v881, %v877
        %v883 = vrot.slane %v882, 4
        %v885 = vshll.u32 %v519, 16
        %v887 = vrot.slane %v885, 5
        %v888 = vsel %vm696, %v883, %v887
        %v890 = vshrl.u32 %v520, 16
        %v892 = vrot.slane %v890, 4
        %v893 = vshll.u32 %v520, 16
        %v895 = vrot.slane %v893, 5
        %v896 = vor.u32 %v892, %v895
        %v897 = vrot.slane %v896, 4
        %v899 = vshll.u32 %v521, 16
        %v901 = vrot.slane %v899, 5
        %v902 = vsel %vm696, %v897, %v901
        %v903 = vshrl.u32 %v521, 16
        %v905 = vrot.slane %v903, 4
        %v906 = vor.u32 %v905, %v901
        %v907 = vrot.slane %v906, 4
        %v909 = vshll.u32 %v522, 16
        %v911 = vrot.slane %v909, 5
        %v912 = vsel %vm696, %v907, %v911
        %v914 = vshrl.u32 %v523, 16
        %v916 = vrot.slane %v914, 4
        %v917 = vshll.u32 %v523, 16
        %v919 = vrot.slane %v917, 5
        %v920 = vor.u32 %v916, %v919
        %v921 = vrot.slane %v920, 4
        %v923 = vshll.u32 %v524, 16
        %v925 = vrot.slane %v923, 5
        %v926 = vsel %vm696, %v921, %v925
        %v927 = vshrl.u32 %v524, 16
        %v929 = vrot.slane %v927, 4
        %v930 = vor.u32 %v929, %v925
        %v931 = vrot.slane %v930, 4
        %v933 = vshll.u32 %v525, 16
        %v935 = vrot.slane %v933, 5
        %v936 = vsel %vm696, %v931, %v935
        %v938 = vshrl.u32 %v526, 16
        %v940 = vrot.slane %v938, 4
        %v941 = vshll.u32 %v526, 16
        %v943 = vrot.slane %v941, 5
        %v944 = vor.u32 %v940, %v943
        %v945 = vrot.slane %v944, 4
        %v947 = vshll.u32 %v527, 16
        %v949 = vrot.slane %v947, 5
        %v950 = vsel %vm696, %v945, %v949
        %v951 = vshrl.u32 %v527, 16
        %v953 = vrot.slane %v951, 4
        %v954 = vor.u32 %v953, %v949
        %v955 = vrot.slane %v954, 4
        %v957 = vshll.u32 %v528, 16
        %v959 = vrot.slane %v957, 5
        %v960 = vsel %vm696, %v955, %v959
        %v962 = vshrl.u32 %v529, 16
        %v964 = vrot.slane %v962, 4
        %v965 = vshll.u32 %v529, 16
        %v967 = vrot.slane %v965, 5
        %v968 = vor.u32 %v964, %v967
        %v969 = vrot.slane %v968, 4
        %v971 = vshll.u32 %v530, 16
        %v973 = vrot.slane %v971, 5
        %v974 = vsel %vm696, %v969, %v973
        %v975 = vshrl.u32 %v530, 16
        %v977 = vrot.slane %v975, 4
        %v978 = vor.u32 %v977, %v973
        %v979 = vrot.slane %v978, 4
        %v981 = vshll.u32 %v531, 16
        %v983 = vrot.slane %v981, 5
        %v984 = vsel %vm696, %v979, %v983
        %v986 = vshrl.u32 %v532, 16
        %v988 = vrot.slane %v986, 4
        %v989 = vshll.u32 %v532, 16
        %v991 = vrot.slane %v989, 5
        %v992 = vor.u32 %v988, %v991
        %v993 = vrot.slane %v992, 4
        %v995 = vshll.u32 %v533, 16
        %v997 = vrot.slane %v995, 5
        %v998 = vsel %vm696, %v993, %v997
        %v999 = vshrl.u32 %v533, 16
        %v1001 = vrot.slane %v999, 4
        %v1002 = vor.u32 %v1001, %v997
        %v1003 = vrot.slane %v1002, 4
        %v1005 = vshll.u32 %v534, 16
        %v1007 = vrot.slane %v1005, 5
        %v1008 = vsel %vm696, %v1003, %v1007
        %v1010 = vshrl.u32 %v535, 16
        %v1012 = vrot.slane %v1010, 4
        %v1013 = vshll.u32 %v535, 16
        %v1015 = vrot.slane %v1013, 5
        %v1016 = vor.u32 %v1012, %v1015
        %v1017 = vrot.slane %v1016, 4
        %v1019 = vshll.u32 %v536, 16
        %v1021 = vrot.slane %v1019, 5
        %v1022 = vsel %vm696, %v1017, %v1021
        %v1023 = vshrl.u32 %v536, 16
        %v1025 = vrot.slane %v1023, 4
        %v1026 = vor.u32 %v1025, %v1021
        %v1027 = vrot.slane %v1026, 4
        %v1029 = vshll.u32 %v537, 16
        %v1031 = vrot.slane %v1029, 5
        %v1032 = vsel %vm696, %v1027, %v1031
        %v1034 = vshrl.u32 %v538, 16
        %v1036 = vrot.slane %v1034, 4
        %v1037 = vshll.u32 %v538, 16
        %v1039 = vrot.slane %v1037, 5
        %v1040 = vor.u32 %v1036, %v1039
        %v1041 = vrot.slane %v1040, 4
        %v1043 = vshll.u32 %v539, 16
        %v1045 = vrot.slane %v1043, 5
        %v1046 = vsel %vm696, %v1041, %v1045
        %v1047 = vshrl.u32 %v539, 16
        %v1049 = vrot.slane %v1047, 4
        %v1050 = vor.u32 %v1049, %v1045
        %v1051 = vrot.slane %v1050, 4
        %v1053 = vshll.u32 %v540, 16
        %v1055 = vrot.slane %v1053, 5
        %v1056 = vsel %vm696, %v1051, %v1055
        %v1058 = vshrl.u32 %v541, 16
        %v1060 = vrot.slane %v1058, 4
        %v1061 = vshll.u32 %v541, 16
        %v1063 = vrot.slane %v1061, 5
        %v1064 = vor.u32 %v1060, %v1063
        %v1065 = vrot.slane %v1064, 4
        %v1067 = vshll.u32 %v542, 16
        %v1069 = vrot.slane %v1067, 5
        %v1070 = vsel %vm696, %v1065, %v1069
        %v1071 = vshrl.u32 %v542, 16
        %v1073 = vrot.slane %v1071, 4
        %v1074 = vor.u32 %v1073, %v1069
        %v1075 = vrot.slane %v1074, 4
        %v1077 = vshll.u32 %v543, 16
        %v1079 = vrot.slane %v1077, 5
        %v1080 = vsel %vm696, %v1075, %v1079
        %v1081 = vunpack.c.l.b16 %v710
        %v1082 = vunpack.c.l.b16 %v720
        %v1083 = vunpack.c.l.b16 %v734
        %v1084 = vunpack.c.l.b16 %v744
        %v1085 = vunpack.c.l.b16 %v758
        %v1086 = vunpack.c.l.b16 %v768
        %v1087 = vunpack.c.l.b16 %v782
        %v1088 = vunpack.c.l.b16 %v792
        %v1089 = vunpack.c.l.b16 %v806
        %v1090 = vunpack.c.l.b16 %v816
        %v1091 = vunpack.c.l.b16 %v830
        %v1092 = vunpack.c.l.b16 %v840
        %v1093 = vunpack.c.l.b16 %v854
        %v1094 = vunpack.c.l.b16 %v864
        %v1095 = vunpack.c.l.b16 %v878
        %v1096 = vunpack.c.l.b16 %v888
        %v1097 = vunpack.c.l.b16 %v902
        %v1098 = vunpack.c.l.b16 %v912
        %v1099 = vunpack.c.l.b16 %v926
        %v1100 = vunpack.c.l.b16 %v936
        %v1101 = vunpack.c.l.b16 %v950
        %v1102 = vunpack.c.l.b16 %v960
        %v1103 = vunpack.c.l.b16 %v974
        %v1104 = vunpack.c.l.b16 %v984
        %v1105 = vunpack.c.l.b16 %v998
        %v1106 = vunpack.c.l.b16 %v1008
        %v1107 = vunpack.c.l.b16 %v1022
        %v1108 = vunpack.c.l.b16 %v1032
        %v1109 = vunpack.c.l.b16 %v1046
        %v1110 = vunpack.c.l.b16 %v1056
        %v1111 = vunpack.c.l.b16 %v1070
        %v1112 = vunpack.c.l.b16 %v1080
        %v1113 = vpack.c.b16 %v1082, %v1081
        %v1114 = vpack.c.b16 %v1084, %v1083
        %v1115 = vpack.c.b16 %v1086, %v1085
        %v1116 = vpack.c.b16 %v1088, %v1087
        %v1117 = vpack.c.b16 %v1090, %v1089
        %v1118 = vpack.c.b16 %v1092, %v1091
        %v1119 = vpack.c.b16 %v1094, %v1093
        %v1120 = vpack.c.b16 %v1096, %v1095
        %v1121 = vpack.c.b16 %v1098, %v1097
        %v1122 = vpack.c.b16 %v1100, %v1099
        %v1123 = vpack.c.b16 %v1102, %v1101
        %v1124 = vpack.c.b16 %v1104, %v1103
        %v1125 = vpack.c.b16 %v1106, %v1105
        %v1126 = vpack.c.b16 %v1108, %v1107
        %v1127 = vpack.c.b16 %v1110, %v1109
        %v1128 = vpack.c.b16 %v1112, %v1111
        %v1161 = vunpack.c.l.b16 %v566
        %v1162 = vunpack.c.l.b16 %v567
        %v1163 = vunpack.c.l.b16 %v568
        %v1164 = vunpack.c.l.b16 %v569
        %v1165 = vunpack.c.l.b16 %v570
        %v1166 = vunpack.c.l.b16 %v571
        %v1167 = vunpack.c.l.b16 %v572
        %v1168 = vunpack.c.l.b16 %v573
        %v1169 = vunpack.c.l.b16 %v574
        %v1170 = vunpack.c.l.b16 %v575
        %v1171 = vunpack.c.l.b16 %v576
        %v1172 = vunpack.c.l.b16 %v577
        %v1173 = vunpack.c.l.b16 %v578
        %v1174 = vunpack.c.l.b16 %v579
        %v1175 = vunpack.c.l.b16 %v580
        %v1176 = vunpack.c.l.b16 %v581
        %v1177 = vpack.c.b16 %v1162, %v1161
        %v1178 = vpack.c.b16 %v1164, %v1163
        %v1179 = vpack.c.b16 %v1166, %v1165
        %v1180 = vpack.c.b16 %v1168, %v1167
        %v1181 = vpack.c.b16 %v1170, %v1169
        %v1182 = vpack.c.b16 %v1172, %v1171
        %v1183 = vpack.c.b16 %v1174, %v1173
        %v1184 = vpack.c.b16 %v1176, %v1175
        %1193 = vmatprep.subr.bf16.mxu0 0
        %1194 = vmatpush1.bf16.msra.mxu0 %v1177
        %1195 = vmatprep.subr.bf16.mxu0 0
        %1196 = vmatpush1.bf16.msra.mxu0 %v1178
        %1197 = vmatprep.subr.bf16.mxu0 0
        %1198 = vmatpush1.bf16.msra.mxu0 %v1179
        %1199 = vmatprep.subr.bf16.mxu0 0
        %1200 = vmatpush1.bf16.msra.mxu0 %v1180
        %1201 = vmatprep.subr.bf16.mxu0 0
        %1202 = vmatpush1.bf16.msra.mxu0 %v1181
        %1203 = vmatprep.subr.bf16.mxu0 0
        %1204 = vmatpush1.bf16.msra.mxu0 %v1182
        %1205 = vmatprep.subr.bf16.mxu0 0
        %1206 = vmatpush1.bf16.msra.mxu0 %v1183
        %1207 = vmatprep.subr.bf16.mxu0 0
        %1208 = vmatpush1.bf16.msra.mxu0 %v1184
        %1209 = vmatprep.subr.bf16.mxu0 0
        %1210 = vmatpush1.bf16.msra.mxu0 0
        %1211 = vmatprep.subr.bf16.mxu0 0
        %1212 = vmatpush1.bf16.msra.mxu0 0
        %1213 = vmatprep.subr.bf16.mxu0 0
        %1214 = vmatpush1.bf16.msra.mxu0 0
        %1215 = vmatprep.subr.bf16.mxu0 0
        %1216 = vmatpush1.bf16.msra.mxu0 0
        %1217 = vmatprep.subr.bf16.mxu0 0
        %1218 = vmatpush1.bf16.msra.mxu0 0
        %1219 = vmatprep.subr.bf16.mxu0 0
        %1220 = vmatpush1.bf16.msra.mxu0 0
        %1221 = vmatprep.subr.bf16.mxu0 0
        %1222 = vmatpush1.bf16.msra.mxu0 0
        %1223 = vmatprep.subr.bf16.mxu0 0
        %1224 = vmatpush1.bf16.msra.mxu0 0
        %1225 = vmatprep.mubr.bf16.mxu0 0
        %1226 = vmatmul.mubr.bf16.gmra.mrb[0].mxu0 %v1113
        %v1227 = vpop.f32.mrb[0].mxu0
        %v1228 = vadd.f32 0.0, %v1227
        %v1229 = vpop.f32.mrb[0].mxu0
        %v1230 = vpop.f32.mrb[0].mxu0
        %v1231 = vadd.f32 0.0, %v1230
        %v1232 = vpop.f32.mrb[0].mxu0
        %1233 = vmatprep.mubr.bf16.mxu0 0
        %1234 = vmatmul.mubr.bf16.gmra.mrb[0].mxu0 %v1114
        %v1235 = vpop.f32.mrb[0].mxu0
        %v1236 = vadd.f32 0.0, %v1235
        %v1237 = vpop.f32.mrb[0].mxu0
        %v1238 = vpop.f32.mrb[0].mxu0
        %v1239 = vadd.f32 0.0, %v1238
        %v1240 = vpop.f32.mrb[0].mxu0
        %1241 = vmatprep.mubr.bf16.mxu0 0
        %1242 = vmatmul.mubr.bf16.gmra.mrb[0].mxu0 %v1115
        %v1243 = vpop.f32.mrb[0].mxu0
        %v1244 = vadd.f32 0.0, %v1243
        %v1245 = vpop.f32.mrb[0].mxu0
        %v1246 = vpop.f32.mrb[0].mxu0
        %v1247 = vadd.f32 0.0, %v1246
        %v1248 = vpop.f32.mrb[0].mxu0
        %1249 = vmatprep.mubr.bf16.mxu0 0
        %1250 = vmatmul.mubr.bf16.gmra.mrb[0].mxu0 %v1116
        %v1251 = vpop.f32.mrb[0].mxu0
        %v1252 = vadd.f32 0.0, %v1251
        %v1253 = vpop.f32.mrb[0].mxu0
        %v1254 = vpop.f32.mrb[0].mxu0
        %v1255 = vadd.f32 0.0, %v1254
        %v1256 = vpop.f32.mrb[0].mxu0
        %1257 = vmatprep.mubr.bf16.mxu0 0
        %1258 = vmatmul.mubr.bf16.gmra.mrb[0].mxu0 %v1117
        %v1259 = vpop.f32.mrb[0].mxu0
        %v1260 = vadd.f32 0.0, %v1259
        %v1261 = vpop.f32.mrb[0].mxu0
        %v1262 = vpop.f32.mrb[0].mxu0
        %v1263 = vadd.f32 0.0, %v1262
        %v1264 = vpop.f32.mrb[0].mxu0
        %1265 = vmatprep.mubr.bf16.mxu0 0
        %1266 = vmatmul.mubr.bf16.gmra.mrb[0].mxu0 %v1118
        %v1267 = vpop.f32.mrb[0].mxu0
        %v1268 = vadd.f32 0.0, %v1267
        %v1269 = vpop.f32.mrb[0].mxu0
        %v1270 = vpop.f32.mrb[0].mxu0
        %v1271 = vadd.f32 0.0, %v1270
        %v1272 = vpop.f32.mrb[0].mxu0
        %1273 = vmatprep.mubr.bf16.mxu0 0
        %1274 = vmatmul.mubr.bf16.gmra.mrb[0].mxu0 %v1119
        %v1275 = vpop.f32.mrb[0].mxu0
        %v1276 = vadd.f32 0.0, %v1275
        %v1277 = vpop.f32.mrb[0].mxu0
        %v1278 = vpop.f32.mrb[0].mxu0
        %v1279 = vadd.f32 0.0, %v1278
        %v1280 = vpop.f32.mrb[0].mxu0
        %1281 = vmatprep.mubr.bf16.mxu0 0
        %1282 = vmatmul.mubr.bf16.gmra.mrb[0].mxu0 %v1120
        %v1283 = vpop.f32.mrb[0].mxu0
        %v1284 = vadd.f32 0.0, %v1283
        %v1285 = vpop.f32.mrb[0].mxu0
        %v1286 = vpop.f32.mrb[0].mxu0
        %v1287 = vadd.f32 0.0, %v1286
        %v1288 = vpop.f32.mrb[0].mxu0
        %1289 = vmatprep.mubr.bf16.mxu0 0
        %1290 = vmatmul.mubr.bf16.gmra.mrb[0].mxu0 %v1121
        %v1291 = vpop.f32.mrb[0].mxu0
        %v1292 = vadd.f32 0.0, %v1291
        %v1293 = vpop.f32.mrb[0].mxu0
        %v1294 = vpop.f32.mrb[0].mxu0
        %v1295 = vadd.f32 0.0, %v1294
        %v1296 = vpop.f32.mrb[0].mxu0
        %1297 = vmatprep.mubr.bf16.mxu0 0
        %1298 = vmatmul.mubr.bf16.gmra.mrb[0].mxu0 %v1122
        %v1299 = vpop.f32.mrb[0].mxu0
        %v1300 = vadd.f32 0.0, %v1299
        %v1301 = vpop.f32.mrb[0].mxu0
        %v1302 = vpop.f32.mrb[0].mxu0
        %v1303 = vadd.f32 0.0, %v1302
        %v1304 = vpop.f32.mrb[0].mxu0
        %1305 = vmatprep.mubr.bf16.mxu0 0
        %1306 = vmatmul.mubr.bf16.gmra.mrb[0].mxu0 %v1123
        %v1307 = vpop.f32.mrb[0].mxu0
        %v1308 = vadd.f32 0.0, %v1307
        %v1309 = vpop.f32.mrb[0].mxu0
        %v1310 = vpop.f32.mrb[0].mxu0
        %v1311 = vadd.f32 0.0, %v1310
        %v1312 = vpop.f32.mrb[0].mxu0
        %1313 = vmatprep.mubr.bf16.mxu0 0
        %1314 = vmatmul.mubr.bf16.gmra.mrb[0].mxu0 %v1124
        %v1315 = vpop.f32.mrb[0].mxu0
        %v1316 = vadd.f32 0.0, %v1315
        %v1317 = vpop.f32.mrb[0].mxu0
        %v1318 = vpop.f32.mrb[0].mxu0
        %v1319 = vadd.f32 0.0, %v1318
        %v1320 = vpop.f32.mrb[0].mxu0
        %1321 = vmatprep.mubr.bf16.mxu0 0
        %1322 = vmatmul.mubr.bf16.gmra.mrb[0].mxu0 %v1125
        %v1323 = vpop.f32.mrb[0].mxu0
        %v1324 = vadd.f32 0.0, %v1323
        %v1325 = vpop.f32.mrb[0].mxu0
        %v1326 = vpop.f32.mrb[0].mxu0
        %v1327 = vadd.f32 0.0, %v1326
        %v1328 = vpop.f32.mrb[0].mxu0
        %1329 = vmatprep.mubr.bf16.mxu0 0
        %1330 = vmatmul.mubr.bf16.gmra.mrb[0].mxu0 %v1126
        %v1331 = vpop.f32.mrb[0].mxu0
        %v1332 = vadd.f32 0.0, %v1331
        %v1333 = vpop.f32.mrb[0].mxu0
        %v1334 = vpop.f32.mrb[0].mxu0
        %v1335 = vadd.f32 0.0, %v1334
        %v1336 = vpop.f32.mrb[0].mxu0
        %1337 = vmatprep.mubr.bf16.mxu0 0
        %1338 = vmatmul.mubr.bf16.gmra.mrb[0].mxu0 %v1127
        %v1339 = vpop.f32.mrb[0].mxu0
        %v1340 = vadd.f32 0.0, %v1339
        %v1341 = vpop.f32.mrb[0].mxu0
        %v1342 = vpop.f32.mrb[0].mxu0
        %v1343 = vadd.f32 0.0, %v1342
        %v1344 = vpop.f32.mrb[0].mxu0
        %1345 = vmatprep.mubr.bf16.mxu0 0
        %1346 = vmatmul.mubr.bf16.gmra.mrb[0].mxu0 %v1128
        %v1347 = vpop.f32.mrb[0].mxu0
        %v1348 = vadd.f32 0.0, %v1347
        %v1349 = vpop.f32.mrb[0].mxu0
        %v1350 = vpop.f32.mrb[0].mxu0
        %v1351 = vadd.f32 0.0, %v1350
        %v1352 = vpop.f32.mrb[0].mxu0
        %1353 = vdwg.mxu0
        %v1386 = vunpack.c.l.b16 %v496
        %v1387 = vunpack.c.l.b16 %v497
        %v1388 = vunpack.c.l.b16 %v499
        %v1389 = vunpack.c.l.b16 %v500
        %v1390 = vunpack.c.l.b16 %v502
        %v1391 = vunpack.c.l.b16 %v503
        %v1392 = vunpack.c.l.b16 %v505
        %v1393 = vunpack.c.l.b16 %v506
        %v1394 = vunpack.c.l.b16 %v508
        %v1395 = vunpack.c.l.b16 %v509
        %v1396 = vunpack.c.l.b16 %v511
        %v1397 = vunpack.c.l.b16 %v512
        %v1398 = vunpack.c.l.b16 %v514
        %v1399 = vunpack.c.l.b16 %v515
        %v1400 = vunpack.c.l.b16 %v517
        %v1401 = vunpack.c.l.b16 %v518
        %v1402 = vunpack.c.l.b16 %v520
        %v1403 = vunpack.c.l.b16 %v521
        %v1404 = vunpack.c.l.b16 %v523
        %v1405 = vunpack.c.l.b16 %v524
        %v1406 = vunpack.c.l.b16 %v526
        %v1407 = vunpack.c.l.b16 %v527
        %v1408 = vunpack.c.l.b16 %v529
        %v1409 = vunpack.c.l.b16 %v530
        %v1410 = vunpack.c.l.b16 %v532
        %v1411 = vunpack.c.l.b16 %v533
        %v1412 = vunpack.c.l.b16 %v535
        %v1413 = vunpack.c.l.b16 %v536
        %v1414 = vunpack.c.l.b16 %v538
        %v1415 = vunpack.c.l.b16 %v539
        %v1416 = vunpack.c.l.b16 %v541
        %v1417 = vunpack.c.l.b16 %v542
        %v1418 = vpack.c.b16 %v1387, %v1386
        %v1419 = vpack.c.b16 %v1389, %v1388
        %v1420 = vpack.c.b16 %v1391, %v1390
        %v1421 = vpack.c.b16 %v1393, %v1392
        %v1422 = vpack.c.b16 %v1395, %v1394
        %v1423 = vpack.c.b16 %v1397, %v1396
        %v1424 = vpack.c.b16 %v1399, %v1398
        %v1425 = vpack.c.b16 %v1401, %v1400
        %v1426 = vpack.c.b16 %v1403, %v1402
        %v1427 = vpack.c.b16 %v1405, %v1404
        %v1428 = vpack.c.b16 %v1407, %v1406
        %v1429 = vpack.c.b16 %v1409, %v1408
        %v1430 = vpack.c.b16 %v1411, %v1410
        %v1431 = vpack.c.b16 %v1413, %v1412
        %v1432 = vpack.c.b16 %v1415, %v1414
        %v1433 = vpack.c.b16 %v1417, %v1416
        %v1466 = vunpack.c.l.b16 %v550
        %v1467 = vunpack.c.l.b16 %v551
        %v1468 = vunpack.c.l.b16 %v552
        %v1469 = vunpack.c.l.b16 %v553
        %v1470 = vunpack.c.l.b16 %v554
        %v1471 = vunpack.c.l.b16 %v555
        %v1472 = vunpack.c.l.b16 %v556
        %v1473 = vunpack.c.l.b16 %v557
        %v1474 = vunpack.c.l.b16 %v558
        %v1475 = vunpack.c.l.b16 %v559
        %v1476 = vunpack.c.l.b16 %v560
        %v1477 = vunpack.c.l.b16 %v561
        %v1478 = vunpack.c.l.b16 %v562
        %v1479 = vunpack.c.l.b16 %v563
        %v1480 = vunpack.c.l.b16 %v564
        %v1481 = vunpack.c.l.b16 %v565
        %v1482 = vpack.c.b16 %v1467, %v1466
        %v1483 = vpack.c.b16 %v1469, %v1468
        %v1484 = vpack.c.b16 %v1471, %v1470
        %v1485 = vpack.c.b16 %v1473, %v1472
        %v1486 = vpack.c.b16 %v1475, %v1474
        %v1487 = vpack.c.b16 %v1477, %v1476
        %v1488 = vpack.c.b16 %v1479, %v1478
        %v1489 = vpack.c.b16 %v1481, %v1480
        %1498 = vmatprep.subr.bf16.mxu0 0
        %1499 = vmatpush1.bf16.msra.mxu0 %v1482
        %1500 = vmatprep.subr.bf16.mxu0 0
        %1501 = vmatpush1.bf16.msra.mxu0 %v1483
        %1502 = vmatprep.subr.bf16.mxu0 0
        %1503 = vmatpush1.bf16.msra.mxu0 %v1484
        %1504 = vmatprep.subr.bf16.mxu0 0
        %1505 = vmatpush1.bf16.msra.mxu0 %v1485
        %1506 = vmatprep.subr.bf16.mxu0 0
        %1507 = vmatpush1.bf16.msra.mxu0 %v1486
        %1508 = vmatprep.subr.bf16.mxu0 0
        %1509 = vmatpush1.bf16.msra.mxu0 %v1487
        %1510 = vmatprep.subr.bf16.mxu0 0
        %1511 = vmatpush1.bf16.msra.mxu0 %v1488
        %1512 = vmatprep.subr.bf16.mxu0 0
        %1513 = vmatpush1.bf16.msra.mxu0 %v1489
        %1514 = vmatprep.subr.bf16.mxu0 0
        %1515 = vmatpush1.bf16.msra.mxu0 0
        %1516 = vmatprep.subr.bf16.mxu0 0
        %1517 = vmatpush1.bf16.msra.mxu0 0
        %1518 = vmatprep.subr.bf16.mxu0 0
        %1519 = vmatpush1.bf16.msra.mxu0 0
        %1520 = vmatprep.subr.bf16.mxu0 0
        %1521 = vmatpush1.bf16.msra.mxu0 0
        %1522 = vmatprep.subr.bf16.mxu0 0
        %1523 = vmatpush1.bf16.msra.mxu0 0
        %1524 = vmatprep.subr.bf16.mxu0 0
        %1525 = vmatpush1.bf16.msra.mxu0 0
        %1526 = vmatprep.subr.bf16.mxu0 0
        %1527 = vmatpush1.bf16.msra.mxu0 0
        %1528 = vmatprep.subr.bf16.mxu0 0
        %1529 = vmatpush1.bf16.msra.mxu0 0
        %1530 = vmatprep.mubr.bf16.mxu0 0
        %1531 = vmatmul.mubr.bf16.gmra.mrb[0].mxu0 %v1418
        %v1532 = vpop.f32.mrb[0].mxu0
        %v1533 = vadd.f32 %v1228, %v1532
        %v1534 = vpop.f32.mrb[0].mxu0
        %v1535 = vpop.f32.mrb[0].mxu0
        %v1536 = vadd.f32 %v1231, %v1535
        %v1537 = vpop.f32.mrb[0].mxu0
        %1538 = vmatprep.mubr.bf16.mxu0 0
        %1539 = vmatmul.mubr.bf16.gmra.mrb[0].mxu0 %v1419
        %v1540 = vpop.f32.mrb[0].mxu0
        %v1541 = vadd.f32 %v1236, %v1540
        %v1542 = vpop.f32.mrb[0].mxu0
        %v1543 = vpop.f32.mrb[0].mxu0
        %v1544 = vadd.f32 %v1239, %v1543
        %v1545 = vpop.f32.mrb[0].mxu0
        %1546 = vmatprep.mubr.bf16.mxu0 0
        %1547 = vmatmul.mubr.bf16.gmra.mrb[0].mxu0 %v1420
        %v1548 = vpop.f32.mrb[0].mxu0
        %v1549 = vadd.f32 %v1244, %v1548
        %v1550 = vpop.f32.mrb[0].mxu0
        %v1551 = vpop.f32.mrb[0].mxu0
        %v1552 = vadd.f32 %v1247, %v1551
        %v1553 = vpop.f32.mrb[0].mxu0
        %1554 = vmatprep.mubr.bf16.mxu0 0
        %1555 = vmatmul.mubr.bf16.gmra.mrb[0].mxu0 %v1421
        %v1556 = vpop.f32.mrb[0].mxu0
        %v1557 = vadd.f32 %v1252, %v1556
        %v1558 = vpop.f32.mrb[0].mxu0
        %v1559 = vpop.f32.mrb[0].mxu0
        %v1560 = vadd.f32 %v1255, %v1559
        %v1561 = vpop.f32.mrb[0].mxu0
        %1562 = vmatprep.mubr.bf16.mxu0 0
        %1563 = vmatmul.mubr.bf16.gmra.mrb[0].mxu0 %v1422
        %v1564 = vpop.f32.mrb[0].mxu0
        %v1565 = vadd.f32 %v1260, %v1564
        %v1566 = vpop.f32.mrb[0].mxu0
        %v1567 = vpop.f32.mrb[0].mxu0
        %v1568 = vadd.f32 %v1263, %v1567
        %v1569 = vpop.f32.mrb[0].mxu0
        %1570 = vmatprep.mubr.bf16.mxu0 0
        %1571 = vmatmul.mubr.bf16.gmra.mrb[0].mxu0 %v1423
        %v1572 = vpop.f32.mrb[0].mxu0
        %v1573 = vadd.f32 %v1268, %v1572
        %v1574 = vpop.f32.mrb[0].mxu0
        %v1575 = vpop.f32.mrb[0].mxu0
        %v1576 = vadd.f32 %v1271, %v1575
        %v1577 = vpop.f32.mrb[0].mxu0
        %1578 = vmatprep.mubr.bf16.mxu0 0
        %1579 = vmatmul.mubr.bf16.gmra.mrb[0].mxu0 %v1424
        %v1580 = vpop.f32.mrb[0].mxu0
        %v1581 = vadd.f32 %v1276, %v1580
        %v1582 = vpop.f32.mrb[0].mxu0
        %v1583 = vpop.f32.mrb[0].mxu0
        %v1584 = vadd.f32 %v1279, %v1583
        %v1585 = vpop.f32.mrb[0].mxu0
        %1586 = vmatprep.mubr.bf16.mxu0 0
        %1587 = vmatmul.mubr.bf16.gmra.mrb[0].mxu0 %v1425
        %v1588 = vpop.f32.mrb[0].mxu0
        %v1589 = vadd.f32 %v1284, %v1588
        %v1590 = vpop.f32.mrb[0].mxu0
        %v1591 = vpop.f32.mrb[0].mxu0
        %v1592 = vadd.f32 %v1287, %v1591
        %v1593 = vpop.f32.mrb[0].mxu0
        %1594 = vmatprep.mubr.bf16.mxu0 0
        %1595 = vmatmul.mubr.bf16.gmra.mrb[0].mxu0 %v1426
        %v1596 = vpop.f32.mrb[0].mxu0
        %v1597 = vadd.f32 %v1292, %v1596
        %v1598 = vpop.f32.mrb[0].mxu0
        %v1599 = vpop.f32.mrb[0].mxu0
        %v1600 = vadd.f32 %v1295, %v1599
        %v1601 = vpop.f32.mrb[0].mxu0
        %1602 = vmatprep.mubr.bf16.mxu0 0
        %1603 = vmatmul.mubr.bf16.gmra.mrb[0].mxu0 %v1427
        %v1604 = vpop.f32.mrb[0].mxu0
        %v1605 = vadd.f32 %v1300, %v1604
        %v1606 = vpop.f32.mrb[0].mxu0
        %v1607 = vpop.f32.mrb[0].mxu0
        %v1608 = vadd.f32 %v1303, %v1607
        %v1609 = vpop.f32.mrb[0].mxu0
        %1610 = vmatprep.mubr.bf16.mxu0 0
        %1611 = vmatmul.mubr.bf16.gmra.mrb[0].mxu0 %v1428
        %v1612 = vpop.f32.mrb[0].mxu0
        %v1613 = vadd.f32 %v1308, %v1612
        %v1614 = vpop.f32.mrb[0].mxu0
        %v1615 = vpop.f32.mrb[0].mxu0
        %v1616 = vadd.f32 %v1311, %v1615
        %v1617 = vpop.f32.mrb[0].mxu0
        %1618 = vmatprep.mubr.bf16.mxu0 0
        %1619 = vmatmul.mubr.bf16.gmra.mrb[0].mxu0 %v1429
        %v1620 = vpop.f32.mrb[0].mxu0
        %v1621 = vadd.f32 %v1316, %v1620
        %v1622 = vpop.f32.mrb[0].mxu0
        %v1623 = vpop.f32.mrb[0].mxu0
        %v1624 = vadd.f32 %v1319, %v1623
        %v1625 = vpop.f32.mrb[0].mxu0
        %1626 = vmatprep.mubr.bf16.mxu0 0
        %1627 = vmatmul.mubr.bf16.gmra.mrb[0].mxu0 %v1430
        %v1628 = vpop.f32.mrb[0].mxu0
        %v1629 = vadd.f32 %v1324, %v1628
        %v1630 = vpop.f32.mrb[0].mxu0
        %v1631 = vpop.f32.mrb[0].mxu0
        %v1632 = vadd.f32 %v1327, %v1631
        %v1633 = vpop.f32.mrb[0].mxu0
        %1634 = vmatprep.mubr.bf16.mxu0 0
        %1635 = vmatmul.mubr.bf16.gmra.mrb[0].mxu0 %v1431
        %v1636 = vpop.f32.mrb[0].mxu0
        %v1637 = vadd.f32 %v1332, %v1636
        %v1638 = vpop.f32.mrb[0].mxu0
        %v1639 = vpop.f32.mrb[0].mxu0
        %v1640 = vadd.f32 %v1335, %v1639
        %v1641 = vpop.f32.mrb[0].mxu0
        %1642 = vmatprep.mubr.bf16.mxu0 0
        %1643 = vmatmul.mubr.bf16.gmra.mrb[0].mxu0 %v1432
        %v1644 = vpop.f32.mrb[0].mxu0
        %v1645 = vadd.f32 %v1340, %v1644
        %v1646 = vpop.f32.mrb[0].mxu0
        %v1647 = vpop.f32.mrb[0].mxu0
        %v1648 = vadd.f32 %v1343, %v1647
        %v1649 = vpop.f32.mrb[0].mxu0
        %1650 = vmatprep.mubr.bf16.mxu0 0
        %1651 = vmatmul.mubr.bf16.gmra.mrb[0].mxu0 %v1433
        %v1652 = vpop.f32.mrb[0].mxu0
        %v1653 = vadd.f32 %v1348, %v1652
        %v1654 = vpop.f32.mrb[0].mxu0
        %v1655 = vpop.f32.mrb[0].mxu0
        %v1656 = vadd.f32 %v1351, %v1655
        %v1657 = vpop.f32.mrb[0].mxu0
        %1658 = vdwg.mxu0
        %vm1675 = vcmask 1042432
        %vm1676 = vcmask 1046532
        %vm1677 = vmor %vm1675, %vm1676
        %v1678 = vrot.slane %v496, 5
        %v1679 = vrot.slane %v1678, 4
        %v1680 = vrot.slane %v497, 5
        %v1681 = vsel %vm1677, %v1679, %v1680
        %v1682 = vrot.slane %v1680, 4
        %v1683 = vrot.slane %v498, 5
        %v1684 = vsel %vm1677, %v1682, %v1683
        %v1685 = vrot.slane %v499, 5
        %v1686 = vrot.slane %v1685, 4
        %v1687 = vrot.slane %v500, 5
        %v1688 = vsel %vm1677, %v1686, %v1687
        %v1689 = vrot.slane %v1687, 4
        %v1690 = vrot.slane %v501, 5
        %v1691 = vsel %vm1677, %v1689, %v1690
        %v1692 = vrot.slane %v502, 5
        %v1693 = vrot.slane %v1692, 4
        %v1694 = vrot.slane %v503, 5
        %v1695 = vsel %vm1677, %v1693, %v1694
        %v1696 = vrot.slane %v1694, 4
        %v1697 = vrot.slane %v504, 5
        %v1698 = vsel %vm1677, %v1696, %v1697
        %v1699 = vrot.slane %v505, 5
        %v1700 = vrot.slane %v1699, 4
        %v1701 = vrot.slane %v506, 5
        %v1702 = vsel %vm1677, %v1700, %v1701
        %v1703 = vrot.slane %v1701, 4
        %v1704 = vrot.slane %v507, 5
        %v1705 = vsel %vm1677, %v1703, %v1704
        %v1706 = vrot.slane %v508, 5
        %v1707 = vrot.slane %v1706, 4
        %v1708 = vrot.slane %v509, 5
        %v1709 = vsel %vm1677, %v1707, %v1708
        %v1710 = vrot.slane %v1708, 4
        %v1711 = vrot.slane %v510, 5
        %v1712 = vsel %vm1677, %v1710, %v1711
        %v1713 = vrot.slane %v511, 5
        %v1714 = vrot.slane %v1713, 4
        %v1715 = vrot.slane %v512, 5
        %v1716 = vsel %vm1677, %v1714, %v1715
        %v1717 = vrot.slane %v1715, 4
        %v1718 = vrot.slane %v513, 5
        %v1719 = vsel %vm1677, %v1717, %v1718
        %v1720 = vrot.slane %v514, 5
        %v1721 = vrot.slane %v1720, 4
        %v1722 = vrot.slane %v515, 5
        %v1723 = vsel %vm1677, %v1721, %v1722
        %v1724 = vrot.slane %v1722, 4
        %v1725 = vrot.slane %v516, 5
        %v1726 = vsel %vm1677, %v1724, %v1725
        %v1727 = vrot.slane %v517, 5
        %v1728 = vrot.slane %v1727, 4
        %v1729 = vrot.slane %v518, 5
        %v1730 = vsel %vm1677, %v1728, %v1729
        %v1731 = vrot.slane %v1729, 4
        %v1732 = vrot.slane %v519, 5
        %v1733 = vsel %vm1677, %v1731, %v1732
        %v1734 = vrot.slane %v520, 5
        %v1735 = vrot.slane %v1734, 4
        %v1736 = vrot.slane %v521, 5
        %v1737 = vsel %vm1677, %v1735, %v1736
        %v1738 = vrot.slane %v1736, 4
        %v1739 = vrot.slane %v522, 5
        %v1740 = vsel %vm1677, %v1738, %v1739
        %v1741 = vrot.slane %v523, 5
        %v1742 = vrot.slane %v1741, 4
        %v1743 = vrot.slane %v524, 5
        %v1744 = vsel %vm1677, %v1742, %v1743
        %v1745 = vrot.slane %v1743, 4
        %v1746 = vrot.slane %v525, 5
        %v1747 = vsel %vm1677, %v1745, %v1746
        %v1748 = vrot.slane %v526, 5
        %v1749 = vrot.slane %v1748, 4
        %v1750 = vrot.slane %v527, 5
        %v1751 = vsel %vm1677, %v1749, %v1750
        %v1752 = vrot.slane %v1750, 4
        %v1753 = vrot.slane %v528, 5
        %v1754 = vsel %vm1677, %v1752, %v1753
        %v1755 = vrot.slane %v529, 5
        %v1756 = vrot.slane %v1755, 4
        %v1757 = vrot.slane %v530, 5
        %v1758 = vsel %vm1677, %v1756, %v1757
        %v1759 = vrot.slane %v1757, 4
        %v1760 = vrot.slane %v531, 5
        %v1761 = vsel %vm1677, %v1759, %v1760
        %v1762 = vrot.slane %v532, 5
        %v1763 = vrot.slane %v1762, 4
        %v1764 = vrot.slane %v533, 5
        %v1765 = vsel %vm1677, %v1763, %v1764
        %v1766 = vrot.slane %v1764, 4
        %v1767 = vrot.slane %v534, 5
        %v1768 = vsel %vm1677, %v1766, %v1767
        %v1769 = vrot.slane %v535, 5
        %v1770 = vrot.slane %v1769, 4
        %v1771 = vrot.slane %v536, 5
        %v1772 = vsel %vm1677, %v1770, %v1771
        %v1773 = vrot.slane %v1771, 4
        %v1774 = vrot.slane %v537, 5
        %v1775 = vsel %vm1677, %v1773, %v1774
        %v1776 = vrot.slane %v538, 5
        %v1777 = vrot.slane %v1776, 4
        %v1778 = vrot.slane %v539, 5
        %v1779 = vsel %vm1677, %v1777, %v1778
        %v1780 = vrot.slane %v1778, 4
        %v1781 = vrot.slane %v540, 5
        %v1782 = vsel %vm1677, %v1780, %v1781
        %v1783 = vrot.slane %v541, 5
        %v1784 = vrot.slane %v1783, 4
        %v1785 = vrot.slane %v542, 5
        %v1786 = vsel %vm1677, %v1784, %v1785
        %v1787 = vrot.slane %v1785, 4
        %v1788 = vrot.slane %v543, 5
        %v1789 = vsel %vm1677, %v1787, %v1788
        %v1790 = vunpack.c.l.b16 %v1681
        %v1791 = vunpack.c.l.b16 %v1684
        %v1792 = vunpack.c.l.b16 %v1688
        %v1793 = vunpack.c.l.b16 %v1691
        %v1794 = vunpack.c.l.b16 %v1695
        %v1795 = vunpack.c.l.b16 %v1698
        %v1796 = vunpack.c.l.b16 %v1702
        %v1797 = vunpack.c.l.b16 %v1705
        %v1798 = vunpack.c.l.b16 %v1709
        %v1799 = vunpack.c.l.b16 %v1712
        %v1800 = vunpack.c.l.b16 %v1716
        %v1801 = vunpack.c.l.b16 %v1719
        %v1802 = vunpack.c.l.b16 %v1723
        %v1803 = vunpack.c.l.b16 %v1726
        %v1804 = vunpack.c.l.b16 %v1730
        %v1805 = vunpack.c.l.b16 %v1733
        %v1806 = vunpack.c.l.b16 %v1737
        %v1807 = vunpack.c.l.b16 %v1740
        %v1808 = vunpack.c.l.b16 %v1744
        %v1809 = vunpack.c.l.b16 %v1747
        %v1810 = vunpack.c.l.b16 %v1751
        %v1811 = vunpack.c.l.b16 %v1754
        %v1812 = vunpack.c.l.b16 %v1758
        %v1813 = vunpack.c.l.b16 %v1761
        %v1814 = vunpack.c.l.b16 %v1765
        %v1815 = vunpack.c.l.b16 %v1768
        %v1816 = vunpack.c.l.b16 %v1772
        %v1817 = vunpack.c.l.b16 %v1775
        %v1818 = vunpack.c.l.b16 %v1779
        %v1819 = vunpack.c.l.b16 %v1782
        %v1820 = vunpack.c.l.b16 %v1786
        %v1821 = vunpack.c.l.b16 %v1789
        %v1822 = vpack.c.b16 %v1791, %v1790
        %v1823 = vpack.c.b16 %v1793, %v1792
        %v1824 = vpack.c.b16 %v1795, %v1794
        %v1825 = vpack.c.b16 %v1797, %v1796
        %v1826 = vpack.c.b16 %v1799, %v1798
        %v1827 = vpack.c.b16 %v1801, %v1800
        %v1828 = vpack.c.b16 %v1803, %v1802
        %v1829 = vpack.c.b16 %v1805, %v1804
        %v1830 = vpack.c.b16 %v1807, %v1806
        %v1831 = vpack.c.b16 %v1809, %v1808
        %v1832 = vpack.c.b16 %v1811, %v1810
        %v1833 = vpack.c.b16 %v1813, %v1812
        %v1834 = vpack.c.b16 %v1815, %v1814
        %v1835 = vpack.c.b16 %v1817, %v1816
        %v1836 = vpack.c.b16 %v1819, %v1818
        %v1837 = vpack.c.b16 %v1821, %v1820
        %v1870 = vunpack.c.l.b16 %v582
        %v1871 = vunpack.c.l.b16 %v583
        %v1872 = vunpack.c.l.b16 %v584
        %v1873 = vunpack.c.l.b16 %v585
        %v1874 = vunpack.c.l.b16 %v586
        %v1875 = vunpack.c.l.b16 %v587
        %v1876 = vunpack.c.l.b16 %v588
        %v1877 = vunpack.c.l.b16 %v589
        %v1878 = vunpack.c.l.b16 %v590
        %v1879 = vunpack.c.l.b16 %v591
        %v1880 = vunpack.c.l.b16 %v592
        %v1881 = vunpack.c.l.b16 %v593
        %v1882 = vunpack.c.l.b16 %v594
        %v1883 = vunpack.c.l.b16 %v595
        %v1884 = vunpack.c.l.b16 %v596
        %v1885 = vunpack.c.l.b16 %v597
        %v1886 = vpack.c.b16 %v1871, %v1870
        %v1887 = vpack.c.b16 %v1873, %v1872
        %v1888 = vpack.c.b16 %v1875, %v1874
        %v1889 = vpack.c.b16 %v1877, %v1876
        %v1890 = vpack.c.b16 %v1879, %v1878
        %v1891 = vpack.c.b16 %v1881, %v1880
        %v1892 = vpack.c.b16 %v1883, %v1882
        %v1893 = vpack.c.b16 %v1885, %v1884
        %1902 = vmatprep.subr.bf16.mxu0 0
        %1903 = vmatpush1.bf16.msra.mxu0 %v1886
        %1904 = vmatprep.subr.bf16.mxu0 0
        %1905 = vmatpush1.bf16.msra.mxu0 %v1887
        %1906 = vmatprep.subr.bf16.mxu0 0
        %1907 = vmatpush1.bf16.msra.mxu0 %v1888
        %1908 = vmatprep.subr.bf16.mxu0 0
        %1909 = vmatpush1.bf16.msra.mxu0 %v1889
        %1910 = vmatprep.subr.bf16.mxu0 0
        %1911 = vmatpush1.bf16.msra.mxu0 %v1890
        %1912 = vmatprep.subr.bf16.mxu0 0
        %1913 = vmatpush1.bf16.msra.mxu0 %v1891
        %1914 = vmatprep.subr.bf16.mxu0 0
        %1915 = vmatpush1.bf16.msra.mxu0 %v1892
        %1916 = vmatprep.subr.bf16.mxu0 0
        %1917 = vmatpush1.bf16.msra.mxu0 %v1893
        %1918 = vmatprep.subr.bf16.mxu0 0
        %1919 = vmatpush1.bf16.msra.mxu0 0
        %1920 = vmatprep.subr.bf16.mxu0 0
        %1921 = vmatpush1.bf16.msra.mxu0 0
        %1922 = vmatprep.subr.bf16.mxu0 0
        %1923 = vmatpush1.bf16.msra.mxu0 0
        %1924 = vmatprep.subr.bf16.mxu0 0
        %1925 = vmatpush1.bf16.msra.mxu0 0
        %1926 = vmatprep.subr.bf16.mxu0 0
        %1927 = vmatpush1.bf16.msra.mxu0 0
        %1928 = vmatprep.subr.bf16.mxu0 0
        %1929 = vmatpush1.bf16.msra.mxu0 0
        %1930 = vmatprep.subr.bf16.mxu0 0
        %1931 = vmatpush1.bf16.msra.mxu0 0
        %1932 = vmatprep.subr.bf16.mxu0 0
        %1933 = vmatpush1.bf16.msra.mxu0 0
        %1934 = vmatprep.mubr.bf16.mxu0 0
        %1935 = vmatmul.mubr.bf16.gmra.mrb[0].mxu0 %v1822
        %v1936 = vpop.f32.mrb[0].mxu0
        %v1937 = vadd.f32 0.0, %v1936
        %v1938 = vpop.f32.mrb[0].mxu0
        %v1939 = vpop.f32.mrb[0].mxu0
        %v1940 = vadd.f32 0.0, %v1939
        %v1941 = vpop.f32.mrb[0].mxu0
        %1942 = vmatprep.mubr.bf16.mxu0 0
        %1943 = vmatmul.mubr.bf16.gmra.mrb[0].mxu0 %v1823
        %v1944 = vpop.f32.mrb[0].mxu0
        %v1945 = vadd.f32 0.0, %v1944
        %v1946 = vpop.f32.mrb[0].mxu0
        %v1947 = vpop.f32.mrb[0].mxu0
        %v1948 = vadd.f32 0.0, %v1947
        %v1949 = vpop.f32.mrb[0].mxu0
        %1950 = vmatprep.mubr.bf16.mxu0 0
        %1951 = vmatmul.mubr.bf16.gmra.mrb[0].mxu0 %v1824
        %v1952 = vpop.f32.mrb[0].mxu0
        %v1953 = vadd.f32 0.0, %v1952
        %v1954 = vpop.f32.mrb[0].mxu0
        %v1955 = vpop.f32.mrb[0].mxu0
        %v1956 = vadd.f32 0.0, %v1955
        %v1957 = vpop.f32.mrb[0].mxu0
        %1958 = vmatprep.mubr.bf16.mxu0 0
        %1959 = vmatmul.mubr.bf16.gmra.mrb[0].mxu0 %v1825
        %v1960 = vpop.f32.mrb[0].mxu0
        %v1961 = vadd.f32 0.0, %v1960
        %v1962 = vpop.f32.mrb[0].mxu0
        %v1963 = vpop.f32.mrb[0].mxu0
        %v1964 = vadd.f32 0.0, %v1963
        %v1965 = vpop.f32.mrb[0].mxu0
        %1966 = vmatprep.mubr.bf16.mxu0 0
        %1967 = vmatmul.mubr.bf16.gmra.mrb[0].mxu0 %v1826
        %v1968 = vpop.f32.mrb[0].mxu0
        %v1969 = vadd.f32 0.0, %v1968
        %v1970 = vpop.f32.mrb[0].mxu0
        %v1971 = vpop.f32.mrb[0].mxu0
        %v1972 = vadd.f32 0.0, %v1971
        %v1973 = vpop.f32.mrb[0].mxu0
        %1974 = vmatprep.mubr.bf16.mxu0 0
        %1975 = vmatmul.mubr.bf16.gmra.mrb[0].mxu0 %v1827
        %v1976 = vpop.f32.mrb[0].mxu0
        %v1977 = vadd.f32 0.0, %v1976
        %v1978 = vpop.f32.mrb[0].mxu0
        %v1979 = vpop.f32.mrb[0].mxu0
        %v1980 = vadd.f32 0.0, %v1979
        %v1981 = vpop.f32.mrb[0].mxu0
        %1982 = vmatprep.mubr.bf16.mxu0 0
        %1983 = vmatmul.mubr.bf16.gmra.mrb[0].mxu0 %v1828
        %v1984 = vpop.f32.mrb[0].mxu0
        %v1985 = vadd.f32 0.0, %v1984
        %v1986 = vpop.f32.mrb[0].mxu0
        %v1987 = vpop.f32.mrb[0].mxu0
        %v1988 = vadd.f32 0.0, %v1987
        %v1989 = vpop.f32.mrb[0].mxu0
        %1990 = vmatprep.mubr.bf16.mxu0 0
        %1991 = vmatmul.mubr.bf16.gmra.mrb[0].mxu0 %v1829
        %v1992 = vpop.f32.mrb[0].mxu0
        %v1993 = vadd.f32 0.0, %v1992
        %v1994 = vpop.f32.mrb[0].mxu0
        %v1995 = vpop.f32.mrb[0].mxu0
        %v1996 = vadd.f32 0.0, %v1995
        %v1997 = vpop.f32.mrb[0].mxu0
        %1998 = vmatprep.mubr.bf16.mxu0 0
        %1999 = vmatmul.mubr.bf16.gmra.mrb[0].mxu0 %v1830
        %v2000 = vpop.f32.mrb[0].mxu0
        %v2001 = vadd.f32 0.0, %v2000
        %v2002 = vpop.f32.mrb[0].mxu0
        %v2003 = vpop.f32.mrb[0].mxu0
        %v2004 = vadd.f32 0.0, %v2003
        %v2005 = vpop.f32.mrb[0].mxu0
        %2006 = vmatprep.mubr.bf16.mxu0 0
        %2007 = vmatmul.mubr.bf16.gmra.mrb[0].mxu0 %v1831
        %v2008 = vpop.f32.mrb[0].mxu0
        %v2009 = vadd.f32 0.0, %v2008
        %v2010 = vpop.f32.mrb[0].mxu0
        %v2011 = vpop.f32.mrb[0].mxu0
        %v2012 = vadd.f32 0.0, %v2011
        %v2013 = vpop.f32.mrb[0].mxu0
        %2014 = vmatprep.mubr.bf16.mxu0 0
        %2015 = vmatmul.mubr.bf16.gmra.mrb[0].mxu0 %v1832
        %v2016 = vpop.f32.mrb[0].mxu0
        %v2017 = vadd.f32 0.0, %v2016
        %v2018 = vpop.f32.mrb[0].mxu0
        %v2019 = vpop.f32.mrb[0].mxu0
        %v2020 = vadd.f32 0.0, %v2019
        %v2021 = vpop.f32.mrb[0].mxu0
        %2022 = vmatprep.mubr.bf16.mxu0 0
        %2023 = vmatmul.mubr.bf16.gmra.mrb[0].mxu0 %v1833
        %v2024 = vpop.f32.mrb[0].mxu0
        %v2025 = vadd.f32 0.0, %v2024
        %v2026 = vpop.f32.mrb[0].mxu0
        %v2027 = vpop.f32.mrb[0].mxu0
        %v2028 = vadd.f32 0.0, %v2027
        %v2029 = vpop.f32.mrb[0].mxu0
        %2030 = vmatprep.mubr.bf16.mxu0 0
        %2031 = vmatmul.mubr.bf16.gmra.mrb[0].mxu0 %v1834
        %v2032 = vpop.f32.mrb[0].mxu0
        %v2033 = vadd.f32 0.0, %v2032
        %v2034 = vpop.f32.mrb[0].mxu0
        %v2035 = vpop.f32.mrb[0].mxu0
        %v2036 = vadd.f32 0.0, %v2035
        %v2037 = vpop.f32.mrb[0].mxu0
        %2038 = vmatprep.mubr.bf16.mxu0 0
        %2039 = vmatmul.mubr.bf16.gmra.mrb[0].mxu0 %v1835
        %v2040 = vpop.f32.mrb[0].mxu0
        %v2041 = vadd.f32 0.0, %v2040
        %v2042 = vpop.f32.mrb[0].mxu0
        %v2043 = vpop.f32.mrb[0].mxu0
        %v2044 = vadd.f32 0.0, %v2043
        %v2045 = vpop.f32.mrb[0].mxu0
        %2046 = vmatprep.mubr.bf16.mxu0 0
        %2047 = vmatmul.mubr.bf16.gmra.mrb[0].mxu0 %v1836
        %v2048 = vpop.f32.mrb[0].mxu0
        %v2049 = vadd.f32 0.0, %v2048
        %v2050 = vpop.f32.mrb[0].mxu0
        %v2051 = vpop.f32.mrb[0].mxu0
        %v2052 = vadd.f32 0.0, %v2051
        %v2053 = vpop.f32.mrb[0].mxu0
        %2054 = vmatprep.mubr.bf16.mxu0 0
        %2055 = vmatmul.mubr.bf16.gmra.mrb[0].mxu0 %v1837
        %v2056 = vpop.f32.mrb[0].mxu0
        %v2057 = vadd.f32 0.0, %v2056
        %v2058 = vpop.f32.mrb[0].mxu0
        %v2059 = vpop.f32.mrb[0].mxu0
        %v2060 = vadd.f32 0.0, %v2059
        %v2061 = vpop.f32.mrb[0].mxu0
        %2062 = vdwg.mxu0
        %v2063 = vadd.f32 %v1533, %v1937
        %v2064 = vadd.f32 %v1536, %v1940
        %v2065 = vadd.f32 %v1541, %v1945
        %v2066 = vadd.f32 %v1544, %v1948
        %v2067 = vadd.f32 %v1549, %v1953
        %v2068 = vadd.f32 %v1552, %v1956
        %v2069 = vadd.f32 %v1557, %v1961
        %v2070 = vadd.f32 %v1560, %v1964
        %v2071 = vadd.f32 %v1565, %v1969
        %v2072 = vadd.f32 %v1568, %v1972
        %v2073 = vadd.f32 %v1573, %v1977
        %v2074 = vadd.f32 %v1576, %v1980
        %v2075 = vadd.f32 %v1581, %v1985
        %v2076 = vadd.f32 %v1584, %v1988
        %v2077 = vadd.f32 %v1589, %v1993
        %v2078 = vadd.f32 %v1592, %v1996
        %v2079 = vadd.f32 %v1597, %v2001
        %v2080 = vadd.f32 %v1600, %v2004
        %v2081 = vadd.f32 %v1605, %v2009
        %v2082 = vadd.f32 %v1608, %v2012
        %v2083 = vadd.f32 %v1613, %v2017
        %v2084 = vadd.f32 %v1616, %v2020
        %v2085 = vadd.f32 %v1621, %v2025
        %v2086 = vadd.f32 %v1624, %v2028
        %v2087 = vadd.f32 %v1629, %v2033
        %v2088 = vadd.f32 %v1632, %v2036
        %v2089 = vadd.f32 %v1637, %v2041
        %v2090 = vadd.f32 %v1640, %v2044
        %v2091 = vadd.f32 %v1645, %v2049
        %v2092 = vadd.f32 %v1648, %v2052
        %v2093 = vadd.f32 %v1653, %v2057
        %v2094 = vadd.f32 %v1656, %v2060
        %v2097 = vunpack.c.l.b16 %v544
        %v2098 = vunpack.c.l.b16 %v545
        %v2099 = vpack.c.b16 %v2098, %v2097
        %v2117 = vunpack.c.l.b16 %v598
        %v2118 = vunpack.c.l.b16 %v599
        %v2119 = vunpack.c.l.b16 %v600
        %v2120 = vunpack.c.l.b16 %v601
        %v2121 = vunpack.c.l.b16 %v602
        %v2122 = vunpack.c.l.b16 %v603
        %v2123 = vunpack.c.l.b16 %v604
        %v2124 = vunpack.c.l.b16 %v605
        %v2125 = vunpack.c.l.b16 %v606
        %v2126 = vunpack.c.l.b16 %v607
        %v2127 = vunpack.c.l.b16 %v608
        %v2128 = vunpack.c.l.b16 %v609
        %v2129 = vunpack.c.l.b16 %v610
        %v2130 = vunpack.c.l.b16 %v611
        %v2131 = vunpack.c.l.b16 %v612
        %v2132 = vunpack.c.l.b16 %v613
        %v2133 = vpack.c.b16 %v2118, %v2117
        %v2134 = vpack.c.b16 %v2120, %v2119
        %v2135 = vpack.c.b16 %v2122, %v2121
        %v2136 = vpack.c.b16 %v2124, %v2123
        %v2137 = vpack.c.b16 %v2126, %v2125
        %v2138 = vpack.c.b16 %v2128, %v2127
        %v2139 = vpack.c.b16 %v2130, %v2129
        %v2140 = vpack.c.b16 %v2132, %v2131
        %2149 = vmatprep.subr.bf16.mxu0 0
        %2150 = vmatpush1.bf16.msra.mxu0 %v2133
        %2151 = vmatprep.subr.bf16.mxu0 0
        %2152 = vmatpush1.bf16.msra.mxu0 %v2134
        %2153 = vmatprep.subr.bf16.mxu0 0
        %2154 = vmatpush1.bf16.msra.mxu0 %v2135
        %2155 = vmatprep.subr.bf16.mxu0 0
        %2156 = vmatpush1.bf16.msra.mxu0 %v2136
        %2157 = vmatprep.subr.bf16.mxu0 0
        %2158 = vmatpush1.bf16.msra.mxu0 %v2137
        %2159 = vmatprep.subr.bf16.mxu0 0
        %2160 = vmatpush1.bf16.msra.mxu0 %v2138
        %2161 = vmatprep.subr.bf16.mxu0 0
        %2162 = vmatpush1.bf16.msra.mxu0 %v2139
        %2163 = vmatprep.subr.bf16.mxu0 0
        %2164 = vmatpush1.bf16.msra.mxu0 %v2140
        %2165 = vmatprep.subr.bf16.mxu0 0
        %2166 = vmatpush1.bf16.msra.mxu0 0
        %2167 = vmatprep.subr.bf16.mxu0 0
        %2168 = vmatpush1.bf16.msra.mxu0 0
        %2169 = vmatprep.subr.bf16.mxu0 0
        %2170 = vmatpush1.bf16.msra.mxu0 0
        %2171 = vmatprep.subr.bf16.mxu0 0
        %2172 = vmatpush1.bf16.msra.mxu0 0
        %2173 = vmatprep.subr.bf16.mxu0 0
        %2174 = vmatpush1.bf16.msra.mxu0 0
        %2175 = vmatprep.subr.bf16.mxu0 0
        %2176 = vmatpush1.bf16.msra.mxu0 0
        %2177 = vmatprep.subr.bf16.mxu0 0
        %2178 = vmatpush1.bf16.msra.mxu0 0
        %2179 = vmatprep.subr.bf16.mxu0 0
        %2180 = vmatpush1.bf16.msra.mxu0 0
        %2181 = vmatprep.mubr.bf16.mxu0 0
        %2182 = vmatmul.mubr.bf16.gmra.mrb[0].mxu0 %v1419
        %v2183 = vpop.f32.mrb[0].mxu0
        %v2184 = vadd.f32 0.0, %v2183
        %v2185 = vpop.f32.mrb[0].mxu0
        %v2186 = vpop.f32.mrb[0].mxu0
        %v2187 = vadd.f32 0.0, %v2186
        %v2188 = vpop.f32.mrb[0].mxu0
        %2189 = vmatprep.mubr.bf16.mxu0 0
        %2190 = vmatmul.mubr.bf16.gmra.mrb[0].mxu0 %v1420
        %v2191 = vpop.f32.mrb[0].mxu0
        %v2192 = vadd.f32 0.0, %v2191
        %v2193 = vpop.f32.mrb[0].mxu0
        %v2194 = vpop.f32.mrb[0].mxu0
        %v2195 = vadd.f32 0.0, %v2194
        %v2196 = vpop.f32.mrb[0].mxu0
        %2197 = vmatprep.mubr.bf16.mxu0 0
        %2198 = vmatmul.mubr.bf16.gmra.mrb[0].mxu0 %v1421
        %v2199 = vpop.f32.mrb[0].mxu0
        %v2200 = vadd.f32 0.0, %v2199
        %v2201 = vpop.f32.mrb[0].mxu0
        %v2202 = vpop.f32.mrb[0].mxu0
        %v2203 = vadd.f32 0.0, %v2202
        %v2204 = vpop.f32.mrb[0].mxu0
        %2205 = vmatprep.mubr.bf16.mxu0 0
        %2206 = vmatmul.mubr.bf16.gmra.mrb[0].mxu0 %v1422
        %v2207 = vpop.f32.mrb[0].mxu0
        %v2208 = vadd.f32 0.0, %v2207
        %v2209 = vpop.f32.mrb[0].mxu0
        %v2210 = vpop.f32.mrb[0].mxu0
        %v2211 = vadd.f32 0.0, %v2210
        %v2212 = vpop.f32.mrb[0].mxu0
        %2213 = vmatprep.mubr.bf16.mxu0 0
        %2214 = vmatmul.mubr.bf16.gmra.mrb[0].mxu0 %v1423
        %v2215 = vpop.f32.mrb[0].mxu0
        %v2216 = vadd.f32 0.0, %v2215
        %v2217 = vpop.f32.mrb[0].mxu0
        %v2218 = vpop.f32.mrb[0].mxu0
        %v2219 = vadd.f32 0.0, %v2218
        %v2220 = vpop.f32.mrb[0].mxu0
        %2221 = vmatprep.mubr.bf16.mxu0 0
        %2222 = vmatmul.mubr.bf16.gmra.mrb[0].mxu0 %v1424
        %v2223 = vpop.f32.mrb[0].mxu0
        %v2224 = vadd.f32 0.0, %v2223
        %v2225 = vpop.f32.mrb[0].mxu0
        %v2226 = vpop.f32.mrb[0].mxu0
        %v2227 = vadd.f32 0.0, %v2226
        %v2228 = vpop.f32.mrb[0].mxu0
        %2229 = vmatprep.mubr.bf16.mxu0 0
        %2230 = vmatmul.mubr.bf16.gmra.mrb[0].mxu0 %v1425
        %v2231 = vpop.f32.mrb[0].mxu0
        %v2232 = vadd.f32 0.0, %v2231
        %v2233 = vpop.f32.mrb[0].mxu0
        %v2234 = vpop.f32.mrb[0].mxu0
        %v2235 = vadd.f32 0.0, %v2234
        %v2236 = vpop.f32.mrb[0].mxu0
        %2237 = vmatprep.mubr.bf16.mxu0 0
        %2238 = vmatmul.mubr.bf16.gmra.mrb[0].mxu0 %v1426
        %v2239 = vpop.f32.mrb[0].mxu0
        %v2240 = vadd.f32 0.0, %v2239
        %v2241 = vpop.f32.mrb[0].mxu0
        %v2242 = vpop.f32.mrb[0].mxu0
        %v2243 = vadd.f32 0.0, %v2242
        %v2244 = vpop.f32.mrb[0].mxu0
        %2245 = vmatprep.mubr.bf16.mxu0 0
        %2246 = vmatmul.mubr.bf16.gmra.mrb[0].mxu0 %v1427
        %v2247 = vpop.f32.mrb[0].mxu0
        %v2248 = vadd.f32 0.0, %v2247
        %v2249 = vpop.f32.mrb[0].mxu0
        %v2250 = vpop.f32.mrb[0].mxu0
        %v2251 = vadd.f32 0.0, %v2250
        %v2252 = vpop.f32.mrb[0].mxu0
        %2253 = vmatprep.mubr.bf16.mxu0 0
        %2254 = vmatmul.mubr.bf16.gmra.mrb[0].mxu0 %v1428
        %v2255 = vpop.f32.mrb[0].mxu0
        %v2256 = vadd.f32 0.0, %v2255
        %v2257 = vpop.f32.mrb[0].mxu0
        %v2258 = vpop.f32.mrb[0].mxu0
        %v2259 = vadd.f32 0.0, %v2258
        %v2260 = vpop.f32.mrb[0].mxu0
        %2261 = vmatprep.mubr.bf16.mxu0 0
        %2262 = vmatmul.mubr.bf16.gmra.mrb[0].mxu0 %v1429
        %v2263 = vpop.f32.mrb[0].mxu0
        %v2264 = vadd.f32 0.0, %v2263
        %v2265 = vpop.f32.mrb[0].mxu0
        %v2266 = vpop.f32.mrb[0].mxu0
        %v2267 = vadd.f32 0.0, %v2266
        %v2268 = vpop.f32.mrb[0].mxu0
        %2269 = vmatprep.mubr.bf16.mxu0 0
        %2270 = vmatmul.mubr.bf16.gmra.mrb[0].mxu0 %v1430
        %v2271 = vpop.f32.mrb[0].mxu0
        %v2272 = vadd.f32 0.0, %v2271
        %v2273 = vpop.f32.mrb[0].mxu0
        %v2274 = vpop.f32.mrb[0].mxu0
        %v2275 = vadd.f32 0.0, %v2274
        %v2276 = vpop.f32.mrb[0].mxu0
        %2277 = vmatprep.mubr.bf16.mxu0 0
        %2278 = vmatmul.mubr.bf16.gmra.mrb[0].mxu0 %v1431
        %v2279 = vpop.f32.mrb[0].mxu0
        %v2280 = vadd.f32 0.0, %v2279
        %v2281 = vpop.f32.mrb[0].mxu0
        %v2282 = vpop.f32.mrb[0].mxu0
        %v2283 = vadd.f32 0.0, %v2282
        %v2284 = vpop.f32.mrb[0].mxu0
        %2285 = vmatprep.mubr.bf16.mxu0 0
        %2286 = vmatmul.mubr.bf16.gmra.mrb[0].mxu0 %v1432
        %v2287 = vpop.f32.mrb[0].mxu0
        %v2288 = vadd.f32 0.0, %v2287
        %v2289 = vpop.f32.mrb[0].mxu0
        %v2290 = vpop.f32.mrb[0].mxu0
        %v2291 = vadd.f32 0.0, %v2290
        %v2292 = vpop.f32.mrb[0].mxu0
        %2293 = vmatprep.mubr.bf16.mxu0 0
        %2294 = vmatmul.mubr.bf16.gmra.mrb[0].mxu0 %v1433
        %v2295 = vpop.f32.mrb[0].mxu0
        %v2296 = vadd.f32 0.0, %v2295
        %v2297 = vpop.f32.mrb[0].mxu0
        %v2298 = vpop.f32.mrb[0].mxu0
        %v2299 = vadd.f32 0.0, %v2298
        %v2300 = vpop.f32.mrb[0].mxu0
        %2301 = vmatprep.mubr.bf16.mxu0 0
        %2302 = vmatmul.mubr.bf16.gmra.mrb[0].mxu0 %v2099
        %v2303 = vpop.f32.mrb[0].mxu0
        %v2304 = vadd.f32 0.0, %v2303
        %v2305 = vpop.f32.mrb[0].mxu0
        %v2306 = vpop.f32.mrb[0].mxu0
        %v2307 = vadd.f32 0.0, %v2306
        %v2308 = vpop.f32.mrb[0].mxu0
        %2309 = vdwg.mxu0
        %v2310 = vadd.f32 %v2063, %v2184
        %v2311 = vadd.f32 %v2064, %v2187
        %v2312 = vadd.f32 %v2065, %v2192
        %v2313 = vadd.f32 %v2066, %v2195
        %v2314 = vadd.f32 %v2067, %v2200
        %v2315 = vadd.f32 %v2068, %v2203
        %v2316 = vadd.f32 %v2069, %v2208
        %v2317 = vadd.f32 %v2070, %v2211
        %v2318 = vadd.f32 %v2071, %v2216
        %v2319 = vadd.f32 %v2072, %v2219
        %v2320 = vadd.f32 %v2073, %v2224
        %v2321 = vadd.f32 %v2074, %v2227
        %v2322 = vadd.f32 %v2075, %v2232
        %v2323 = vadd.f32 %v2076, %v2235
        %v2324 = vadd.f32 %v2077, %v2240
        %v2325 = vadd.f32 %v2078, %v2243
        %v2326 = vadd.f32 %v2079, %v2248
        %v2327 = vadd.f32 %v2080, %v2251
        %v2328 = vadd.f32 %v2081, %v2256
        %v2329 = vadd.f32 %v2082, %v2259
        %v2330 = vadd.f32 %v2083, %v2264
        %v2331 = vadd.f32 %v2084, %v2267
        %v2332 = vadd.f32 %v2085, %v2272
        %v2333 = vadd.f32 %v2086, %v2275
        %v2334 = vadd.f32 %v2087, %v2280
        %v2335 = vadd.f32 %v2088, %v2283
        %v2336 = vadd.f32 %v2089, %v2288
        %v2337 = vadd.f32 %v2090, %v2291
        %v2338 = vadd.f32 %v2091, %v2296
        %v2339 = vadd.f32 %v2092, %v2299
        %v2340 = vadd.f32 %v2093, %v2304
        %v2341 = vadd.f32 %v2094, %v2307
        %v2343 = vshrl.u32 %v544, 16
        %v2345 = vrot.slane %v2343, 4
        %v2346 = vshll.u32 %v544, 16
        %v2348 = vrot.slane %v2346, 5
        %v2349 = vor.u32 %v2345, %v2348
        %v2350 = vrot.slane %v2349, 4
        %v2352 = vshll.u32 %v545, 16
        %v2354 = vrot.slane %v2352, 5
        %v2355 = vsel %vm696, %v2350, %v2354
        %v2356 = vshrl.u32 %v545, 16
        %v2358 = vrot.slane %v2356, 4
        %v2359 = vor.u32 %v2358, %v2354
        %v2360 = vrot.slane %v2359, 4
        %v2362 = vshll.u32 %v546, 16
        %v2364 = vrot.slane %v2362, 5
        %v2365 = vsel %vm696, %v2360, %v2364
        %v2366 = vunpack.c.l.b16 %v2355
        %v2367 = vunpack.c.l.b16 %v2365
        %v2368 = vpack.c.b16 %v2367, %v2366
        %v2386 = vunpack.c.l.b16 %v614
        %v2387 = vunpack.c.l.b16 %v615
        %v2388 = vunpack.c.l.b16 %v616
        %v2389 = vunpack.c.l.b16 %v617
        %v2390 = vunpack.c.l.b16 %v618
        %v2391 = vunpack.c.l.b16 %v619
        %v2392 = vunpack.c.l.b16 %v620
        %v2393 = vunpack.c.l.b16 %v621
        %v2394 = vunpack.c.l.b16 %v622
        %v2395 = vunpack.c.l.b16 %v623
        %v2396 = vunpack.c.l.b16 %v624
        %v2397 = vunpack.c.l.b16 %v625
        %v2398 = vunpack.c.l.b16 %v626
        %v2399 = vunpack.c.l.b16 %v627
        %v2400 = vunpack.c.l.b16 %v628
        %v2401 = vunpack.c.l.b16 %v629
        %v2402 = vpack.c.b16 %v2387, %v2386
        %v2403 = vpack.c.b16 %v2389, %v2388
        %v2404 = vpack.c.b16 %v2391, %v2390
        %v2405 = vpack.c.b16 %v2393, %v2392
        %v2406 = vpack.c.b16 %v2395, %v2394
        %v2407 = vpack.c.b16 %v2397, %v2396
        %v2408 = vpack.c.b16 %v2399, %v2398
        %v2409 = vpack.c.b16 %v2401, %v2400
        %2418 = vmatprep.subr.bf16.mxu0 0
        %2419 = vmatpush1.bf16.msra.mxu0 %v2402
        %2420 = vmatprep.subr.bf16.mxu0 0
        %2421 = vmatpush1.bf16.msra.mxu0 %v2403
        %2422 = vmatprep.subr.bf16.mxu0 0
        %2423 = vmatpush1.bf16.msra.mxu0 %v2404
        %2424 = vmatprep.subr.bf16.mxu0 0
        %2425 = vmatpush1.bf16.msra.mxu0 %v2405
        %2426 = vmatprep.subr.bf16.mxu0 0
        %2427 = vmatpush1.bf16.msra.mxu0 %v2406
        %2428 = vmatprep.subr.bf16.mxu0 0
        %2429 = vmatpush1.bf16.msra.mxu0 %v2407
        %2430 = vmatprep.subr.bf16.mxu0 0
        %2431 = vmatpush1.bf16.msra.mxu0 %v2408
        %2432 = vmatprep.subr.bf16.mxu0 0
        %2433 = vmatpush1.bf16.msra.mxu0 %v2409
        %2434 = vmatprep.subr.bf16.mxu0 0
        %2435 = vmatpush1.bf16.msra.mxu0 0
        %2436 = vmatprep.subr.bf16.mxu0 0
        %2437 = vmatpush1.bf16.msra.mxu0 0
        %2438 = vmatprep.subr.bf16.mxu0 0
        %2439 = vmatpush1.bf16.msra.mxu0 0
        %2440 = vmatprep.subr.bf16.mxu0 0
        %2441 = vmatpush1.bf16.msra.mxu0 0
        %2442 = vmatprep.subr.bf16.mxu0 0
        %2443 = vmatpush1.bf16.msra.mxu0 0
        %2444 = vmatprep.subr.bf16.mxu0 0
        %2445 = vmatpush1.bf16.msra.mxu0 0
        %2446 = vmatprep.subr.bf16.mxu0 0
        %2447 = vmatpush1.bf16.msra.mxu0 0
        %2448 = vmatprep.subr.bf16.mxu0 0
        %2449 = vmatpush1.bf16.msra.mxu0 0
        %2450 = vmatprep.mubr.bf16.mxu0 0
        %2451 = vmatmul.mubr.bf16.gmra.mrb[0].mxu0 %v1114
        %v2452 = vpop.f32.mrb[0].mxu0
        %v2453 = vadd.f32 0.0, %v2452
        %v2454 = vpop.f32.mrb[0].mxu0
        %v2455 = vpop.f32.mrb[0].mxu0
        %v2456 = vadd.f32 0.0, %v2455
        %v2457 = vpop.f32.mrb[0].mxu0
        %2458 = vmatprep.mubr.bf16.mxu0 0
        %2459 = vmatmul.mubr.bf16.gmra.mrb[0].mxu0 %v1115
        %v2460 = vpop.f32.mrb[0].mxu0
        %v2461 = vadd.f32 0.0, %v2460
        %v2462 = vpop.f32.mrb[0].mxu0
        %v2463 = vpop.f32.mrb[0].mxu0
        %v2464 = vadd.f32 0.0, %v2463
        %v2465 = vpop.f32.mrb[0].mxu0
        %2466 = vmatprep.mubr.bf16.mxu0 0
        %2467 = vmatmul.mubr.bf16.gmra.mrb[0].mxu0 %v1116
        %v2468 = vpop.f32.mrb[0].mxu0
        %v2469 = vadd.f32 0.0, %v2468
        %v2470 = vpop.f32.mrb[0].mxu0
        %v2471 = vpop.f32.mrb[0].mxu0
        %v2472 = vadd.f32 0.0, %v2471
        %v2473 = vpop.f32.mrb[0].mxu0
        %2474 = vmatprep.mubr.bf16.mxu0 0
        %2475 = vmatmul.mubr.bf16.gmra.mrb[0].mxu0 %v1117
        %v2476 = vpop.f32.mrb[0].mxu0
        %v2477 = vadd.f32 0.0, %v2476
        %v2478 = vpop.f32.mrb[0].mxu0
        %v2479 = vpop.f32.mrb[0].mxu0
        %v2480 = vadd.f32 0.0, %v2479
        %v2481 = vpop.f32.mrb[0].mxu0
        %2482 = vmatprep.mubr.bf16.mxu0 0
        %2483 = vmatmul.mubr.bf16.gmra.mrb[0].mxu0 %v1118
        %v2484 = vpop.f32.mrb[0].mxu0
        %v2485 = vadd.f32 0.0, %v2484
        %v2486 = vpop.f32.mrb[0].mxu0
        %v2487 = vpop.f32.mrb[0].mxu0
        %v2488 = vadd.f32 0.0, %v2487
        %v2489 = vpop.f32.mrb[0].mxu0
        %2490 = vmatprep.mubr.bf16.mxu0 0
        %2491 = vmatmul.mubr.bf16.gmra.mrb[0].mxu0 %v1119
        %v2492 = vpop.f32.mrb[0].mxu0
        %v2493 = vadd.f32 0.0, %v2492
        %v2494 = vpop.f32.mrb[0].mxu0
        %v2495 = vpop.f32.mrb[0].mxu0
        %v2496 = vadd.f32 0.0, %v2495
        %v2497 = vpop.f32.mrb[0].mxu0
        %2498 = vmatprep.mubr.bf16.mxu0 0
        %2499 = vmatmul.mubr.bf16.gmra.mrb[0].mxu0 %v1120
        %v2500 = vpop.f32.mrb[0].mxu0
        %v2501 = vadd.f32 0.0, %v2500
        %v2502 = vpop.f32.mrb[0].mxu0
        %v2503 = vpop.f32.mrb[0].mxu0
        %v2504 = vadd.f32 0.0, %v2503
        %v2505 = vpop.f32.mrb[0].mxu0
        %2506 = vmatprep.mubr.bf16.mxu0 0
        %2507 = vmatmul.mubr.bf16.gmra.mrb[0].mxu0 %v1121
        %v2508 = vpop.f32.mrb[0].mxu0
        %v2509 = vadd.f32 0.0, %v2508
        %v2510 = vpop.f32.mrb[0].mxu0
        %v2511 = vpop.f32.mrb[0].mxu0
        %v2512 = vadd.f32 0.0, %v2511
        %v2513 = vpop.f32.mrb[0].mxu0
        %2514 = vmatprep.mubr.bf16.mxu0 0
        %2515 = vmatmul.mubr.bf16.gmra.mrb[0].mxu0 %v1122
        %v2516 = vpop.f32.mrb[0].mxu0
        %v2517 = vadd.f32 0.0, %v2516
        %v2518 = vpop.f32.mrb[0].mxu0
        %v2519 = vpop.f32.mrb[0].mxu0
        %v2520 = vadd.f32 0.0, %v2519
        %v2521 = vpop.f32.mrb[0].mxu0
        %2522 = vmatprep.mubr.bf16.mxu0 0
        %2523 = vmatmul.mubr.bf16.gmra.mrb[0].mxu0 %v1123
        %v2524 = vpop.f32.mrb[0].mxu0
        %v2525 = vadd.f32 0.0, %v2524
        %v2526 = vpop.f32.mrb[0].mxu0
        %v2527 = vpop.f32.mrb[0].mxu0
        %v2528 = vadd.f32 0.0, %v2527
        %v2529 = vpop.f32.mrb[0].mxu0
        %2530 = vmatprep.mubr.bf16.mxu0 0
        %2531 = vmatmul.mubr.bf16.gmra.mrb[0].mxu0 %v1124
        %v2532 = vpop.f32.mrb[0].mxu0
        %v2533 = vadd.f32 0.0, %v2532
        %v2534 = vpop.f32.mrb[0].mxu0
        %v2535 = vpop.f32.mrb[0].mxu0
        %v2536 = vadd.f32 0.0, %v2535
        %v2537 = vpop.f32.mrb[0].mxu0
        %2538 = vmatprep.mubr.bf16.mxu0 0
        %2539 = vmatmul.mubr.bf16.gmra.mrb[0].mxu0 %v1125
        %v2540 = vpop.f32.mrb[0].mxu0
        %v2541 = vadd.f32 0.0, %v2540
        %v2542 = vpop.f32.mrb[0].mxu0
        %v2543 = vpop.f32.mrb[0].mxu0
        %v2544 = vadd.f32 0.0, %v2543
        %v2545 = vpop.f32.mrb[0].mxu0
        %2546 = vmatprep.mubr.bf16.mxu0 0
        %2547 = vmatmul.mubr.bf16.gmra.mrb[0].mxu0 %v1126
        %v2548 = vpop.f32.mrb[0].mxu0
        %v2549 = vadd.f32 0.0, %v2548
        %v2550 = vpop.f32.mrb[0].mxu0
        %v2551 = vpop.f32.mrb[0].mxu0
        %v2552 = vadd.f32 0.0, %v2551
        %v2553 = vpop.f32.mrb[0].mxu0
        %2554 = vmatprep.mubr.bf16.mxu0 0
        %2555 = vmatmul.mubr.bf16.gmra.mrb[0].mxu0 %v1127
        %v2556 = vpop.f32.mrb[0].mxu0
        %v2557 = vadd.f32 0.0, %v2556
        %v2558 = vpop.f32.mrb[0].mxu0
        %v2559 = vpop.f32.mrb[0].mxu0
        %v2560 = vadd.f32 0.0, %v2559
        %v2561 = vpop.f32.mrb[0].mxu0
        %2562 = vmatprep.mubr.bf16.mxu0 0
        %2563 = vmatmul.mubr.bf16.gmra.mrb[0].mxu0 %v1128
        %v2564 = vpop.f32.mrb[0].mxu0
        %v2565 = vadd.f32 0.0, %v2564
        %v2566 = vpop.f32.mrb[0].mxu0
        %v2567 = vpop.f32.mrb[0].mxu0
        %v2568 = vadd.f32 0.0, %v2567
        %v2569 = vpop.f32.mrb[0].mxu0
        %2570 = vmatprep.mubr.bf16.mxu0 0
        %2571 = vmatmul.mubr.bf16.gmra.mrb[0].mxu0 %v2368
        %v2572 = vpop.f32.mrb[0].mxu0
        %v2573 = vadd.f32 0.0, %v2572
        %v2574 = vpop.f32.mrb[0].mxu0
        %v2575 = vpop.f32.mrb[0].mxu0
        %v2576 = vadd.f32 0.0, %v2575
        %v2577 = vpop.f32.mrb[0].mxu0
        %2578 = vdwg.mxu0
        %v2579 = vadd.f32 %v2310, %v2453
        %v2580 = vadd.f32 %v2311, %v2456
        %v2581 = vadd.f32 %v2312, %v2461
        %v2582 = vadd.f32 %v2313, %v2464
        %v2583 = vadd.f32 %v2314, %v2469
        %v2584 = vadd.f32 %v2315, %v2472
        %v2585 = vadd.f32 %v2316, %v2477
        %v2586 = vadd.f32 %v2317, %v2480
        %v2587 = vadd.f32 %v2318, %v2485
        %v2588 = vadd.f32 %v2319, %v2488
        %v2589 = vadd.f32 %v2320, %v2493
        %v2590 = vadd.f32 %v2321, %v2496
        %v2591 = vadd.f32 %v2322, %v2501
        %v2592 = vadd.f32 %v2323, %v2504
        %v2593 = vadd.f32 %v2324, %v2509
        %v2594 = vadd.f32 %v2325, %v2512
        %v2595 = vadd.f32 %v2326, %v2517
        %v2596 = vadd.f32 %v2327, %v2520
        %v2597 = vadd.f32 %v2328, %v2525
        %v2598 = vadd.f32 %v2329, %v2528
        %v2599 = vadd.f32 %v2330, %v2533
        %v2600 = vadd.f32 %v2331, %v2536
        %v2601 = vadd.f32 %v2332, %v2541
        %v2602 = vadd.f32 %v2333, %v2544
        %v2603 = vadd.f32 %v2334, %v2549
        %v2604 = vadd.f32 %v2335, %v2552
        %v2605 = vadd.f32 %v2336, %v2557
        %v2606 = vadd.f32 %v2337, %v2560
        %v2607 = vadd.f32 %v2338, %v2565
        %v2608 = vadd.f32 %v2339, %v2568
        %v2609 = vadd.f32 %v2340, %v2573
        %v2610 = vadd.f32 %v2341, %v2576
        %v2612 = vrot.slane %v544, 5
        %v2613 = vrot.slane %v2612, 4
        %v2614 = vrot.slane %v545, 5
        %v2615 = vsel %vm1677, %v2613, %v2614
        %v2616 = vrot.slane %v2614, 4
        %v2617 = vrot.slane %v546, 5
        %v2618 = vsel %vm1677, %v2616, %v2617
        %v2619 = vunpack.c.l.b16 %v2615
        %v2620 = vunpack.c.l.b16 %v2618
        %v2621 = vpack.c.b16 %v2620, %v2619
        %v2639 = vunpack.c.l.b16 %v630
        %v2640 = vunpack.c.l.b16 %v631
        %v2641 = vunpack.c.l.b16 %v632
        %v2642 = vunpack.c.l.b16 %v633
        %v2643 = vunpack.c.l.b16 %v634
        %v2644 = vunpack.c.l.b16 %v635
        %v2645 = vunpack.c.l.b16 %v636
        %v2646 = vunpack.c.l.b16 %v637
        %v2647 = vunpack.c.l.b16 %v638
        %v2648 = vunpack.c.l.b16 %v639
        %v2649 = vunpack.c.l.b16 %v640
        %v2650 = vunpack.c.l.b16 %v641
        %v2651 = vunpack.c.l.b16 %v642
        %v2652 = vunpack.c.l.b16 %v643
        %v2653 = vunpack.c.l.b16 %v644
        %v2654 = vunpack.c.l.b16 %v645
        %v2655 = vpack.c.b16 %v2640, %v2639
        %v2656 = vpack.c.b16 %v2642, %v2641
        %v2657 = vpack.c.b16 %v2644, %v2643
        %v2658 = vpack.c.b16 %v2646, %v2645
        %v2659 = vpack.c.b16 %v2648, %v2647
        %v2660 = vpack.c.b16 %v2650, %v2649
        %v2661 = vpack.c.b16 %v2652, %v2651
        %v2662 = vpack.c.b16 %v2654, %v2653
        %2671 = vmatprep.subr.bf16.mxu0 0
        %2672 = vmatpush1.bf16.msra.mxu0 %v2655
        %2673 = vmatprep.subr.bf16.mxu0 0
        %2674 = vmatpush1.bf16.msra.mxu0 %v2656
        %2675 = vmatprep.subr.bf16.mxu0 0
        %2676 = vmatpush1.bf16.msra.mxu0 %v2657
        %2677 = vmatprep.subr.bf16.mxu0 0
        %2678 = vmatpush1.bf16.msra.mxu0 %v2658
        %2679 = vmatprep.subr.bf16.mxu0 0
        %2680 = vmatpush1.bf16.msra.mxu0 %v2659
        %2681 = vmatprep.subr.bf16.mxu0 0
        %2682 = vmatpush1.bf16.msra.mxu0 %v2660
        %2683 = vmatprep.subr.bf16.mxu0 0
        %2684 = vmatpush1.bf16.msra.mxu0 %v2661
        %2685 = vmatprep.subr.bf16.mxu0 0
        %2686 = vmatpush1.bf16.msra.mxu0 %v2662
        %2687 = vmatprep.subr.bf16.mxu0 0
        %2688 = vmatpush1.bf16.msra.mxu0 0
        %2689 = vmatprep.subr.bf16.mxu0 0
        %2690 = vmatpush1.bf16.msra.mxu0 0
        %2691 = vmatprep.subr.bf16.mxu0 0
        %2692 = vmatpush1.bf16.msra.mxu0 0
        %2693 = vmatprep.subr.bf16.mxu0 0
        %2694 = vmatpush1.bf16.msra.mxu0 0
        %2695 = vmatprep.subr.bf16.mxu0 0
        %2696 = vmatpush1.bf16.msra.mxu0 0
        %2697 = vmatprep.subr.bf16.mxu0 0
        %2698 = vmatpush1.bf16.msra.mxu0 0
        %2699 = vmatprep.subr.bf16.mxu0 0
        %2700 = vmatpush1.bf16.msra.mxu0 0
        %2701 = vmatprep.subr.bf16.mxu0 0
        %2702 = vmatpush1.bf16.msra.mxu0 0
        %2703 = vmatprep.mubr.bf16.mxu0 0
        %2704 = vmatmul.mubr.bf16.gmra.mrb[0].mxu0 %v1823
        %v2705 = vpop.f32.mrb[0].mxu0
        %v2706 = vadd.f32 0.0, %v2705
        %v2707 = vpop.f32.mrb[0].mxu0
        %v2708 = vpop.f32.mrb[0].mxu0
        %v2709 = vadd.f32 0.0, %v2708
        %v2710 = vpop.f32.mrb[0].mxu0
        %2711 = vmatprep.mubr.bf16.mxu0 0
        %2712 = vmatmul.mubr.bf16.gmra.mrb[0].mxu0 %v1824
        %v2713 = vpop.f32.mrb[0].mxu0
        %v2714 = vadd.f32 0.0, %v2713
        %v2715 = vpop.f32.mrb[0].mxu0
        %v2716 = vpop.f32.mrb[0].mxu0
        %v2717 = vadd.f32 0.0, %v2716
        %v2718 = vpop.f32.mrb[0].mxu0
        %2719 = vmatprep.mubr.bf16.mxu0 0
        %2720 = vmatmul.mubr.bf16.gmra.mrb[0].mxu0 %v1825
        %v2721 = vpop.f32.mrb[0].mxu0
        %v2722 = vadd.f32 0.0, %v2721
        %v2723 = vpop.f32.mrb[0].mxu0
        %v2724 = vpop.f32.mrb[0].mxu0
        %v2725 = vadd.f32 0.0, %v2724
        %v2726 = vpop.f32.mrb[0].mxu0
        %2727 = vmatprep.mubr.bf16.mxu0 0
        %2728 = vmatmul.mubr.bf16.gmra.mrb[0].mxu0 %v1826
        %v2729 = vpop.f32.mrb[0].mxu0
        %v2730 = vadd.f32 0.0, %v2729
        %v2731 = vpop.f32.mrb[0].mxu0
        %v2732 = vpop.f32.mrb[0].mxu0
        %v2733 = vadd.f32 0.0, %v2732
        %v2734 = vpop.f32.mrb[0].mxu0
        %2735 = vmatprep.mubr.bf16.mxu0 0
        %2736 = vmatmul.mubr.bf16.gmra.mrb[0].mxu0 %v1827
        %v2737 = vpop.f32.mrb[0].mxu0
        %v2738 = vadd.f32 0.0, %v2737
        %v2739 = vpop.f32.mrb[0].mxu0
        %v2740 = vpop.f32.mrb[0].mxu0
        %v2741 = vadd.f32 0.0, %v2740
        %v2742 = vpop.f32.mrb[0].mxu0
        %2743 = vmatprep.mubr.bf16.mxu0 0
        %2744 = vmatmul.mubr.bf16.gmra.mrb[0].mxu0 %v1828
        %v2745 = vpop.f32.mrb[0].mxu0
        %v2746 = vadd.f32 0.0, %v2745
        %v2747 = vpop.f32.mrb[0].mxu0
        %v2748 = vpop.f32.mrb[0].mxu0
        %v2749 = vadd.f32 0.0, %v2748
        %v2750 = vpop.f32.mrb[0].mxu0
        %2751 = vmatprep.mubr.bf16.mxu0 0
        %2752 = vmatmul.mubr.bf16.gmra.mrb[0].mxu0 %v1829
        %v2753 = vpop.f32.mrb[0].mxu0
        %v2754 = vadd.f32 0.0, %v2753
        %v2755 = vpop.f32.mrb[0].mxu0
        %v2756 = vpop.f32.mrb[0].mxu0
        %v2757 = vadd.f32 0.0, %v2756
        %v2758 = vpop.f32.mrb[0].mxu0
        %2759 = vmatprep.mubr.bf16.mxu0 0
        %2760 = vmatmul.mubr.bf16.gmra.mrb[0].mxu0 %v1830
        %v2761 = vpop.f32.mrb[0].mxu0
        %v2762 = vadd.f32 0.0, %v2761
        %v2763 = vpop.f32.mrb[0].mxu0
        %v2764 = vpop.f32.mrb[0].mxu0
        %v2765 = vadd.f32 0.0, %v2764
        %v2766 = vpop.f32.mrb[0].mxu0
        %2767 = vmatprep.mubr.bf16.mxu0 0
        %2768 = vmatmul.mubr.bf16.gmra.mrb[0].mxu0 %v1831
        %v2769 = vpop.f32.mrb[0].mxu0
        %v2770 = vadd.f32 0.0, %v2769
        %v2771 = vpop.f32.mrb[0].mxu0
        %v2772 = vpop.f32.mrb[0].mxu0
        %v2773 = vadd.f32 0.0, %v2772
        %v2774 = vpop.f32.mrb[0].mxu0
        %2775 = vmatprep.mubr.bf16.mxu0 0
        %2776 = vmatmul.mubr.bf16.gmra.mrb[0].mxu0 %v1832
        %v2777 = vpop.f32.mrb[0].mxu0
        %v2778 = vadd.f32 0.0, %v2777
        %v2779 = vpop.f32.mrb[0].mxu0
        %v2780 = vpop.f32.mrb[0].mxu0
        %v2781 = vadd.f32 0.0, %v2780
        %v2782 = vpop.f32.mrb[0].mxu0
        %2783 = vmatprep.mubr.bf16.mxu0 0
        %2784 = vmatmul.mubr.bf16.gmra.mrb[0].mxu0 %v1833
        %v2785 = vpop.f32.mrb[0].mxu0
        %v2786 = vadd.f32 0.0, %v2785
        %v2787 = vpop.f32.mrb[0].mxu0
        %v2788 = vpop.f32.mrb[0].mxu0
        %v2789 = vadd.f32 0.0, %v2788
        %v2790 = vpop.f32.mrb[0].mxu0
        %2791 = vmatprep.mubr.bf16.mxu0 0
        %2792 = vmatmul.mubr.bf16.gmra.mrb[0].mxu0 %v1834
        %v2793 = vpop.f32.mrb[0].mxu0
        %v2794 = vadd.f32 0.0, %v2793
        %v2795 = vpop.f32.mrb[0].mxu0
        %v2796 = vpop.f32.mrb[0].mxu0
        %v2797 = vadd.f32 0.0, %v2796
        %v2798 = vpop.f32.mrb[0].mxu0
        %2799 = vmatprep.mubr.bf16.mxu0 0
        %2800 = vmatmul.mubr.bf16.gmra.mrb[0].mxu0 %v1835
        %v2801 = vpop.f32.mrb[0].mxu0
        %v2802 = vadd.f32 0.0, %v2801
        %v2803 = vpop.f32.mrb[0].mxu0
        %v2804 = vpop.f32.mrb[0].mxu0
        %v2805 = vadd.f32 0.0, %v2804
        %v2806 = vpop.f32.mrb[0].mxu0
        %2807 = vmatprep.mubr.bf16.mxu0 0
        %2808 = vmatmul.mubr.bf16.gmra.mrb[0].mxu0 %v1836
        %v2809 = vpop.f32.mrb[0].mxu0
        %v2810 = vadd.f32 0.0, %v2809
        %v2811 = vpop.f32.mrb[0].mxu0
        %v2812 = vpop.f32.mrb[0].mxu0
        %v2813 = vadd.f32 0.0, %v2812
        %v2814 = vpop.f32.mrb[0].mxu0
        %2815 = vmatprep.mubr.bf16.mxu0 0
        %2816 = vmatmul.mubr.bf16.gmra.mrb[0].mxu0 %v1837
        %v2817 = vpop.f32.mrb[0].mxu0
        %v2818 = vadd.f32 0.0, %v2817
        %v2819 = vpop.f32.mrb[0].mxu0
        %v2820 = vpop.f32.mrb[0].mxu0
        %v2821 = vadd.f32 0.0, %v2820
        %v2822 = vpop.f32.mrb[0].mxu0
        %2823 = vmatprep.mubr.bf16.mxu0 0
        %2824 = vmatmul.mubr.bf16.gmra.mrb[0].mxu0 %v2621
        %v2825 = vpop.f32.mrb[0].mxu0
        %v2826 = vadd.f32 0.0, %v2825
        %v2827 = vpop.f32.mrb[0].mxu0
        %v2828 = vpop.f32.mrb[0].mxu0
        %v2829 = vadd.f32 0.0, %v2828
        %v2830 = vpop.f32.mrb[0].mxu0
        %2831 = vdwg.mxu0
        %v2832 = vadd.f32 %v2579, %v2706
        %v2833 = vadd.f32 %v2580, %v2709
        %v2834 = vadd.f32 %v2581, %v2714
        %v2835 = vadd.f32 %v2582, %v2717
        %v2836 = vadd.f32 %v2583, %v2722
        %v2837 = vadd.f32 %v2584, %v2725
        %v2838 = vadd.f32 %v2585, %v2730
        %v2839 = vadd.f32 %v2586, %v2733
        %v2840 = vadd.f32 %v2587, %v2738
        %v2841 = vadd.f32 %v2588, %v2741
        %v2842 = vadd.f32 %v2589, %v2746
        %v2843 = vadd.f32 %v2590, %v2749
        %v2844 = vadd.f32 %v2591, %v2754
        %v2845 = vadd.f32 %v2592, %v2757
        %v2846 = vadd.f32 %v2593, %v2762
        %v2847 = vadd.f32 %v2594, %v2765
        %v2848 = vadd.f32 %v2595, %v2770
        %v2849 = vadd.f32 %v2596, %v2773
        %v2850 = vadd.f32 %v2597, %v2778
        %v2851 = vadd.f32 %v2598, %v2781
        %v2852 = vadd.f32 %v2599, %v2786
        %v2853 = vadd.f32 %v2600, %v2789
        %v2854 = vadd.f32 %v2601, %v2794
        %v2855 = vadd.f32 %v2602, %v2797
        %v2856 = vadd.f32 %v2603, %v2802
        %v2857 = vadd.f32 %v2604, %v2805
        %v2858 = vadd.f32 %v2605, %v2810
        %v2859 = vadd.f32 %v2606, %v2813
        %v2860 = vadd.f32 %v2607, %v2818
        %v2861 = vadd.f32 %v2608, %v2821
        %v2862 = vadd.f32 %v2609, %v2826
        %v2863 = vadd.f32 %v2610, %v2829
        %v2866 = vunpack.c.l.b16 %v547
        %v2867 = vunpack.c.l.b16 %v548
        %v2868 = vpack.c.b16 %v2867, %v2866
        %v2886 = vunpack.c.l.b16 %v646
        %v2887 = vunpack.c.l.b16 %v647
        %v2888 = vunpack.c.l.b16 %v648
        %v2889 = vunpack.c.l.b16 %v649
        %v2890 = vunpack.c.l.b16 %v650
        %v2891 = vunpack.c.l.b16 %v651
        %v2892 = vunpack.c.l.b16 %v652
        %v2893 = vunpack.c.l.b16 %v653
        %v2894 = vunpack.c.l.b16 %v654
        %v2895 = vunpack.c.l.b16 %v655
        %v2896 = vunpack.c.l.b16 %v656
        %v2897 = vunpack.c.l.b16 %v657
        %v2898 = vunpack.c.l.b16 %v658
        %v2899 = vunpack.c.l.b16 %v659
        %v2900 = vunpack.c.l.b16 %v660
        %v2901 = vunpack.c.l.b16 %v661
        %v2902 = vpack.c.b16 %v2887, %v2886
        %v2903 = vpack.c.b16 %v2889, %v2888
        %v2904 = vpack.c.b16 %v2891, %v2890
        %v2905 = vpack.c.b16 %v2893, %v2892
        %v2906 = vpack.c.b16 %v2895, %v2894
        %v2907 = vpack.c.b16 %v2897, %v2896
        %v2908 = vpack.c.b16 %v2899, %v2898
        %v2909 = vpack.c.b16 %v2901, %v2900
        %2918 = vmatprep.subr.bf16.mxu0 0
        %2919 = vmatpush1.bf16.msra.mxu0 %v2902
        %2920 = vmatprep.subr.bf16.mxu0 0
        %2921 = vmatpush1.bf16.msra.mxu0 %v2903
        %2922 = vmatprep.subr.bf16.mxu0 0
        %2923 = vmatpush1.bf16.msra.mxu0 %v2904
        %2924 = vmatprep.subr.bf16.mxu0 0
        %2925 = vmatpush1.bf16.msra.mxu0 %v2905
        %2926 = vmatprep.subr.bf16.mxu0 0
        %2927 = vmatpush1.bf16.msra.mxu0 %v2906
        %2928 = vmatprep.subr.bf16.mxu0 0
        %2929 = vmatpush1.bf16.msra.mxu0 %v2907
        %2930 = vmatprep.subr.bf16.mxu0 0
        %2931 = vmatpush1.bf16.msra.mxu0 %v2908
        %2932 = vmatprep.subr.bf16.mxu0 0
        %2933 = vmatpush1.bf16.msra.mxu0 %v2909
        %2934 = vmatprep.subr.bf16.mxu0 0
        %2935 = vmatpush1.bf16.msra.mxu0 0
        %2936 = vmatprep.subr.bf16.mxu0 0
        %2937 = vmatpush1.bf16.msra.mxu0 0
        %2938 = vmatprep.subr.bf16.mxu0 0
        %2939 = vmatpush1.bf16.msra.mxu0 0
        %2940 = vmatprep.subr.bf16.mxu0 0
        %2941 = vmatpush1.bf16.msra.mxu0 0
        %2942 = vmatprep.subr.bf16.mxu0 0
        %2943 = vmatpush1.bf16.msra.mxu0 0
        %2944 = vmatprep.subr.bf16.mxu0 0
        %2945 = vmatpush1.bf16.msra.mxu0 0
        %2946 = vmatprep.subr.bf16.mxu0 0
        %2947 = vmatpush1.bf16.msra.mxu0 0
        %2948 = vmatprep.subr.bf16.mxu0 0
        %2949 = vmatpush1.bf16.msra.mxu0 0
        %2950 = vmatprep.mubr.bf16.mxu0 0
        %2951 = vmatmul.mubr.bf16.gmra.mrb[0].mxu0 %v1420
        %v2952 = vpop.f32.mrb[0].mxu0
        %v2953 = vadd.f32 0.0, %v2952
        %v2954 = vpop.f32.mrb[0].mxu0
        %v2955 = vpop.f32.mrb[0].mxu0
        %v2956 = vadd.f32 0.0, %v2955
        %v2957 = vpop.f32.mrb[0].mxu0
        %2958 = vmatprep.mubr.bf16.mxu0 0
        %2959 = vmatmul.mubr.bf16.gmra.mrb[0].mxu0 %v1421
        %v2960 = vpop.f32.mrb[0].mxu0
        %v2961 = vadd.f32 0.0, %v2960
        %v2962 = vpop.f32.mrb[0].mxu0
        %v2963 = vpop.f32.mrb[0].mxu0
        %v2964 = vadd.f32 0.0, %v2963
        %v2965 = vpop.f32.mrb[0].mxu0
        %2966 = vmatprep.mubr.bf16.mxu0 0
        %2967 = vmatmul.mubr.bf16.gmra.mrb[0].mxu0 %v1422
        %v2968 = vpop.f32.mrb[0].mxu0
        %v2969 = vadd.f32 0.0, %v2968
        %v2970 = vpop.f32.mrb[0].mxu0
        %v2971 = vpop.f32.mrb[0].mxu0
        %v2972 = vadd.f32 0.0, %v2971
        %v2973 = vpop.f32.mrb[0].mxu0
        %2974 = vmatprep.mubr.bf16.mxu0 0
        %2975 = vmatmul.mubr.bf16.gmra.mrb[0].mxu0 %v1423
        %v2976 = vpop.f32.mrb[0].mxu0
        %v2977 = vadd.f32 0.0, %v2976
        %v2978 = vpop.f32.mrb[0].mxu0
        %v2979 = vpop.f32.mrb[0].mxu0
        %v2980 = vadd.f32 0.0, %v2979
        %v2981 = vpop.f32.mrb[0].mxu0
        %2982 = vmatprep.mubr.bf16.mxu0 0
        %2983 = vmatmul.mubr.bf16.gmra.mrb[0].mxu0 %v1424
        %v2984 = vpop.f32.mrb[0].mxu0
        %v2985 = vadd.f32 0.0, %v2984
        %v2986 = vpop.f32.mrb[0].mxu0
        %v2987 = vpop.f32.mrb[0].mxu0
        %v2988 = vadd.f32 0.0, %v2987
        %v2989 = vpop.f32.mrb[0].mxu0
        %2990 = vmatprep.mubr.bf16.mxu0 0
        %2991 = vmatmul.mubr.bf16.gmra.mrb[0].mxu0 %v1425
        %v2992 = vpop.f32.mrb[0].mxu0
        %v2993 = vadd.f32 0.0, %v2992
        %v2994 = vpop.f32.mrb[0].mxu0
        %v2995 = vpop.f32.mrb[0].mxu0
        %v2996 = vadd.f32 0.0, %v2995
        %v2997 = vpop.f32.mrb[0].mxu0
        %2998 = vmatprep.mubr.bf16.mxu0 0
        %2999 = vmatmul.mubr.bf16.gmra.mrb[0].mxu0 %v1426
        %v3000 = vpop.f32.mrb[0].mxu0
        %v3001 = vadd.f32 0.0, %v3000
        %v3002 = vpop.f32.mrb[0].mxu0
        %v3003 = vpop.f32.mrb[0].mxu0
        %v3004 = vadd.f32 0.0, %v3003
        %v3005 = vpop.f32.mrb[0].mxu0
        %3006 = vmatprep.mubr.bf16.mxu0 0
        %3007 = vmatmul.mubr.bf16.gmra.mrb[0].mxu0 %v1427
        %v3008 = vpop.f32.mrb[0].mxu0
        %v3009 = vadd.f32 0.0, %v3008
        %v3010 = vpop.f32.mrb[0].mxu0
        %v3011 = vpop.f32.mrb[0].mxu0
        %v3012 = vadd.f32 0.0, %v3011
        %v3013 = vpop.f32.mrb[0].mxu0
        %3014 = vmatprep.mubr.bf16.mxu0 0
        %3015 = vmatmul.mubr.bf16.gmra.mrb[0].mxu0 %v1428
        %v3016 = vpop.f32.mrb[0].mxu0
        %v3017 = vadd.f32 0.0, %v3016
        %v3018 = vpop.f32.mrb[0].mxu0
        %v3019 = vpop.f32.mrb[0].mxu0
        %v3020 = vadd.f32 0.0, %v3019
        %v3021 = vpop.f32.mrb[0].mxu0
        %3022 = vmatprep.mubr.bf16.mxu0 0
        %3023 = vmatmul.mubr.bf16.gmra.mrb[0].mxu0 %v1429
        %v3024 = vpop.f32.mrb[0].mxu0
        %v3025 = vadd.f32 0.0, %v3024
        %v3026 = vpop.f32.mrb[0].mxu0
        %v3027 = vpop.f32.mrb[0].mxu0
        %v3028 = vadd.f32 0.0, %v3027
        %v3029 = vpop.f32.mrb[0].mxu0
        %3030 = vmatprep.mubr.bf16.mxu0 0
        %3031 = vmatmul.mubr.bf16.gmra.mrb[0].mxu0 %v1430
        %v3032 = vpop.f32.mrb[0].mxu0
        %v3033 = vadd.f32 0.0, %v3032
        %v3034 = vpop.f32.mrb[0].mxu0
        %v3035 = vpop.f32.mrb[0].mxu0
        %v3036 = vadd.f32 0.0, %v3035
        %v3037 = vpop.f32.mrb[0].mxu0
        %3038 = vmatprep.mubr.bf16.mxu0 0
        %3039 = vmatmul.mubr.bf16.gmra.mrb[0].mxu0 %v1431
        %v3040 = vpop.f32.mrb[0].mxu0
        %v3041 = vadd.f32 0.0, %v3040
        %v3042 = vpop.f32.mrb[0].mxu0
        %v3043 = vpop.f32.mrb[0].mxu0
        %v3044 = vadd.f32 0.0, %v3043
        %v3045 = vpop.f32.mrb[0].mxu0
        %3046 = vmatprep.mubr.bf16.mxu0 0
        %3047 = vmatmul.mubr.bf16.gmra.mrb[0].mxu0 %v1432
        %v3048 = vpop.f32.mrb[0].mxu0
        %v3049 = vadd.f32 0.0, %v3048
        %v3050 = vpop.f32.mrb[0].mxu0
        %v3051 = vpop.f32.mrb[0].mxu0
        %v3052 = vadd.f32 0.0, %v3051
        %v3053 = vpop.f32.mrb[0].mxu0
        %3054 = vmatprep.mubr.bf16.mxu0 0
        %3055 = vmatmul.mubr.bf16.gmra.mrb[0].mxu0 %v1433
        %v3056 = vpop.f32.mrb[0].mxu0
        %v3057 = vadd.f32 0.0, %v3056
        %v3058 = vpop.f32.mrb[0].mxu0
        %v3059 = vpop.f32.mrb[0].mxu0
        %v3060 = vadd.f32 0.0, %v3059
        %v3061 = vpop.f32.mrb[0].mxu0
        %3062 = vmatprep.mubr.bf16.mxu0 0
        %3063 = vmatmul.mubr.bf16.gmra.mrb[0].mxu0 %v2099
        %v3064 = vpop.f32.mrb[0].mxu0
        %v3065 = vadd.f32 0.0, %v3064
        %v3066 = vpop.f32.mrb[0].mxu0
        %v3067 = vpop.f32.mrb[0].mxu0
        %v3068 = vadd.f32 0.0, %v3067
        %v3069 = vpop.f32.mrb[0].mxu0
        %3070 = vmatprep.mubr.bf16.mxu0 0
        %3071 = vmatmul.mubr.bf16.gmra.mrb[0].mxu0 %v2868
        %v3072 = vpop.f32.mrb[0].mxu0
        %v3073 = vadd.f32 0.0, %v3072
        %v3074 = vpop.f32.mrb[0].mxu0
        %v3075 = vpop.f32.mrb[0].mxu0
        %v3076 = vadd.f32 0.0, %v3075
        %v3077 = vpop.f32.mrb[0].mxu0
        %3078 = vdwg.mxu0
        %v3079 = vadd.f32 %v2832, %v2953
        %v3080 = vadd.f32 %v2833, %v2956
        %v3081 = vadd.f32 %v2834, %v2961
        %v3082 = vadd.f32 %v2835, %v2964
        %v3083 = vadd.f32 %v2836, %v2969
        %v3084 = vadd.f32 %v2837, %v2972
        %v3085 = vadd.f32 %v2838, %v2977
        %v3086 = vadd.f32 %v2839, %v2980
        %v3087 = vadd.f32 %v2840, %v2985
        %v3088 = vadd.f32 %v2841, %v2988
        %v3089 = vadd.f32 %v2842, %v2993
        %v3090 = vadd.f32 %v2843, %v2996
        %v3091 = vadd.f32 %v2844, %v3001
        %v3092 = vadd.f32 %v2845, %v3004
        %v3093 = vadd.f32 %v2846, %v3009
        %v3094 = vadd.f32 %v2847, %v3012
        %v3095 = vadd.f32 %v2848, %v3017
        %v3096 = vadd.f32 %v2849, %v3020
        %v3097 = vadd.f32 %v2850, %v3025
        %v3098 = vadd.f32 %v2851, %v3028
        %v3099 = vadd.f32 %v2852, %v3033
        %v3100 = vadd.f32 %v2853, %v3036
        %v3101 = vadd.f32 %v2854, %v3041
        %v3102 = vadd.f32 %v2855, %v3044
        %v3103 = vadd.f32 %v2856, %v3049
        %v3104 = vadd.f32 %v2857, %v3052
        %v3105 = vadd.f32 %v2858, %v3057
        %v3106 = vadd.f32 %v2859, %v3060
        %v3107 = vadd.f32 %v2860, %v3065
        %v3108 = vadd.f32 %v2861, %v3068
        %v3109 = vadd.f32 %v2862, %v3073
        %v3110 = vadd.f32 %v2863, %v3076
        %v3112 = vshrl.u32 %v547, 16
        %v3114 = vrot.slane %v3112, 4
        %v3115 = vshll.u32 %v547, 16
        %v3117 = vrot.slane %v3115, 5
        %v3118 = vor.u32 %v3114, %v3117
        %v3119 = vrot.slane %v3118, 4
        %v3121 = vshll.u32 %v548, 16
        %v3123 = vrot.slane %v3121, 5
        %v3124 = vsel %vm696, %v3119, %v3123
        %v3125 = vshrl.u32 %v548, 16
        %v3127 = vrot.slane %v3125, 4
        %v3128 = vor.u32 %v3127, %v3123
        %v3129 = vrot.slane %v3128, 4
        %v3131 = vshll.u32 %v549, 16
        %v3133 = vrot.slane %v3131, 5
        %v3134 = vsel %vm696, %v3129, %v3133
        %v3135 = vunpack.c.l.b16 %v3124
        %v3136 = vunpack.c.l.b16 %v3134
        %v3137 = vpack.c.b16 %v3136, %v3135
        %v3155 = vunpack.c.l.b16 %v662
        %v3156 = vunpack.c.l.b16 %v663
        %v3157 = vunpack.c.l.b16 %v664
        %v3158 = vunpack.c.l.b16 %v665
        %v3159 = vunpack.c.l.b16 %v666
        %v3160 = vunpack.c.l.b16 %v667
        %v3161 = vunpack.c.l.b16 %v668
        %v3162 = vunpack.c.l.b16 %v669
        %v3163 = vunpack.c.l.b16 %v670
        %v3164 = vunpack.c.l.b16 %v671
        %v3165 = vunpack.c.l.b16 %v672
        %v3166 = vunpack.c.l.b16 %v673
        %v3167 = vunpack.c.l.b16 %v674
        %v3168 = vunpack.c.l.b16 %v675
        %v3169 = vunpack.c.l.b16 %v676
        %v3170 = vunpack.c.l.b16 %v677
        %v3171 = vpack.c.b16 %v3156, %v3155
        %v3172 = vpack.c.b16 %v3158, %v3157
        %v3173 = vpack.c.b16 %v3160, %v3159
        %v3174 = vpack.c.b16 %v3162, %v3161
        %v3175 = vpack.c.b16 %v3164, %v3163
        %v3176 = vpack.c.b16 %v3166, %v3165
        %v3177 = vpack.c.b16 %v3168, %v3167
        %v3178 = vpack.c.b16 %v3170, %v3169
        %3187 = vmatprep.subr.bf16.mxu0 0
        %3188 = vmatpush1.bf16.msra.mxu0 %v3171
        %3189 = vmatprep.subr.bf16.mxu0 0
        %3190 = vmatpush1.bf16.msra.mxu0 %v3172
        %3191 = vmatprep.subr.bf16.mxu0 0
        %3192 = vmatpush1.bf16.msra.mxu0 %v3173
        %3193 = vmatprep.subr.bf16.mxu0 0
        %3194 = vmatpush1.bf16.msra.mxu0 %v3174
        %3195 = vmatprep.subr.bf16.mxu0 0
        %3196 = vmatpush1.bf16.msra.mxu0 %v3175
        %3197 = vmatprep.subr.bf16.mxu0 0
        %3198 = vmatpush1.bf16.msra.mxu0 %v3176
        %3199 = vmatprep.subr.bf16.mxu0 0
        %3200 = vmatpush1.bf16.msra.mxu0 %v3177
        %3201 = vmatprep.subr.bf16.mxu0 0
        %3202 = vmatpush1.bf16.msra.mxu0 %v3178
        %3203 = vmatprep.subr.bf16.mxu0 0
        %3204 = vmatpush1.bf16.msra.mxu0 0
        %3205 = vmatprep.subr.bf16.mxu0 0
        %3206 = vmatpush1.bf16.msra.mxu0 0
        %3207 = vmatprep.subr.bf16.mxu0 0
        %3208 = vmatpush1.bf16.msra.mxu0 0
        %3209 = vmatprep.subr.bf16.mxu0 0
        %3210 = vmatpush1.bf16.msra.mxu0 0
        %3211 = vmatprep.subr.bf16.mxu0 0
        %3212 = vmatpush1.bf16.msra.mxu0 0
        %3213 = vmatprep.subr.bf16.mxu0 0
        %3214 = vmatpush1.bf16.msra.mxu0 0
        %3215 = vmatprep.subr.bf16.mxu0 0
        %3216 = vmatpush1.bf16.msra.mxu0 0
        %3217 = vmatprep.subr.bf16.mxu0 0
        %3218 = vmatpush1.bf16.msra.mxu0 0
        %3219 = vmatprep.mubr.bf16.mxu0 0
        %3220 = vmatmul.mubr.bf16.gmra.mrb[0].mxu0 %v1115
        %v3221 = vpop.f32.mrb[0].mxu0
        %v3222 = vadd.f32 0.0, %v3221
        %v3223 = vpop.f32.mrb[0].mxu0
        %v3224 = vpop.f32.mrb[0].mxu0
        %v3225 = vadd.f32 0.0, %v3224
        %v3226 = vpop.f32.mrb[0].mxu0
        %3227 = vmatprep.mubr.bf16.mxu0 0
        %3228 = vmatmul.mubr.bf16.gmra.mrb[0].mxu0 %v1116
        %v3229 = vpop.f32.mrb[0].mxu0
        %v3230 = vadd.f32 0.0, %v3229
        %v3231 = vpop.f32.mrb[0].mxu0
        %v3232 = vpop.f32.mrb[0].mxu0
        %v3233 = vadd.f32 0.0, %v3232
        %v3234 = vpop.f32.mrb[0].mxu0
        %3235 = vmatprep.mubr.bf16.mxu0 0
        %3236 = vmatmul.mubr.bf16.gmra.mrb[0].mxu0 %v1117
        %v3237 = vpop.f32.mrb[0].mxu0
        %v3238 = vadd.f32 0.0, %v3237
        %v3239 = vpop.f32.mrb[0].mxu0
        %v3240 = vpop.f32.mrb[0].mxu0
        %v3241 = vadd.f32 0.0, %v3240
        %v3242 = vpop.f32.mrb[0].mxu0
        %3243 = vmatprep.mubr.bf16.mxu0 0
        %3244 = vmatmul.mubr.bf16.gmra.mrb[0].mxu0 %v1118
        %v3245 = vpop.f32.mrb[0].mxu0
        %v3246 = vadd.f32 0.0, %v3245
        %v3247 = vpop.f32.mrb[0].mxu0
        %v3248 = vpop.f32.mrb[0].mxu0
        %v3249 = vadd.f32 0.0, %v3248
        %v3250 = vpop.f32.mrb[0].mxu0
        %3251 = vmatprep.mubr.bf16.mxu0 0
        %3252 = vmatmul.mubr.bf16.gmra.mrb[0].mxu0 %v1119
        %v3253 = vpop.f32.mrb[0].mxu0
        %v3254 = vadd.f32 0.0, %v3253
        %v3255 = vpop.f32.mrb[0].mxu0
        %v3256 = vpop.f32.mrb[0].mxu0
        %v3257 = vadd.f32 0.0, %v3256
        %v3258 = vpop.f32.mrb[0].mxu0
        %3259 = vmatprep.mubr.bf16.mxu0 0
        %3260 = vmatmul.mubr.bf16.gmra.mrb[0].mxu0 %v1120
        %v3261 = vpop.f32.mrb[0].mxu0
        %v3262 = vadd.f32 0.0, %v3261
        %v3263 = vpop.f32.mrb[0].mxu0
        %v3264 = vpop.f32.mrb[0].mxu0
        %v3265 = vadd.f32 0.0, %v3264
        %v3266 = vpop.f32.mrb[0].mxu0
        %3267 = vmatprep.mubr.bf16.mxu0 0
        %3268 = vmatmul.mubr.bf16.gmra.mrb[0].mxu0 %v1121
        %v3269 = vpop.f32.mrb[0].mxu0
        %v3270 = vadd.f32 0.0, %v3269
        %v3271 = vpop.f32.mrb[0].mxu0
        %v3272 = vpop.f32.mrb[0].mxu0
        %v3273 = vadd.f32 0.0, %v3272
        %v3274 = vpop.f32.mrb[0].mxu0
        %3275 = vmatprep.mubr.bf16.mxu0 0
        %3276 = vmatmul.mubr.bf16.gmra.mrb[0].mxu0 %v1122
        %v3277 = vpop.f32.mrb[0].mxu0
        %v3278 = vadd.f32 0.0, %v3277
        %v3279 = vpop.f32.mrb[0].mxu0
        %v3280 = vpop.f32.mrb[0].mxu0
        %v3281 = vadd.f32 0.0, %v3280
        %v3282 = vpop.f32.mrb[0].mxu0
        %3283 = vmatprep.mubr.bf16.mxu0 0
        %3284 = vmatmul.mubr.bf16.gmra.mrb[0].mxu0 %v1123
        %v3285 = vpop.f32.mrb[0].mxu0
        %v3286 = vadd.f32 0.0, %v3285
        %v3287 = vpop.f32.mrb[0].mxu0
        %v3288 = vpop.f32.mrb[0].mxu0
        %v3289 = vadd.f32 0.0, %v3288
        %v3290 = vpop.f32.mrb[0].mxu0
        %3291 = vmatprep.mubr.bf16.mxu0 0
        %3292 = vmatmul.mubr.bf16.gmra.mrb[0].mxu0 %v1124
        %v3293 = vpop.f32.mrb[0].mxu0
        %v3294 = vadd.f32 0.0, %v3293
        %v3295 = vpop.f32.mrb[0].mxu0
        %v3296 = vpop.f32.mrb[0].mxu0
        %v3297 = vadd.f32 0.0, %v3296
        %v3298 = vpop.f32.mrb[0].mxu0
        %3299 = vmatprep.mubr.bf16.mxu0 0
        %3300 = vmatmul.mubr.bf16.gmra.mrb[0].mxu0 %v1125
        %v3301 = vpop.f32.mrb[0].mxu0
        %v3302 = vadd.f32 0.0, %v3301
        %v3303 = vpop.f32.mrb[0].mxu0
        %v3304 = vpop.f32.mrb[0].mxu0
        %v3305 = vadd.f32 0.0, %v3304
        %v3306 = vpop.f32.mrb[0].mxu0
        %3307 = vmatprep.mubr.bf16.mxu0 0
        %3308 = vmatmul.mubr.bf16.gmra.mrb[0].mxu0 %v1126
        %v3309 = vpop.f32.mrb[0].mxu0
        %v3310 = vadd.f32 0.0, %v3309
        %v3311 = vpop.f32.mrb[0].mxu0
        %v3312 = vpop.f32.mrb[0].mxu0
        %v3313 = vadd.f32 0.0, %v3312
        %v3314 = vpop.f32.mrb[0].mxu0
        %3315 = vmatprep.mubr.bf16.mxu0 0
        %3316 = vmatmul.mubr.bf16.gmra.mrb[0].mxu0 %v1127
        %v3317 = vpop.f32.mrb[0].mxu0
        %v3318 = vadd.f32 0.0, %v3317
        %v3319 = vpop.f32.mrb[0].mxu0
        %v3320 = vpop.f32.mrb[0].mxu0
        %v3321 = vadd.f32 0.0, %v3320
        %v3322 = vpop.f32.mrb[0].mxu0
        %3323 = vmatprep.mubr.bf16.mxu0 0
        %3324 = vmatmul.mubr.bf16.gmra.mrb[0].mxu0 %v1128
        %v3325 = vpop.f32.mrb[0].mxu0
        %v3326 = vadd.f32 0.0, %v3325
        %v3327 = vpop.f32.mrb[0].mxu0
        %v3328 = vpop.f32.mrb[0].mxu0
        %v3329 = vadd.f32 0.0, %v3328
        %v3330 = vpop.f32.mrb[0].mxu0
        %3331 = vmatprep.mubr.bf16.mxu0 0
        %3332 = vmatmul.mubr.bf16.gmra.mrb[0].mxu0 %v2368
        %v3333 = vpop.f32.mrb[0].mxu0
        %v3334 = vadd.f32 0.0, %v3333
        %v3335 = vpop.f32.mrb[0].mxu0
        %v3336 = vpop.f32.mrb[0].mxu0
        %v3337 = vadd.f32 0.0, %v3336
        %v3338 = vpop.f32.mrb[0].mxu0
        %3339 = vmatprep.mubr.bf16.mxu0 0
        %3340 = vmatmul.mubr.bf16.gmra.mrb[0].mxu0 %v3137
        %v3341 = vpop.f32.mrb[0].mxu0
        %v3342 = vadd.f32 0.0, %v3341
        %v3343 = vpop.f32.mrb[0].mxu0
        %v3344 = vpop.f32.mrb[0].mxu0
        %v3345 = vadd.f32 0.0, %v3344
        %v3346 = vpop.f32.mrb[0].mxu0
        %3347 = vdwg.mxu0
        %v3348 = vadd.f32 %v3079, %v3222
        %v3349 = vadd.f32 %v3080, %v3225
        %v3350 = vadd.f32 %v3081, %v3230
        %v3351 = vadd.f32 %v3082, %v3233
        %v3352 = vadd.f32 %v3083, %v3238
        %v3353 = vadd.f32 %v3084, %v3241
        %v3354 = vadd.f32 %v3085, %v3246
        %v3355 = vadd.f32 %v3086, %v3249
        %v3356 = vadd.f32 %v3087, %v3254
        %v3357 = vadd.f32 %v3088, %v3257
        %v3358 = vadd.f32 %v3089, %v3262
        %v3359 = vadd.f32 %v3090, %v3265
        %v3360 = vadd.f32 %v3091, %v3270
        %v3361 = vadd.f32 %v3092, %v3273
        %v3362 = vadd.f32 %v3093, %v3278
        %v3363 = vadd.f32 %v3094, %v3281
        %v3364 = vadd.f32 %v3095, %v3286
        %v3365 = vadd.f32 %v3096, %v3289
        %v3366 = vadd.f32 %v3097, %v3294
        %v3367 = vadd.f32 %v3098, %v3297
        %v3368 = vadd.f32 %v3099, %v3302
        %v3369 = vadd.f32 %v3100, %v3305
        %v3370 = vadd.f32 %v3101, %v3310
        %v3371 = vadd.f32 %v3102, %v3313
        %v3372 = vadd.f32 %v3103, %v3318
        %v3373 = vadd.f32 %v3104, %v3321
        %v3374 = vadd.f32 %v3105, %v3326
        %v3375 = vadd.f32 %v3106, %v3329
        %v3376 = vadd.f32 %v3107, %v3334
        %v3377 = vadd.f32 %v3108, %v3337
        %v3378 = vadd.f32 %v3109, %v3342
        %v3379 = vadd.f32 %v3110, %v3345
        %v3381 = vrot.slane %v547, 5
        %v3382 = vrot.slane %v3381, 4
        %v3383 = vrot.slane %v548, 5
        %v3384 = vsel %vm1677, %v3382, %v3383
        %v3385 = vrot.slane %v3383, 4
        %v3386 = vrot.slane %v549, 5
        %v3387 = vsel %vm1677, %v3385, %v3386
        %v3388 = vunpack.c.l.b16 %v3384
        %v3389 = vunpack.c.l.b16 %v3387
        %v3390 = vpack.c.b16 %v3389, %v3388
        %v3408 = vunpack.c.l.b16 %v678
        %v3409 = vunpack.c.l.b16 %v679
        %v3410 = vunpack.c.l.b16 %v680
        %v3411 = vunpack.c.l.b16 %v681
        %v3412 = vunpack.c.l.b16 %v682
        %v3413 = vunpack.c.l.b16 %v683
        %v3414 = vunpack.c.l.b16 %v684
        %v3415 = vunpack.c.l.b16 %v685
        %v3416 = vunpack.c.l.b16 %v686
        %v3417 = vunpack.c.l.b16 %v687
        %v3418 = vunpack.c.l.b16 %v688
        %v3419 = vunpack.c.l.b16 %v689
        %v3420 = vunpack.c.l.b16 %v690
        %v3421 = vunpack.c.l.b16 %v691
        %v3422 = vunpack.c.l.b16 %v692
        %v3423 = vunpack.c.l.b16 %v693
        %v3424 = vpack.c.b16 %v3409, %v3408
        %v3425 = vpack.c.b16 %v3411, %v3410
        %v3426 = vpack.c.b16 %v3413, %v3412
        %v3427 = vpack.c.b16 %v3415, %v3414
        %v3428 = vpack.c.b16 %v3417, %v3416
        %v3429 = vpack.c.b16 %v3419, %v3418
        %v3430 = vpack.c.b16 %v3421, %v3420
        %v3431 = vpack.c.b16 %v3423, %v3422
        %3440 = vmatprep.subr.bf16.mxu0 0
        %3441 = vmatpush1.bf16.msra.mxu0 %v3424
        %3442 = vmatprep.subr.bf16.mxu0 0
        %3443 = vmatpush1.bf16.msra.mxu0 %v3425
        %3444 = vmatprep.subr.bf16.mxu0 0
        %3445 = vmatpush1.bf16.msra.mxu0 %v3426
        %3446 = vmatprep.subr.bf16.mxu0 0
        %3447 = vmatpush1.bf16.msra.mxu0 %v3427
        %3448 = vmatprep.subr.bf16.mxu0 0
        %3449 = vmatpush1.bf16.msra.mxu0 %v3428
        %3450 = vmatprep.subr.bf16.mxu0 0
        %3451 = vmatpush1.bf16.msra.mxu0 %v3429
        %3452 = vmatprep.subr.bf16.mxu0 0
        %3453 = vmatpush1.bf16.msra.mxu0 %v3430
        %3454 = vmatprep.subr.bf16.mxu0 0
        %3455 = vmatpush1.bf16.msra.mxu0 %v3431
        %3456 = vmatprep.subr.bf16.mxu0 0
        %3457 = vmatpush1.bf16.msra.mxu0 0
        %3458 = vmatprep.subr.bf16.mxu0 0
        %3459 = vmatpush1.bf16.msra.mxu0 0
        %3460 = vmatprep.subr.bf16.mxu0 0
        %3461 = vmatpush1.bf16.msra.mxu0 0
        %3462 = vmatprep.subr.bf16.mxu0 0
        %3463 = vmatpush1.bf16.msra.mxu0 0
        %3464 = vmatprep.subr.bf16.mxu0 0
        %3465 = vmatpush1.bf16.msra.mxu0 0
        %3466 = vmatprep.subr.bf16.mxu0 0
        %3467 = vmatpush1.bf16.msra.mxu0 0
        %3468 = vmatprep.subr.bf16.mxu0 0
        %3469 = vmatpush1.bf16.msra.mxu0 0
        %3470 = vmatprep.subr.bf16.mxu0 0
        %3471 = vmatpush1.bf16.msra.mxu0 0
        %3472 = vmatprep.mubr.bf16.mxu0 0
        %3473 = vmatmul.mubr.bf16.gmra.mrb[0].mxu0 %v1824
        %v3474 = vpop.f32.mrb[0].mxu0
        %v3475 = vadd.f32 0.0, %v3474
        %v3476 = vpop.f32.mrb[0].mxu0
        %v3477 = vpop.f32.mrb[0].mxu0
        %v3478 = vadd.f32 0.0, %v3477
        %v3479 = vpop.f32.mrb[0].mxu0
        %3480 = vmatprep.mubr.bf16.mxu0 0
        %3481 = vmatmul.mubr.bf16.gmra.mrb[0].mxu0 %v1825
        %v3482 = vpop.f32.mrb[0].mxu0
        %v3483 = vadd.f32 0.0, %v3482
        %v3484 = vpop.f32.mrb[0].mxu0
        %v3485 = vpop.f32.mrb[0].mxu0
        %v3486 = vadd.f32 0.0, %v3485
        %v3487 = vpop.f32.mrb[0].mxu0
        %3488 = vmatprep.mubr.bf16.mxu0 0
        %3489 = vmatmul.mubr.bf16.gmra.mrb[0].mxu0 %v1826
        %v3490 = vpop.f32.mrb[0].mxu0
        %v3491 = vadd.f32 0.0, %v3490
        %v3492 = vpop.f32.mrb[0].mxu0
        %v3493 = vpop.f32.mrb[0].mxu0
        %v3494 = vadd.f32 0.0, %v3493
        %v3495 = vpop.f32.mrb[0].mxu0
        %3496 = vmatprep.mubr.bf16.mxu0 0
        %3497 = vmatmul.mubr.bf16.gmra.mrb[0].mxu0 %v1827
        %v3498 = vpop.f32.mrb[0].mxu0
        %v3499 = vadd.f32 0.0, %v3498
        %v3500 = vpop.f32.mrb[0].mxu0
        %v3501 = vpop.f32.mrb[0].mxu0
        %v3502 = vadd.f32 0.0, %v3501
        %v3503 = vpop.f32.mrb[0].mxu0
        %3504 = vmatprep.mubr.bf16.mxu0 0
        %3505 = vmatmul.mubr.bf16.gmra.mrb[0].mxu0 %v1828
        %v3506 = vpop.f32.mrb[0].mxu0
        %v3507 = vadd.f32 0.0, %v3506
        %v3508 = vpop.f32.mrb[0].mxu0
        %v3509 = vpop.f32.mrb[0].mxu0
        %v3510 = vadd.f32 0.0, %v3509
        %v3511 = vpop.f32.mrb[0].mxu0
        %3512 = vmatprep.mubr.bf16.mxu0 0
        %3513 = vmatmul.mubr.bf16.gmra.mrb[0].mxu0 %v1829
        %v3514 = vpop.f32.mrb[0].mxu0
        %v3515 = vadd.f32 0.0, %v3514
        %v3516 = vpop.f32.mrb[0].mxu0
        %v3517 = vpop.f32.mrb[0].mxu0
        %v3518 = vadd.f32 0.0, %v3517
        %v3519 = vpop.f32.mrb[0].mxu0
        %3520 = vmatprep.mubr.bf16.mxu0 0
        %3521 = vmatmul.mubr.bf16.gmra.mrb[0].mxu0 %v1830
        %v3522 = vpop.f32.mrb[0].mxu0
        %v3523 = vadd.f32 0.0, %v3522
        %v3524 = vpop.f32.mrb[0].mxu0
        %v3525 = vpop.f32.mrb[0].mxu0
        %v3526 = vadd.f32 0.0, %v3525
        %v3527 = vpop.f32.mrb[0].mxu0
        %3528 = vmatprep.mubr.bf16.mxu0 0
        %3529 = vmatmul.mubr.bf16.gmra.mrb[0].mxu0 %v1831
        %v3530 = vpop.f32.mrb[0].mxu0
        %v3531 = vadd.f32 0.0, %v3530
        %v3532 = vpop.f32.mrb[0].mxu0
        %v3533 = vpop.f32.mrb[0].mxu0
        %v3534 = vadd.f32 0.0, %v3533
        %v3535 = vpop.f32.mrb[0].mxu0
        %3536 = vmatprep.mubr.bf16.mxu0 0
        %3537 = vmatmul.mubr.bf16.gmra.mrb[0].mxu0 %v1832
        %v3538 = vpop.f32.mrb[0].mxu0
        %v3539 = vadd.f32 0.0, %v3538
        %v3540 = vpop.f32.mrb[0].mxu0
        %v3541 = vpop.f32.mrb[0].mxu0
        %v3542 = vadd.f32 0.0, %v3541
        %v3543 = vpop.f32.mrb[0].mxu0
        %3544 = vmatprep.mubr.bf16.mxu0 0
        %3545 = vmatmul.mubr.bf16.gmra.mrb[0].mxu0 %v1833
        %v3546 = vpop.f32.mrb[0].mxu0
        %v3547 = vadd.f32 0.0, %v3546
        %v3548 = vpop.f32.mrb[0].mxu0
        %v3549 = vpop.f32.mrb[0].mxu0
        %v3550 = vadd.f32 0.0, %v3549
        %v3551 = vpop.f32.mrb[0].mxu0
        %3552 = vmatprep.mubr.bf16.mxu0 0
        %3553 = vmatmul.mubr.bf16.gmra.mrb[0].mxu0 %v1834
        %v3554 = vpop.f32.mrb[0].mxu0
        %v3555 = vadd.f32 0.0, %v3554
        %v3556 = vpop.f32.mrb[0].mxu0
        %v3557 = vpop.f32.mrb[0].mxu0
        %v3558 = vadd.f32 0.0, %v3557
        %v3559 = vpop.f32.mrb[0].mxu0
        %3560 = vmatprep.mubr.bf16.mxu0 0
        %3561 = vmatmul.mubr.bf16.gmra.mrb[0].mxu0 %v1835
        %v3562 = vpop.f32.mrb[0].mxu0
        %v3563 = vadd.f32 0.0, %v3562
        %v3564 = vpop.f32.mrb[0].mxu0
        %v3565 = vpop.f32.mrb[0].mxu0
        %v3566 = vadd.f32 0.0, %v3565
        %v3567 = vpop.f32.mrb[0].mxu0
        %3568 = vmatprep.mubr.bf16.mxu0 0
        %3569 = vmatmul.mubr.bf16.gmra.mrb[0].mxu0 %v1836
        %v3570 = vpop.f32.mrb[0].mxu0
        %v3571 = vadd.f32 0.0, %v3570
        %v3572 = vpop.f32.mrb[0].mxu0
        %v3573 = vpop.f32.mrb[0].mxu0
        %v3574 = vadd.f32 0.0, %v3573
        %v3575 = vpop.f32.mrb[0].mxu0
        %3576 = vmatprep.mubr.bf16.mxu0 0
        %3577 = vmatmul.mubr.bf16.gmra.mrb[0].mxu0 %v1837
        %v3578 = vpop.f32.mrb[0].mxu0
        %v3579 = vadd.f32 0.0, %v3578
        %v3580 = vpop.f32.mrb[0].mxu0
        %v3581 = vpop.f32.mrb[0].mxu0
        %v3582 = vadd.f32 0.0, %v3581
        %v3583 = vpop.f32.mrb[0].mxu0
        %3584 = vmatprep.mubr.bf16.mxu0 0
        %3585 = vmatmul.mubr.bf16.gmra.mrb[0].mxu0 %v2621
        %v3586 = vpop.f32.mrb[0].mxu0
        %v3587 = vadd.f32 0.0, %v3586
        %v3588 = vpop.f32.mrb[0].mxu0
        %v3589 = vpop.f32.mrb[0].mxu0
        %v3590 = vadd.f32 0.0, %v3589
        %v3591 = vpop.f32.mrb[0].mxu0
        %3592 = vmatprep.mubr.bf16.mxu0 0
        %3593 = vmatmul.mubr.bf16.gmra.mrb[0].mxu0 %v3390
        %v3594 = vpop.f32.mrb[0].mxu0
        %v3595 = vadd.f32 0.0, %v3594
        %v3596 = vpop.f32.mrb[0].mxu0
        %v3597 = vpop.f32.mrb[0].mxu0
        %v3598 = vadd.f32 0.0, %v3597
        %v3599 = vpop.f32.mrb[0].mxu0
        %3600 = vdwg.mxu0
        %v3601 = vadd.f32 %v3348, %v3475
        %v3602 = vadd.f32 %v3349, %v3478
        %v3603 = vadd.f32 %v3350, %v3483
        %v3604 = vadd.f32 %v3351, %v3486
        %v3605 = vadd.f32 %v3352, %v3491
        %v3606 = vadd.f32 %v3353, %v3494
        %v3607 = vadd.f32 %v3354, %v3499
        %v3608 = vadd.f32 %v3355, %v3502
        %v3609 = vadd.f32 %v3356, %v3507
        %v3610 = vadd.f32 %v3357, %v3510
        %v3611 = vadd.f32 %v3358, %v3515
        %v3612 = vadd.f32 %v3359, %v3518
        %v3613 = vadd.f32 %v3360, %v3523
        %v3614 = vadd.f32 %v3361, %v3526
        %v3615 = vadd.f32 %v3362, %v3531
        %v3616 = vadd.f32 %v3363, %v3534
        %v3617 = vadd.f32 %v3364, %v3539
        %v3618 = vadd.f32 %v3365, %v3542
        %v3619 = vadd.f32 %v3366, %v3547
        %v3620 = vadd.f32 %v3367, %v3550
        %v3621 = vadd.f32 %v3368, %v3555
        %v3622 = vadd.f32 %v3369, %v3558
        %v3623 = vadd.f32 %v3370, %v3563
        %v3624 = vadd.f32 %v3371, %v3566
        %v3625 = vadd.f32 %v3372, %v3571
        %v3626 = vadd.f32 %v3373, %v3574
        %v3627 = vadd.f32 %v3374, %v3579
        %v3628 = vadd.f32 %v3375, %v3582
        %v3629 = vadd.f32 %v3376, %v3587
        %v3630 = vadd.f32 %v3377, %v3590
        %v3631 = vadd.f32 %v3378, %v3595
        %v3632 = vadd.f32 %v3379, %v3598
        %v3633 = vld [vmem:[%s4] sm:$0x1]
        %v3635 = vlaneseq
        %v3636 = vshrl.u32 %v3635, 7
        %v3637 = vsub.s32 0, %v3636
        %v3638 = vrot.slane %v3633, %v3637
        %v3640 = vadd.f32 %v3601, %v3638
        %v3641 = vadd.f32 %v3602, %v3638
        %v3642 = vadd.f32 %v3603, %v3638
        %v3643 = vadd.f32 %v3604, %v3638
        %v3644 = vadd.f32 %v3605, %v3638
        %v3645 = vadd.f32 %v3606, %v3638
        %v3646 = vadd.f32 %v3607, %v3638
        %v3647 = vadd.f32 %v3608, %v3638
        %v3648 = vadd.f32 %v3609, %v3638
        %v3649 = vadd.f32 %v3610, %v3638
        %v3650 = vadd.f32 %v3611, %v3638
        %v3651 = vadd.f32 %v3612, %v3638
        %v3652 = vadd.f32 %v3613, %v3638
        %v3653 = vadd.f32 %v3614, %v3638
        %v3654 = vadd.f32 %v3615, %v3638
        %v3655 = vadd.f32 %v3616, %v3638
        %v3656 = vadd.f32 %v3617, %v3638
        %v3657 = vadd.f32 %v3618, %v3638
        %v3658 = vadd.f32 %v3619, %v3638
        %v3659 = vadd.f32 %v3620, %v3638
        %v3660 = vadd.f32 %v3621, %v3638
        %v3661 = vadd.f32 %v3622, %v3638
        %v3662 = vadd.f32 %v3623, %v3638
        %v3663 = vadd.f32 %v3624, %v3638
        %v3664 = vadd.f32 %v3625, %v3638
        %v3665 = vadd.f32 %v3626, %v3638
        %v3666 = vadd.f32 %v3627, %v3638
        %v3667 = vadd.f32 %v3628, %v3638
        %v3668 = vadd.f32 %v3629, %v3638
        %v3669 = vadd.f32 %v3630, %v3638
        %v3670 = vadd.f32 %v3631, %v3638
        %v3671 = vadd.f32 %v3632, %v3638
        %v3672 = vmax.f32 %v3640, 0.0
        %v3673 = vmax.f32 %v3641, 0.0
        %v3674 = vmax.f32 %v3642, 0.0
        %v3675 = vmax.f32 %v3643, 0.0
        %v3676 = vmax.f32 %v3644, 0.0
        %v3677 = vmax.f32 %v3645, 0.0
        %v3678 = vmax.f32 %v3646, 0.0
        %v3679 = vmax.f32 %v3647, 0.0
        %v3680 = vmax.f32 %v3648, 0.0
        %v3681 = vmax.f32 %v3649, 0.0
        %v3682 = vmax.f32 %v3650, 0.0
        %v3683 = vmax.f32 %v3651, 0.0
        %v3684 = vmax.f32 %v3652, 0.0
        %v3685 = vmax.f32 %v3653, 0.0
        %v3686 = vmax.f32 %v3654, 0.0
        %v3687 = vmax.f32 %v3655, 0.0
        %v3688 = vmax.f32 %v3656, 0.0
        %v3689 = vmax.f32 %v3657, 0.0
        %v3690 = vmax.f32 %v3658, 0.0
        %v3691 = vmax.f32 %v3659, 0.0
        %v3692 = vmax.f32 %v3660, 0.0
        %v3693 = vmax.f32 %v3661, 0.0
        %v3694 = vmax.f32 %v3662, 0.0
        %v3695 = vmax.f32 %v3663, 0.0
        %v3696 = vmax.f32 %v3664, 0.0
        %v3697 = vmax.f32 %v3665, 0.0
        %v3698 = vmax.f32 %v3666, 0.0
        %v3699 = vmax.f32 %v3667, 0.0
        %v3700 = vmax.f32 %v3668, 0.0
        %v3701 = vmax.f32 %v3669, 0.0
        %v3702 = vmax.f32 %v3670, 0.0
        %v3703 = vmax.f32 %v3671, 0.0
        %3704 = vst [vmem:[%s334] sm:$0xff] %v3672
        %3705 = vst [vmem:[%s334 + $0x8] sm:$0xff] %v3673
        %3706 = vst [vmem:[%s334 + $0x10] sm:$0xff] %v3674
        %3707 = vst [vmem:[%s334 + $0x18] sm:$0xff] %v3675
        %3708 = vst [vmem:[%s334 + $0x20] sm:$0xff] %v3676
        %3709 = vst [vmem:[%s334 + $0x28] sm:$0xff] %v3677
        %3710 = vst [vmem:[%s334 + $0x30] sm:$0xff] %v3678
        %3711 = vst [vmem:[%s334 + $0x38] sm:$0xff] %v3679
        %3712 = vst [vmem:[%s334 + $0x40] sm:$0xff] %v3680
        %3713 = vst [vmem:[%s334 + $0x48] sm:$0xff] %v3681
        %3714 = vst [vmem:[%s334 + $0x50] sm:$0xff] %v3682
        %3715 = vst [vmem:[%s334 + $0x58] sm:$0xff] %v3683
        %3716 = vst [vmem:[%s334 + $0x60] sm:$0xff] %v3684
        %3717 = vst [vmem:[%s334 + $0x68] sm:$0xff] %v3685
        %3718 = vst [vmem:[%s334 + $0x70] sm:$0xff] %v3686
        %3719 = vst [vmem:[%s334 + $0x78] sm:$0xff] %v3687
        %3720 = vst [vmem:[%s334 + $0x80] sm:$0xff] %v3688
        %3721 = vst [vmem:[%s334 + $0x88] sm:$0xff] %v3689
        %3722 = vst [vmem:[%s334 + $0x90] sm:$0xff] %v3690
        %3723 = vst [vmem:[%s334 + $0x98] sm:$0xff] %v3691
        %3724 = vst [vmem:[%s334 + $0xa0] sm:$0xff] %v3692
        %3725 = vst [vmem:[%s334 + $0xa8] sm:$0xff] %v3693
        %3726 = vst [vmem:[%s334 + $0xb0] sm:$0xff] %v3694
        %3727 = vst [vmem:[%s334 + $0xb8] sm:$0xff] %v3695
        %3728 = vst [vmem:[%s334 + $0xc0] sm:$0xff] %v3696
        %3729 = vst [vmem:[%s334 + $0xc8] sm:$0xff] %v3697
        %3730 = vst [vmem:[%s334 + $0xd0] sm:$0xff] %v3698
        %3731 = vst [vmem:[%s334 + $0xd8] sm:$0xff] %v3699
        %3732 = vst [vmem:[%s334 + $0xe0] sm:$0xff] %v3700
        %3733 = vst [vmem:[%s334 + $0xe8] sm:$0xff] %v3701
        %3734 = vst [vmem:[%s334 + $0xf0] sm:$0xff] %v3702
        %3735 = vst [vmem:[%s334 + $0xf8] sm:$0xff] %v3703
        %s3736 = sand.u32 %s177, 1
        %s3737 = scalar_lea.sflag [#allocation4], %s3736
        %s3738 = sand.u32 %s177, 1
        %s3739 = smul.addr %s3738, 256
        %s3740 = scalar_lea.vmem [#allocation3], %s3739
        // Predicated region
        $region41: #{tpu_custom_call.1} parent=39 // pred_check
          %p3741 = pneg %p187
        $region42: #{tpu_custom_call.1} parent=39 // pred_check_branch
          %3743 = sbr.rel (%p3741) target = $region44
        $region43: #{tpu_custom_call.1} parent=39 // pred_region
          %s3744 = smul.u32 16, %s24
          %s3746 = ssub.s32 4096, 4096
          %3747 = vsyncadd %s3737, %s3746
          %s3748 = smul.addr %s3744, 2
          %s3749 = smul.addr %s23, 32
          %s3750 = sadd.s32 %s3748, %s3749
          %s3751 = smul.addr %s3750, 128
          %s3752 = scalar_lea.hbm %s5, %s3751
          %s3753 = sshll.u32 %s3740, 4
          %s3754 = int_to_ptr.vmem [resolvable:$true] %s3753
          %3759 = dma.vmem_to_hbm [thread:$0]  %s3754, 4096, %s3752, %s3737, 128, 128, 8
        $region44: #{tpu_custom_call.1} parent=39 // pred_fallthru
          _
      $region40: #{tpu_custom_call.1} parent=5 // pred_fallthru
        _
      %p3760 = scmp.le.s32.totalorder 2, %s14
      // Predicated region
      $region45: #{tpu_custom_call.1} parent=5 // pred_check
        %p3761 = pneg %p3760
      $region46: #{tpu_custom_call.1} parent=5 // pred_check_branch
        %3763 = sbr.rel (%p3761) target = $region48
      $region47: #{tpu_custom_call.1} parent=5 // pred_region
        %s3764 = ssub.s32 %s14, 2
        // Predicated region
        $region49: #{tpu_custom_call.1} parent=47 // pred_check
          %p3765 = pneg %p193
        $region50: #{tpu_custom_call.1} parent=47 // pred_check_branch
          %3767 = sbr.rel (%p3765) target = $region52
        $region51: #{tpu_custom_call.1} parent=47 // pred_region
          %s3768 = sand.u32 %s178, 1
          %s3769 = scalar_lea.sflag [#allocation4], %s3768
          %s3770 = sand.u32 %s178, 1
          %s3771 = smul.addr %s3770, 256
          %s3772 = scalar_lea.vmem [#allocation3], %s3771
          %3773 = dma.done %s3769, 4096
        $region52: #{tpu_custom_call.1} parent=47 // pred_fallthru
          _
      $region48: #{tpu_custom_call.1} parent=5 // pred_fallthru
        _
    $region6: #{tpu_custom_call.1} parent=1 // loop_footer
      %s18 = sadd.s32 1, %s14
    $region7: #{tpu_custom_call.1} parent=1 // loop_footer_branch
      %13 = sbr.rel target = $region3
    $region8: #{tpu_custom_call.1} parent=1 // loop_exit
      _
    %3774 = vsyncpa [#allocation4], 1
    %s3775 = scalar_lea.sflag [#allocation4], 1
    %3776 = vsyncpa %s3775, 1

</llo_original>
